<compile_context>
chip_gen: v7x
topology: tpu7x:2x2x1
jax: 0.10.0
libtpu: 0.0.40
codegen_flags: <defaults>
</compile_context>

<pallas_src>
import functools

import jax
import jax.numpy as jnp
from jax.experimental import pallas as pl
from jax.experimental.pallas import tpu as pltpu

LANE = 128


def _round_up(x, m):
    return (x + m - 1) // m * m


def _cdiv(a, b):
    return -(-a // b)


def _vmem_cap_bytes():
    try:
        return int(pltpu.get_tpu_info().vmem_capacity_bytes)
    except Exception:
        return 64 << 20  # conservative: v7x per-TensorCore VMEM


# ---------------------------------------------------------------------------
# Kernel 1: in-kernel im2col (tap-decomposed conv matmul) fused with BN
# sum / sum-of-squares accumulation. grid = (oc_tile, n, oh_tile); the stats
# blocks are indexed only by the oc tile, so the oc axis can be "parallel"
# (v7x megacore) while (n, oh_tile) accumulate sequentially.
# ---------------------------------------------------------------------------
def _conv_stats_kernel(x_ref, w_ref, y_ref, sum_ref, sq_ref, *,
                       kh, kw, stride, toh, ow_pad, oh_valid, ow_valid, c,
                       mask_stats):
    @pl.when((pl.program_id(1) == 0) & (pl.program_id(2) == 0))
    def _():
        sum_ref[...] = jnp.zeros_like(sum_ref)
        sq_ref[...] = jnp.zeros_like(sq_ref)

    t = pl.program_id(2)
    oh0 = t * toh                      # first output row of this tile
    tn = y_ref.shape[-1]

    acc = jnp.zeros((toh * ow_pad, tn), jnp.float32)
    for i in range(kh):                # static tap loops (KH*KW small)
        for j in range(kw):
            if stride == 1:
                slab = x_ref[0, pl.ds(oh0 + i, toh), pl.ds(j, ow_pad), :]
            else:
                slab = x_ref[0, pl.ds(oh0 * stride + i, toh, stride=stride),
                             pl.ds(j, ow_pad, stride=stride), :]
            lhs = slab.reshape(toh * ow_pad, c)          # (rows, C) bf16
            acc += jnp.dot(lhs, w_ref[i * kw + j],
                           preferred_element_type=jnp.float32)

    # Exclude padded output rows/cols from the batch statistics.
    if mask_stats:
        rid = jax.lax.broadcasted_iota(jnp.int32, (toh * ow_pad, 1), 0)
        valid = ((oh0 + rid // ow_pad) < oh_valid) & ((rid % ow_pad) < ow_valid)
        stats_src = jnp.where(valid, acc, 0.0)
    else:
        stats_src = acc
    sum_ref[...] += jnp.sum(stats_src, axis=0, keepdims=True)
    sq_ref[...] += jnp.sum(stats_src * stats_src, axis=0, keepdims=True)

    # bf16 y to HBM (halves epilogue traffic); f32 accumulation stays in-kernel.
    y_ref[0] = acc.reshape(toh, ow_pad, tn).astype(y_ref.dtype)


def conv_stats(x_pad, w_taps, *, kh, kw, stride, toh, n_oh_tiles, ow_pad,
               oh, ow, tn, mask_stats, vmem_limit):
    N, Hp, Wp, C = x_pad.shape
    OC_pad = w_taps.shape[-1]
    n_oc_tiles = OC_pad // tn
    OH_pad = toh * n_oh_tiles
    kernel = functools.partial(
        _conv_stats_kernel, kh=kh, kw=kw, stride=stride, toh=toh, ow_pad=ow_pad,
        oh_valid=oh, ow_valid=ow, c=C, mask_stats=mask_stats)
    return pl.pallas_call(
        kernel,
        out_shape=(
            jax.ShapeDtypeStruct((N, OH_pad, ow_pad, OC_pad), jnp.bfloat16),
            jax.ShapeDtypeStruct((1, OC_pad), jnp.float32),
            jax.ShapeDtypeStruct((1, OC_pad), jnp.float32),
        ),
        grid_spec=pltpu.PrefetchScalarGridSpec(
            num_scalar_prefetch=0,
            grid=(n_oc_tiles, N, n_oh_tiles),
            in_specs=[
                # whole padded image; re-DMA'd only when n (or the oc tile) changes
                pl.BlockSpec((1, Hp, Wp, C), lambda j, n, t: (n, 0, 0, 0)),
                pl.BlockSpec((kh * kw, C, tn), lambda j, n, t: (0, 0, j)),
            ],
            out_specs=(
                pl.BlockSpec((1, toh, ow_pad, tn), lambda j, n, t: (n, t, 0, j)),
                pl.BlockSpec((1, tn), lambda j, n, t: (0, j)),
                pl.BlockSpec((1, tn), lambda j, n, t: (0, j)),
            ),
        ),
        compiler_params=pltpu.CompilerParams(
            dimension_semantics=("parallel", "arbitrary", "arbitrary"),
            vmem_limit_bytes=vmem_limit,
        ),
    )(x_pad, w_taps)


# ---------------------------------------------------------------------------
# Kernel 2: BN affine + ReLU. Pure streaming; bf16 in, f32 compute, f32 out.
# ---------------------------------------------------------------------------
def _bn_relu_kernel(y_ref, scale_ref, shift_ref, o_ref):
    y = y_ref[...].astype(jnp.float32)
    o_ref[...] = jnp.maximum(y * scale_ref[...] + shift_ref[...], 0.0)


def bn_relu(y, scale, shift, *, toh, tn, vmem_limit):
    N, OH_pad, OW_pad, OC_pad = y.shape
    n_oc_tiles = OC_pad // tn
    n_oh_tiles = OH_pad // toh
    return pl.pallas_call(
        _bn_relu_kernel,
        out_shape=jax.ShapeDtypeStruct((N, OH_pad, OW_pad, OC_pad), jnp.float32),
        grid_spec=pltpu.PrefetchScalarGridSpec(
            num_scalar_prefetch=0,
            grid=(n_oc_tiles, N, n_oh_tiles),
            in_specs=[
                pl.BlockSpec((1, toh, OW_pad, tn), lambda j, n, t: (n, t, 0, j)),
                pl.BlockSpec((1, tn), lambda j, n, t: (0, j)),
                pl.BlockSpec((1, tn), lambda j, n, t: (0, j)),
            ],
            out_specs=pl.BlockSpec((1, toh, OW_pad, tn),
                                   lambda j, n, t: (n, t, 0, j)),
        ),
        compiler_params=pltpu.CompilerParams(
            dimension_semantics=("parallel", "parallel", "parallel"),
            vmem_limit_bytes=vmem_limit,
        ),
    )(y, scale, shift)


# ---------------------------------------------------------------------------
# Forward: Conv2d -> BatchNorm2d(training batch stats) -> ReLU, NCHW in/out.
# ---------------------------------------------------------------------------
@functools.partial(jax.jit,
                   static_argnames=("stride", "padding", "eps",
                                    "max_rows_per_tile"))
def conv_block_forward(x, params, *, stride, padding, eps=1e-5,
                       max_rows_per_tile=4096):
    w, b, gamma, beta = params
    del b  # per-channel conv bias is exactly cancelled by BN mean subtraction
    OC, C, KH, KW = w.shape
    N, _, H, W = x.shape
    OH = (H + 2 * padding - KH) // stride + 1
    OW = (W + 2 * padding - KW) // stride + 1

    # ---- tiling choices (MXU / VMEM aware) ----
    OC_pad = _round_up(OC, LANE)
    tn = 256 if OC_pad % 256 == 0 else 128   # 256 fills v6e/v7x MXU; 128 for v5e / small OC
    OW_pad = _round_up(OW, 16)               # bf16 sublane pack -> cheap in-kernel reshapes
    toh_max = max(1, max_rows_per_tile // OW_pad)
    n_oh_tiles = _cdiv(OH, toh_max)
    toh = _cdiv(OH, n_oh_tiles)
    OH_pad = toh * n_oh_tiles
    mask_stats = (OH_pad != OH) or (OW_pad != OW)

    # ---- zero-pad NHWC input so every (OH_pad, OW_pad) tap read is in-bounds ----
    Hp = max(H + 2 * padding, (OH_pad - 1) * stride + KH)
    Wp = max(W + 2 * padding, (OW_pad - 1) * stride + KW)
    x_nhwc = jnp.transpose(x, (0, 2, 3, 1))
    x_pad = jnp.pad(
        x_nhwc,
        ((0, 0), (padding, Hp - H - padding), (padding, Wp - W - padding), (0, 0)),
    ).astype(jnp.bfloat16)

    # weights as (KH*KW, C, OC_pad) bf16 taps, matching the in-kernel tap order
    w_taps = jnp.transpose(w, (2, 3, 1, 0)).reshape(KH * KW, C, OC)
    w_taps = jnp.pad(w_taps, ((0, 0), (0, 0), (0, OC_pad - OC))).astype(jnp.bfloat16)

    # ---- generation-aware VMEM budget ----
    cap = _vmem_cap_bytes()
    est1 = (2 * Hp * Wp * C * 2 + 2 * KH * KW * C * tn * 2
            + 2 * toh * OW_pad * tn * 2 + toh * OW_pad * tn * 4 + 4 * tn * 4)
    vmem1 = int(min(0.9 * cap, max(2 * est1, 32 << 20)))
    est2 = 2 * toh * OW_pad * tn * (2 + 4) + 4 * tn * 4
    vmem2 = int(min(0.9 * cap, max(2 * est2, 32 << 20)))

    y, ssum, ssq = conv_stats(
        x_pad, w_taps, kh=KH, kw=KW, stride=stride, toh=toh,
        n_oh_tiles=n_oh_tiles, ow_pad=OW_pad, oh=OH, ow=OW, tn=tn,
        mask_stats=mask_stats, vmem_limit=vmem1)

    M = N * OH * OW
    mean = ssum[0, :OC] / M
    # TODO(synk): E[y^2]-E[y]^2 is cancellation-prone at very large M; switch to
    # a centered second pass / Welford if downstream needs tighter stats.
    var = jnp.maximum(ssq[0, :OC] / M - mean * mean, 0.0)
    inv_std = jax.lax.rsqrt(var + eps)
    scale = gamma * inv_std
    shift = beta - mean * scale
    scale_p = jnp.pad(scale, (0, OC_pad - OC)).reshape(1, OC_pad).astype(jnp.float32)
    shift_p = jnp.pad(shift, (0, OC_pad - OC)).reshape(1, OC_pad).astype(jnp.float32)

    out_p = bn_relu(y, scale_p, shift_p, toh=toh, tn=tn, vmem_limit=vmem2)

    out = out_p[:, :OH, :OW, :OC]
    # TODO(synk): fold this NHWC->NCHW transpose into kernel 2 (write per-sample
    # (OC, OH*OW) slabs) to save one HBM round trip of the output.
    return jnp.transpose(out, (0, 3, 1, 2))


def init_params(key, in_channel, out_channel, kernel_size):
    k_w, k_b = jax.random.split(key)
    fan_in = in_channel * kernel_size * kernel_size
    bound = 1.0 / (fan_in ** 0.5)
    w = jax.random.uniform(
        k_w, (out_channel, in_channel, kernel_size, kernel_size),
        minval=-bound, maxval=bound, dtype=jnp.float32)
    b = jax.random.uniform(
        k_b, (out_channel,), minval=-bound, maxval=bound, dtype=jnp.float32)
    gamma = jnp.ones((out_channel,), jnp.float32)   # BatchNorm2d weight init
    beta = jnp.zeros((out_channel,), jnp.float32)   # BatchNorm2d bias init
    return w, b, gamma, beta


def _reference(x, params, stride, padding, eps=1e-5):
    w, b, gamma, beta = params
    OC = w.shape[0]
    conv = jax.lax.conv_general_dilated(
        x, w, window_strides=(stride, stride),
        padding=((padding, padding), (padding, padding)),
        dimension_numbers=("NCHW", "OIHW", "NCHW"),
    ) + b.reshape(1, OC, 1, 1)
    mean = conv.mean(axis=(0, 2, 3), keepdims=True)
    var = conv.var(axis=(0, 2, 3), keepdims=True)
    return jnp.maximum(
        (conv - mean) / jnp.sqrt(var + eps)
        * gamma.reshape(1, OC, 1, 1) + beta.reshape(1, OC, 1, 1),
        0.0,
    )


if __name__ == "__main__":
    key = jax.random.PRNGKey(0)
    k_x, k_p, k_x2 = jax.random.split(key, 3)

    # Test 1: convBlock(4, 8, kernel_size=3, stride=1, padding=1), 16x16 input.
    N, C, H, W = 2, 4, 16, 16
    OC, KS, STRIDE, PAD = 8, 3, 1, 1
    x = jax.random.normal(k_x, (N, C, H, W), dtype=jnp.float32)
    params = init_params(k_p, C, OC, KS)
    out = jax.block_until_ready(
        conv_block_forward(x, params, stride=STRIDE, padding=PAD))
    ref = _reference(x, params, STRIDE, PAD)
    assert out.shape == (N, OC, H, W)
    # bf16 MXU inputs -> relaxed tolerance vs the f32 reference.
    assert jnp.allclose(out, ref, atol=3e-2, rtol=3e-2), float(
        jnp.max(jnp.abs(out - ref)))

    # Test 2: non-aligned spatial size + small row tiles, exercising the padded
    # output masking and multi-OH-tile path (column pad 20->32, OH tiles of 7).
    H2 = W2 = 20
    x2 = jax.random.normal(k_x2, (N, C, H2, W2), dtype=jnp.float32)
    out2 = jax.block_until_ready(
        conv_block_forward(x2, params, stride=STRIDE, padding=PAD,
                           max_rows_per_tile=256))
    ref2 = _reference(x2, params, STRIDE, PAD)
    assert out2.shape == (N, OC, H2, W2)
    assert jnp.allclose(out2, ref2, atol=3e-2, rtol=3e-2), float(
        jnp.max(jnp.abs(out2 - ref2)))

    print("KERNEL_OK")
</pallas_src>

<mosaic_0001>
module attributes {stable_mosaic.version = 11 : i64} {
  func.func @_bn_relu_kernel(%arg0: i32, %arg1: i32, %arg2: i32, %arg3: memref<1x16x16x128xbf16, #tpu.memory_space<vmem>>, %arg4: memref<1x128xf32, #tpu.memory_space<vmem>>, %arg5: memref<1x128xf32, #tpu.memory_space<vmem>>, %arg6: memref<1x16x16x128xf32, #tpu.memory_space<vmem>>) attributes {dimension_semantics = [#tpu.dimension_semantics<parallel>, #tpu.dimension_semantics<parallel>, #tpu.dimension_semantics<parallel>], iteration_bounds = array<i64: 1, 2, 1>, scalar_prefetch = 0 : i64, scratch_operands = 0 : i64, tpu.core_type = #tpu.core_type<tc>, window_params = [{transform_indices = @transform_0, window_bounds = array<i64: 1, 16, 16, 128>}, {transform_indices = @transform_1, window_bounds = array<i64: 1, 128>}, {transform_indices = @transform_2, window_bounds = array<i64: 1, 128>}, {transform_indices = @transform_3, window_bounds = array<i64: 1, 16, 16, 128>}]} {
    %c0 = arith.constant 0 : index
    %c0_0 = arith.constant 0 : index
    %c0_1 = arith.constant 0 : index
    %c0_2 = arith.constant 0 : index
    %0 = vector.load %arg3[%c0, %c0_0, %c0_1, %c0_2] : memref<1x16x16x128xbf16, #tpu.memory_space<vmem>>, vector<1x16x16x128xbf16>
    %1 = arith.extf %0 : vector<1x16x16x128xbf16> to vector<1x16x16x128xf32>
    %c0_3 = arith.constant 0 : index
    %c0_4 = arith.constant 0 : index
    %2 = vector.load %arg4[%c0_3, %c0_4] : memref<1x128xf32, #tpu.memory_space<vmem>>, vector<1x128xf32>
    %3 = vector.shape_cast %2 : vector<1x128xf32> to vector<1x1x1x128xf32>
    %4 = vector.broadcast %3 : vector<1x1x1x128xf32> to vector<1x16x16x128xf32>
    %5 = arith.mulf %1, %4 : vector<1x16x16x128xf32>
    %c0_5 = arith.constant 0 : index
    %c0_6 = arith.constant 0 : index
    %6 = vector.load %arg5[%c0_5, %c0_6] : memref<1x128xf32, #tpu.memory_space<vmem>>, vector<1x128xf32>
    %7 = vector.shape_cast %6 : vector<1x128xf32> to vector<1x1x1x128xf32>
    %8 = vector.broadcast %7 : vector<1x1x1x128xf32> to vector<1x16x16x128xf32>
    %9 = arith.addf %5, %8 : vector<1x16x16x128xf32>
    %cst = arith.constant 0.000000e+00 : f32
    %10 = vector.broadcast %cst : f32 to vector<1x16x16x128xf32>
    %11 = arith.maximumf %9, %10 : vector<1x16x16x128xf32>
    %c0_7 = arith.constant 0 : index
    %c0_8 = arith.constant 0 : index
    %c0_9 = arith.constant 0 : index
    %c0_10 = arith.constant 0 : index
    %12 = vector.load %arg6[%c0_7, %c0_8, %c0_9, %c0_10] : memref<1x16x16x128xf32, #tpu.memory_space<vmem>>, vector<1x16x16x128xf32>
    tpu.vector_store %arg6[%c0_7, %c0_8, %c0_9, %c0_10], %11 {strides = array<i32>} : memref<1x16x16x128xf32, #tpu.memory_space<vmem>>, vector<1x16x16x128xf32>,
    return
  }
  func.func @transform_0(%arg0: i32, %arg1: i32, %arg2: i32) -> (i32, i32, i32, i32) {
    %c0_i32 = arith.constant 0 : i32
    %c0_i32_0 = arith.constant 0 : i32
    return %arg1, %arg2, %c0_i32, %arg0 : i32, i32, i32, i32
  }
  func.func @transform_1(%arg0: i32, %arg1: i32, %arg2: i32) -> (i32, i32) {
    %c0_i32 = arith.constant 0 : i32
    %c0_i32_0 = arith.constant 0 : i32
    return %c0_i32, %arg0 : i32, i32
  }
  func.func @transform_2(%arg0: i32, %arg1: i32, %arg2: i32) -> (i32, i32) {
    %c0_i32 = arith.constant 0 : i32
    %c0_i32_0 = arith.constant 0 : i32
    return %c0_i32, %arg0 : i32, i32
  }
  func.func @transform_3(%arg0: i32, %arg1: i32, %arg2: i32) -> (i32, i32, i32, i32) {
    %c0_i32 = arith.constant 0 : i32
    %c0_i32_0 = arith.constant 0 : i32
    return %arg1, %arg2, %c0_i32, %arg0 : i32, i32, i32, i32
  }
}

module attributes {stable_mosaic.version = 11 : i64} {
  func.func @_conv_stats_kernel(%arg0: i32, %arg1: i32, %arg2: i32, %arg3: memref<1x18x18x4xbf16, #tpu.memory_space<vmem>>, %arg4: memref<9x4x128xbf16, #tpu.memory_space<vmem>>, %arg5: memref<1x16x16x128xbf16, #tpu.memory_space<vmem>>, %arg6: memref<1x128xf32, #tpu.memory_space<vmem>>, %arg7: memref<1x128xf32, #tpu.memory_space<vmem>>) attributes {dimension_semantics = [#tpu.dimension_semantics<parallel>, #tpu.dimension_semantics<arbitrary>, #tpu.dimension_semantics<arbitrary>], iteration_bounds = array<i64: 1, 2, 1>, scalar_prefetch = 0 : i64, scratch_operands = 0 : i64, tpu.core_type = #tpu.core_type<tc>, window_params = [{transform_indices = @transform_0, window_bounds = array<i64: 1, 18, 18, 4>}, {transform_indices = @transform_1, window_bounds = array<i64: 9, 4, 128>}, {transform_indices = @transform_2, window_bounds = array<i64: 1, 16, 16, 128>}, {transform_indices = @transform_3, window_bounds = array<i64: 1, 128>}, {transform_indices = @transform_4, window_bounds = array<i64: 1, 128>}]} {
    %c0_i32 = arith.constant 0 : i32
    %0 = arith.cmpi eq, %arg1, %c0_i32 : i32
    %c0_i32_0 = arith.constant 0 : i32
    %1 = arith.cmpi eq, %arg2, %c0_i32_0 : i32
    %2 = arith.andi %0, %1 : i1
    %3 = arith.extui %2 : i1 to i32
    %c0_i32_1 = arith.constant 0 : i32
    %4 = arith.cmpi ne, %3, %c0_i32_1 : i32
    scf.if %4 {
      %cst_77 = arith.constant 0.000000e+00 : f32
      %104 = vector.broadcast %cst_77 : f32 to vector<1x128xf32>
      %c0_78 = arith.constant 0 : index
      %c0_79 = arith.constant 0 : index
      %105 = vector.load %arg6[%c0_78, %c0_79] : memref<1x128xf32, #tpu.memory_space<vmem>>, vector<1x128xf32>
      tpu.vector_store %arg6[%c0_78, %c0_79], %104 {strides = array<i32>} : memref<1x128xf32, #tpu.memory_space<vmem>>, vector<1x128xf32>,
      %cst_80 = arith.constant 0.000000e+00 : f32
      %106 = vector.broadcast %cst_80 : f32 to vector<1x128xf32>
      %c0_81 = arith.constant 0 : index
      %c0_82 = arith.constant 0 : index
      %107 = vector.load %arg7[%c0_81, %c0_82] : memref<1x128xf32, #tpu.memory_space<vmem>>, vector<1x128xf32>
      tpu.vector_store %arg7[%c0_81, %c0_82], %106 {strides = array<i32>} : memref<1x128xf32, #tpu.memory_space<vmem>>, vector<1x128xf32>,
    } else {
    }
    %c16_i32 = arith.constant 16 : i32
    %5 = arith.muli %arg2, %c16_i32 : i32
    %cst = arith.constant 0.000000e+00 : f32
    %6 = vector.broadcast %cst : f32 to vector<256x128xf32>
    %c0_i32_2 = arith.constant 0 : i32
    %7 = arith.addi %5, %c0_i32_2 : i32
    %c0 = arith.constant 0 : index
    %8 = arith.index_cast %7 : i32 to index
    %c0_3 = arith.constant 0 : index
    %c0_4 = arith.constant 0 : index
    %9 = vector.load %arg3[%c0, %8, %c0_3, %c0_4] : memref<1x18x18x4xbf16, #tpu.memory_space<vmem>>, vector<1x16x16x4xbf16>
    %10 = vector.shape_cast %9 : vector<1x16x16x4xbf16> to vector<16x16x4xbf16>
    %11 = vector.shape_cast %10 : vector<16x16x4xbf16> to vector<256x4xbf16>
    %c0_5 = arith.constant 0 : index
    %c0_6 = arith.constant 0 : index
    %c0_7 = arith.constant 0 : index
    %12 = vector.load %arg4[%c0_5, %c0_6, %c0_7] : memref<9x4x128xbf16, #tpu.memory_space<vmem>>, vector<1x4x128xbf16>
    %13 = vector.shape_cast %12 : vector<1x4x128xbf16> to vector<4x128xbf16>
    %cst_8 = arith.constant dense<0.000000e+00> : vector<256x128xf32>
    %14 = tpu.matmul %11, %13, %cst_8 {dimension_numbers = #tpu.dot_dimension_numbers<[1], [0], [0], [1], [0, 0, 1, 1], [], []>} : vector<256x4xbf16>, vector<4x128xbf16>, vector<256x128xf32> -> vector<256x128xf32>
    %15 = arith.addf %6, %14 : vector<256x128xf32>
    %c0_i32_9 = arith.constant 0 : i32
    %16 = arith.addi %5, %c0_i32_9 : i32
    %c0_10 = arith.constant 0 : index
    %17 = arith.index_cast %16 : i32 to index
    %c1 = arith.constant 1 : index
    %c0_11 = arith.constant 0 : index
    %18 = vector.load %arg3[%c0_10, %17, %c1, %c0_11] : memref<1x18x18x4xbf16, #tpu.memory_space<vmem>>, vector<1x16x16x4xbf16>
    %19 = vector.shape_cast %18 : vector<1x16x16x4xbf16> to vector<16x16x4xbf16>
    %20 = vector.shape_cast %19 : vector<16x16x4xbf16> to vector<256x4xbf16>
    %c1_12 = arith.constant 1 : index
    %c0_13 = arith.constant 0 : index
    %c0_14 = arith.constant 0 : index
    %21 = vector.load %arg4[%c1_12, %c0_13, %c0_14] : memref<9x4x128xbf16, #tpu.memory_space<vmem>>, vector<1x4x128xbf16>
    %22 = vector.shape_cast %21 : vector<1x4x128xbf16> to vector<4x128xbf16>
    %cst_15 = arith.constant dense<0.000000e+00> : vector<256x128xf32>
    %23 = tpu.matmul %20, %22, %cst_15 {dimension_numbers = #tpu.dot_dimension_numbers<[1], [0], [0], [1], [0, 0, 1, 1], [], []>} : vector<256x4xbf16>, vector<4x128xbf16>, vector<256x128xf32> -> vector<256x128xf32>
    %24 = arith.addf %15, %23 : vector<256x128xf32>
    %c0_i32_16 = arith.constant 0 : i32
    %25 = arith.addi %5, %c0_i32_16 : i32
    %c0_17 = arith.constant 0 : index
    %26 = arith.index_cast %25 : i32 to index
    %c2 = arith.constant 2 : index
    %c0_18 = arith.constant 0 : index
    %27 = vector.load %arg3[%c0_17, %26, %c2, %c0_18] : memref<1x18x18x4xbf16, #tpu.memory_space<vmem>>, vector<1x16x16x4xbf16>
    %28 = vector.shape_cast %27 : vector<1x16x16x4xbf16> to vector<16x16x4xbf16>
    %29 = vector.shape_cast %28 : vector<16x16x4xbf16> to vector<256x4xbf16>
    %c2_19 = arith.constant 2 : index
    %c0_20 = arith.constant 0 : index
    %c0_21 = arith.constant 0 : index
    %30 = vector.load %arg4[%c2_19, %c0_20, %c0_21] : memref<9x4x128xbf16, #tpu.memory_space<vmem>>, vector<1x4x128xbf16>
    %31 = vector.shape_cast %30 : vector<1x4x128xbf16> to vector<4x128xbf16>
    %cst_22 = arith.constant dense<0.000000e+00> : vector<256x128xf32>
    %32 = tpu.matmul %29, %31, %cst_22 {dimension_numbers = #tpu.dot_dimension_numbers<[1], [0], [0], [1], [0, 0, 1, 1], [], []>} : vector<256x4xbf16>, vector<4x128xbf16>, vector<256x128xf32> -> vector<256x128xf32>
    %33 = arith.addf %24, %32 : vector<256x128xf32>
    %c1_i32 = arith.constant 1 : i32
    %34 = arith.addi %5, %c1_i32 : i32
    %c0_23 = arith.constant 0 : index
    %35 = arith.index_cast %34 : i32 to index
    %c0_24 = arith.constant 0 : index
    %c0_25 = arith.constant 0 : index
    %36 = vector.load %arg3[%c0_23, %35, %c0_24, %c0_25] : memref<1x18x18x4xbf16, #tpu.memory_space<vmem>>, vector<1x16x16x4xbf16>
    %37 = vector.shape_cast %36 : vector<1x16x16x4xbf16> to vector<16x16x4xbf16>
    %38 = vector.shape_cast %37 : vector<16x16x4xbf16> to vector<256x4xbf16>
    %c3 = arith.constant 3 : index
    %c0_26 = arith.constant 0 : index
    %c0_27 = arith.constant 0 : index
    %39 = vector.load %arg4[%c3, %c0_26, %c0_27] : memref<9x4x128xbf16, #tpu.memory_space<vmem>>, vector<1x4x128xbf16>
    %40 = vector.shape_cast %39 : vector<1x4x128xbf16> to vector<4x128xbf16>
    %cst_28 = arith.constant dense<0.000000e+00> : vector<256x128xf32>
    %41 = tpu.matmul %38, %40, %cst_28 {dimension_numbers = #tpu.dot_dimension_numbers<[1], [0], [0], [1], [0, 0, 1, 1], [], []>} : vector<256x4xbf16>, vector<4x128xbf16>, vector<256x128xf32> -> vector<256x128xf32>
    %42 = arith.addf %33, %41 : vector<256x128xf32>
    %c1_i32_29 = arith.constant 1 : i32
    %43 = arith.addi %5, %c1_i32_29 : i32
    %c0_30 = arith.constant 0 : index
    %44 = arith.index_cast %43 : i32 to index
    %c1_31 = arith.constant 1 : index
    %c0_32 = arith.constant 0 : index
    %45 = vector.load %arg3[%c0_30, %44, %c1_31, %c0_32] : memref<1x18x18x4xbf16, #tpu.memory_space<vmem>>, vector<1x16x16x4xbf16>
    %46 = vector.shape_cast %45 : vector<1x16x16x4xbf16> to vector<16x16x4xbf16>
    %47 = vector.shape_cast %46 : vector<16x16x4xbf16> to vector<256x4xbf16>
    %c4 = arith.constant 4 : index
    %c0_33 = arith.constant 0 : index
    %c0_34 = arith.constant 0 : index
    %48 = vector.load %arg4[%c4, %c0_33, %c0_34] : memref<9x4x128xbf16, #tpu.memory_space<vmem>>, vector<1x4x128xbf16>
    %49 = vector.shape_cast %48 : vector<1x4x128xbf16> to vector<4x128xbf16>
    %cst_35 = arith.constant dense<0.000000e+00> : vector<256x128xf32>
    %50 = tpu.matmul %47, %49, %cst_35 {dimension_numbers = #tpu.dot_dimension_numbers<[1], [0], [0], [1], [0, 0, 1, 1], [], []>} : vector<256x4xbf16>, vector<4x128xbf16>, vector<256x128xf32> -> vector<256x128xf32>
    %51 = arith.addf %42, %50 : vector<256x128xf32>
    %c1_i32_36 = arith.constant 1 : i32
    %52 = arith.addi %5, %c1_i32_36 : i32
    %c0_37 = arith.constant 0 : index
    %53 = arith.index_cast %52 : i32 to index
    %c2_38 = arith.constant 2 : index
    %c0_39 = arith.constant 0 : index
    %54 = vector.load %arg3[%c0_37, %53, %c2_38, %c0_39] : memref<1x18x18x4xbf16, #tpu.memory_space<vmem>>, vector<1x16x16x4xbf16>
    %55 = vector.shape_cast %54 : vector<1x16x16x4xbf16> to vector<16x16x4xbf16>
    %56 = vector.shape_cast %55 : vector<16x16x4xbf16> to vector<256x4xbf16>
    %c5 = arith.constant 5 : index
    %c0_40 = arith.constant 0 : index
    %c0_41 = arith.constant 0 : index
    %57 = vector.load %arg4[%c5, %c0_40, %c0_41] : memref<9x4x128xbf16, #tpu.memory_space<vmem>>, vector<1x4x128xbf16>
    %58 = vector.shape_cast %57 : vector<1x4x128xbf16> to vector<4x128xbf16>
    %cst_42 = arith.constant dense<0.000000e+00> : vector<256x128xf32>
    %59 = tpu.matmul %56, %58, %cst_42 {dimension_numbers = #tpu.dot_dimension_numbers<[1], [0], [0], [1], [0, 0, 1, 1], [], []>} : vector<256x4xbf16>, vector<4x128xbf16>, vector<256x128xf32> -> vector<256x128xf32>
    %60 = arith.addf %51, %59 : vector<256x128xf32>
    %c2_i32 = arith.constant 2 : i32
    %61 = arith.addi %5, %c2_i32 : i32
    %c0_43 = arith.constant 0 : index
    %62 = arith.index_cast %61 : i32 to index
    %c0_44 = arith.constant 0 : index
    %c0_45 = arith.constant 0 : index
    %63 = vector.load %arg3[%c0_43, %62, %c0_44, %c0_45] : memref<1x18x18x4xbf16, #tpu.memory_space<vmem>>, vector<1x16x16x4xbf16>
    %64 = vector.shape_cast %63 : vector<1x16x16x4xbf16> to vector<16x16x4xbf16>
    %65 = vector.shape_cast %64 : vector<16x16x4xbf16> to vector<256x4xbf16>
    %c6 = arith.constant 6 : index
    %c0_46 = arith.constant 0 : index
    %c0_47 = arith.constant 0 : index
    %66 = vector.load %arg4[%c6, %c0_46, %c0_47] : memref<9x4x128xbf16, #tpu.memory_space<vmem>>, vector<1x4x128xbf16>
    %67 = vector.shape_cast %66 : vector<1x4x128xbf16> to vector<4x128xbf16>
    %cst_48 = arith.constant dense<0.000000e+00> : vector<256x128xf32>
    %68 = tpu.matmul %65, %67, %cst_48 {dimension_numbers = #tpu.dot_dimension_numbers<[1], [0], [0], [1], [0, 0, 1, 1], [], []>} : vector<256x4xbf16>, vector<4x128xbf16>, vector<256x128xf32> -> vector<256x128xf32>
    %69 = arith.addf %60, %68 : vector<256x128xf32>
    %c2_i32_49 = arith.constant 2 : i32
    %70 = arith.addi %5, %c2_i32_49 : i32
    %c0_50 = arith.constant 0 : index
    %71 = arith.index_cast %70 : i32 to index
    %c1_51 = arith.constant 1 : index
    %c0_52 = arith.constant 0 : index
    %72 = vector.load %arg3[%c0_50, %71, %c1_51, %c0_52] : memref<1x18x18x4xbf16, #tpu.memory_space<vmem>>, vector<1x16x16x4xbf16>
    %73 = vector.shape_cast %72 : vector<1x16x16x4xbf16> to vector<16x16x4xbf16>
    %74 = vector.shape_cast %73 : vector<16x16x4xbf16> to vector<256x4xbf16>
    %c7 = arith.constant 7 : index
    %c0_53 = arith.constant 0 : index
    %c0_54 = arith.constant 0 : index
    %75 = vector.load %arg4[%c7, %c0_53, %c0_54] : memref<9x4x128xbf16, #tpu.memory_space<vmem>>, vector<1x4x128xbf16>
    %76 = vector.shape_cast %75 : vector<1x4x128xbf16> to vector<4x128xbf16>
    %cst_55 = arith.constant dense<0.000000e+00> : vector<256x128xf32>
    %77 = tpu.matmul %74, %76, %cst_55 {dimension_numbers = #tpu.dot_dimension_numbers<[1], [0], [0], [1], [0, 0, 1, 1], [], []>} : vector<256x4xbf16>, vector<4x128xbf16>, vector<256x128xf32> -> vector<256x128xf32>
    %78 = arith.addf %69, %77 : vector<256x128xf32>
    %c2_i32_56 = arith.constant 2 : i32
    %79 = arith.addi %5, %c2_i32_56 : i32
    %c0_57 = arith.constant 0 : index
    %80 = arith.index_cast %79 : i32 to index
    %c2_58 = arith.constant 2 : index
    %c0_59 = arith.constant 0 : index
    %81 = vector.load %arg3[%c0_57, %80, %c2_58, %c0_59] : memref<1x18x18x4xbf16, #tpu.memory_space<vmem>>, vector<1x16x16x4xbf16>
    %82 = vector.shape_cast %81 : vector<1x16x16x4xbf16> to vector<16x16x4xbf16>
    %83 = vector.shape_cast %82 : vector<16x16x4xbf16> to vector<256x4xbf16>
    %c8 = arith.constant 8 : index
    %c0_60 = arith.constant 0 : index
    %c0_61 = arith.constant 0 : index
    %84 = vector.load %arg4[%c8, %c0_60, %c0_61] : memref<9x4x128xbf16, #tpu.memory_space<vmem>>, vector<1x4x128xbf16>
    %85 = vector.shape_cast %84 : vector<1x4x128xbf16> to vector<4x128xbf16>
    %cst_62 = arith.constant dense<0.000000e+00> : vector<256x128xf32>
    %86 = tpu.matmul %83, %85, %cst_62 {dimension_numbers = #tpu.dot_dimension_numbers<[1], [0], [0], [1], [0, 0, 1, 1], [], []>} : vector<256x4xbf16>, vector<4x128xbf16>, vector<256x128xf32> -> vector<256x128xf32>
    %87 = arith.addf %78, %86 : vector<256x128xf32>
    %c0_63 = arith.constant 0 : index
    %c0_64 = arith.constant 0 : index
    %88 = vector.load %arg6[%c0_63, %c0_64] : memref<1x128xf32, #tpu.memory_space<vmem>>, vector<1x128xf32>
    %cst_65 = arith.constant dense<0.000000e+00> : vector<128xf32>
    %89 = vector.multi_reduction <add>, %87, %cst_65 [0] : vector<256x128xf32> to vector<128xf32>
    %90 = vector.shape_cast %89 : vector<128xf32> to vector<1x128xf32>
    %91 = arith.addf %88, %90 : vector<1x128xf32>
    %c0_66 = arith.constant 0 : index
    %c0_67 = arith.constant 0 : index
    %92 = vector.load %arg6[%c0_66, %c0_67] : memref<1x128xf32, #tpu.memory_space<vmem>>, vector<1x128xf32>
    tpu.vector_store %arg6[%c0_66, %c0_67], %91 {strides = array<i32>} : memref<1x128xf32, #tpu.memory_space<vmem>>, vector<1x128xf32>,
    %c0_68 = arith.constant 0 : index
    %c0_69 = arith.constant 0 : index
    %93 = vector.load %arg7[%c0_68, %c0_69] : memref<1x128xf32, #tpu.memory_space<vmem>>, vector<1x128xf32>
    %94 = arith.mulf %87, %87 : vector<256x128xf32>
    %cst_70 = arith.constant dense<0.000000e+00> : vector<128xf32>
    %95 = vector.multi_reduction <add>, %94, %cst_70 [0] : vector<256x128xf32> to vector<128xf32>
    %96 = vector.shape_cast %95 : vector<128xf32> to vector<1x128xf32>
    %97 = arith.addf %93, %96 : vector<1x128xf32>
    %c0_71 = arith.constant 0 : index
    %c0_72 = arith.constant 0 : index
    %98 = vector.load %arg7[%c0_71, %c0_72] : memref<1x128xf32, #tpu.memory_space<vmem>>, vector<1x128xf32>
    tpu.vector_store %arg7[%c0_71, %c0_72], %97 {strides = array<i32>} : memref<1x128xf32, #tpu.memory_space<vmem>>, vector<1x128xf32>,
    %99 = vector.shape_cast %87 : vector<256x128xf32> to vector<16x16x128xf32>
    %100 = arith.truncf %99 : vector<16x16x128xf32> to vector<16x16x128xbf16>
    %c0_73 = arith.constant 0 : index
    %c0_74 = arith.constant 0 : index
    %c0_75 = arith.constant 0 : index
    %c0_76 = arith.constant 0 : index
    %101 = vector.load %arg5[%c0_73, %c0_74, %c0_75, %c0_76] : memref<1x16x16x128xbf16, #tpu.memory_space<vmem>>, vector<1x16x16x128xbf16>
    %102 = vector.shape_cast %101 : vector<1x16x16x128xbf16> to vector<16x16x128xbf16>
    %103 = vector.shape_cast %100 : vector<16x16x128xbf16> to vector<1x16x16x128xbf16>
    tpu.vector_store %arg5[%c0_73, %c0_74, %c0_75, %c0_76], %103 {strides = array<i32>} : memref<1x16x16x128xbf16, #tpu.memory_space<vmem>>, vector<1x16x16x128xbf16>,
    return
  }
  func.func @transform_0(%arg0: i32, %arg1: i32, %arg2: i32) -> (i32, i32, i32, i32) {
    %c0_i32 = arith.constant 0 : i32
    %c0_i32_0 = arith.constant 0 : i32
    %c0_i32_1 = arith.constant 0 : i32
    %c0_i32_2 = arith.constant 0 : i32
    return %arg1, %c0_i32, %c0_i32_0, %c0_i32_1 : i32, i32, i32, i32
  }
  func.func @transform_1(%arg0: i32, %arg1: i32, %arg2: i32) -> (i32, i32, i32) {
    %c0_i32 = arith.constant 0 : i32
    %c0_i32_0 = arith.constant 0 : i32
    %c0_i32_1 = arith.constant 0 : i32
    return %c0_i32, %c0_i32_0, %arg0 : i32, i32, i32
  }
  func.func @transform_2(%arg0: i32, %arg1: i32, %arg2: i32) -> (i32, i32, i32, i32) {
    %c0_i32 = arith.constant 0 : i32
    %c0_i32_0 = arith.constant 0 : i32
    return %arg1, %arg2, %c0_i32, %arg0 : i32, i32, i32, i32
  }
  func.func @transform_3(%arg0: i32, %arg1: i32, %arg2: i32) -> (i32, i32) {
    %c0_i32 = arith.constant 0 : i32
    %c0_i32_0 = arith.constant 0 : i32
    return %c0_i32, %arg0 : i32, i32
  }
  func.func @transform_4(%arg0: i32, %arg1: i32, %arg2: i32) -> (i32, i32) {
    %c0_i32 = arith.constant 0 : i32
    %c0_i32_0 = arith.constant 0 : i32
    return %c0_i32, %arg0 : i32, i32
  }
}

</mosaic_0001>

<llo_original>
// kernel: conv_block_forward.3
$region0: #{conv_block_forward.3}
  #allocation0 [shape = 'u32[]', space=smem, size = 0x4, offset = 0x4, fixed_abs, tag = 'smem constant byte address 0x4 - core index']
  #allocation1 [shape = 'u32[144,128]{1,0:T(1,128)}', space=vmem, size = 0x12000, scoped, tag = 'internal scratch']
  %s0 = inlined_call_operand.vmem [shape: bf16[2,16,16,128], index: 0, kind: input, shape index: {}]
  %s1 = inlined_call_operand.vmem [shape: f32[1,128], index: 1, kind: input, shape index: {}]
  %s2 = inlined_call_operand.vmem [shape: f32[1,128], index: 2, kind: input, shape index: {}]
  %s3 = inlined_call_operand.vmem [shape: f32[2,16,16,128], index: 3, kind: output, shape index: {}]
  %s4 = sld [smem:[#allocation0]]
  $region45: #{conv_block_forward.3} parent=0
    _
  %s6 = ssub.s32 1, %s4
  %s7 = scalar_select 0, %s6, %s4
  loop: start=0, step=1, limit=4
  $region2: #{conv_block_forward.3} parent=0 // loop_pre_header
    _
  $region3: #{conv_block_forward.3} parent=0 // loop_header
    %s9 = sphi 0, %s13
    %p10 = scmp.ge.s32.totalorder %s9, 4
    %s16 = sphi 0, %s35
    %s17 = sphi 0, %s31
    %s18 = sphi 0, %s27
    %s19 = sphi 0, %s16
    %s20 = sphi 0, %s17
    %s21 = sphi 0, %s18
    %s22 = sphi 0, %s19
    %s23 = sphi 0, %s20
    %s24 = sphi 0, %s21
    %s42 = sphi 0, %s44
    %s45 = sphi 0, %s42
    %s46 = sphi 0, %s45
    %s62 = sphi 0, %s46
    %s68 = sphi 0, %s70
    %s71 = sphi 0, %s68
    %s72 = sphi 0, %s71
    %s88 = sphi 0, %s72
    %s94 = sphi 0, %s96
    %s97 = sphi 0, %s94
    %s98 = sphi 0, %s97
    %s114 = sphi 0, %s98
    %s124 = sphi 0, %s126
    %s127 = sphi 0, %s124
    %s128 = sphi 0, %s127
    %s144 = sphi 0, %s128
  $region4: #{conv_block_forward.3} parent=0 // loop_header_branch
    %12 = sbr.rel (%p10) target = $region8
  $region5: #{conv_block_forward.3} parent=0 // loop_body
    %s14 = ssub.s32 %s9, 1
    %s15 = ssub.s32 %s9, 2
    %s25 = sadd.s32 1, %s18
    %p26 = scmp.ge.s32.totalorder %s25, 1
    %s27 = scalar_select %p26, 0, %s25
    %s28 = sadd.s32 1, %s17
    %s29 = scalar_select %p26, %s28, %s17
    %p30 = scmp.ge.s32.totalorder %s29, 2
    %s31 = scalar_select %p30, 0, %s29
    %s32 = sadd.s32 1, %s16
    %s33 = scalar_select %p30, %s32, %s16
    %p34 = scmp.ge.s32.totalorder %s33, 1
    %s35 = scalar_select %p34, 0, %s33
    %s36 = ssub.s32 %s17, %s31
    %s37 = ssub.s32 %s18, %s27
    %s38 = sor.u32 %s36, %s37
    %s39 = ssub.s32 %s16, %s35
    %s40 = sor.u32 %s38, %s39
    %p41 = scmp.eq.s32.totalorder %s40, 0
    %s43 = sadd.s32 %s42, 1
    %s44 = scalar_select %p41, %s42, %s43
    %p47 = pneg %p41
    %p48 = scmp.eq.s32.totalorder %s9, 1
    %p49 = por %p47, %p48
    %p50 = scmp.ne.s32.totalorder %s42, %s45
    %p51 = scmp.eq.s32.totalorder %s9, 0
    %p52 = por %p50, %p51
    %p53 = scmp.ne.s32.totalorder %s42, %s45
    %p54 = scmp.eq.s32.totalorder %s14, 1
    %p55 = por %p53, %p54
    %p56 = scmp.ne.s32.totalorder %s45, %s46
    %p57 = scmp.eq.s32.totalorder %s14, 0
    %p58 = por %p56, %p57
    %p59 = scmp.ne.s32.totalorder %s45, %s46
    %p60 = scmp.eq.s32.totalorder %s15, 1
    %p61 = por %p59, %p60
    %p63 = scmp.ne.s32.totalorder %s46, %s62
    %p64 = scmp.eq.s32.totalorder %s15, 0
    %p65 = por %p63, %p64
    %s66 = ssub.s32 %s16, %s35
    %p67 = scmp.eq.s32.totalorder %s66, 0
    %s69 = sadd.s32 %s68, 1
    %s70 = scalar_select %p67, %s68, %s69
    %p73 = pneg %p67
    %p74 = scmp.eq.s32.totalorder %s9, 1
    %p75 = por %p73, %p74
    %p76 = scmp.ne.s32.totalorder %s68, %s71
    %p77 = scmp.eq.s32.totalorder %s9, 0
    %p78 = por %p76, %p77
    %p79 = scmp.ne.s32.totalorder %s68, %s71
    %p80 = scmp.eq.s32.totalorder %s14, 1
    %p81 = por %p79, %p80
    %p82 = scmp.ne.s32.totalorder %s71, %s72
    %p83 = scmp.eq.s32.totalorder %s14, 0
    %p84 = por %p82, %p83
    %p85 = scmp.ne.s32.totalorder %s71, %s72
    %p86 = scmp.eq.s32.totalorder %s15, 1
    %p87 = por %p85, %p86
    %p89 = scmp.ne.s32.totalorder %s72, %s88
    %p90 = scmp.eq.s32.totalorder %s15, 0
    %p91 = por %p89, %p90
    %s92 = ssub.s32 %s16, %s35
    %p93 = scmp.eq.s32.totalorder %s92, 0
    %s95 = sadd.s32 %s94, 1
    %s96 = scalar_select %p93, %s94, %s95
    %p99 = pneg %p93
    %p100 = scmp.eq.s32.totalorder %s9, 1
    %p101 = por %p99, %p100
    %p102 = scmp.ne.s32.totalorder %s94, %s97
    %p103 = scmp.eq.s32.totalorder %s9, 0
    %p104 = por %p102, %p103
    %p105 = scmp.ne.s32.totalorder %s94, %s97
    %p106 = scmp.eq.s32.totalorder %s14, 1
    %p107 = por %p105, %p106
    %p108 = scmp.ne.s32.totalorder %s97, %s98
    %p109 = scmp.eq.s32.totalorder %s14, 0
    %p110 = por %p108, %p109
    %p111 = scmp.ne.s32.totalorder %s97, %s98
    %p112 = scmp.eq.s32.totalorder %s15, 1
    %p113 = por %p111, %p112
    %p115 = scmp.ne.s32.totalorder %s98, %s114
    %p116 = scmp.eq.s32.totalorder %s15, 0
    %p117 = por %p115, %p116
    %s118 = ssub.s32 %s17, %s31
    %s119 = ssub.s32 %s18, %s27
    %s120 = sor.u32 %s118, %s119
    %s121 = ssub.s32 %s16, %s35
    %s122 = sor.u32 %s120, %s121
    %p123 = scmp.eq.s32.totalorder %s122, 0
    %s125 = sadd.s32 %s124, 1
    %s126 = scalar_select %p123, %s124, %s125
    %p129 = pneg %p123
    %p130 = scmp.eq.s32.totalorder %s9, 1
    %p131 = por %p129, %p130
    %p132 = scmp.ne.s32.totalorder %s124, %s127
    %p133 = scmp.eq.s32.totalorder %s9, 0
    %p134 = por %p132, %p133
    %p135 = scmp.ne.s32.totalorder %s124, %s127
    %p136 = scmp.eq.s32.totalorder %s14, 1
    %p137 = por %p135, %p136
    %p138 = scmp.ne.s32.totalorder %s127, %s128
    %p139 = scmp.eq.s32.totalorder %s14, 0
    %p140 = por %p138, %p139
    %p141 = scmp.ne.s32.totalorder %s127, %s128
    %p142 = scmp.eq.s32.totalorder %s15, 1
    %p143 = por %p141, %p142
    %p145 = scmp.ne.s32.totalorder %s128, %s144
    %p146 = scmp.eq.s32.totalorder %s15, 0
    %p147 = por %p145, %p146
    %p148 = scmp.le.s32.totalorder 1, %s9
    %p149 = scmp.lt.s32.totalorder %s9, 3
    %p150 = pnand %p148, %p149
    %p151 = pneg %p150
    // Predicated region
    $region9: #{conv_block_forward.3} parent=5 // pred_check
      _
    $region10: #{conv_block_forward.3} parent=5 // pred_check_branch
      %153 = sbr.rel (%p150) target = $region12
    $region11: #{conv_block_forward.3} parent=5 // pred_region
      %s154 = ssub.s32 %s9, 1
      // Predicated region
      $region13: #{conv_block_forward.3} parent=11 // pred_check
        %p155 = pneg %p84
      $region14: #{conv_block_forward.3} parent=11 // pred_check_branch
        %157 = sbr.rel (%p155) target = $region16
      $region15: #{conv_block_forward.3} parent=11 // pred_region
        %p158 = scmp.lt.s32.totalorder %s19, 0
        %s159 = scalar_select %p158, %s19, 0
        %s160 = scalar_lea.vmem %s1, %s159
      $region16: #{conv_block_forward.3} parent=11 // pred_fallthru
        _
      // Predicated region
      $region17: #{conv_block_forward.3} parent=11 // pred_check
        %p161 = pneg %p110
      $region18: #{conv_block_forward.3} parent=11 // pred_check_branch
        %163 = sbr.rel (%p161) target = $region20
      $region19: #{conv_block_forward.3} parent=11 // pred_region
        %p164 = scmp.lt.s32.totalorder %s19, 0
        %s165 = scalar_select %p164, %s19, 0
        %s166 = scalar_lea.vmem %s2, %s165
      $region20: #{conv_block_forward.3} parent=11 // pred_fallthru
        _
    $region12: #{conv_block_forward.3} parent=5 // pred_fallthru
      _
    %p167 = scmp.lt.s32.totalorder %s9, 2
    // Predicated region
    $region21: #{conv_block_forward.3} parent=5 // pred_check
      %p168 = pneg %p167
    $region22: #{conv_block_forward.3} parent=5 // pred_check_branch
      %170 = sbr.rel (%p168) target = $region24
    $region23: #{conv_block_forward.3} parent=5 // pred_region
      // Predicated region
      $region25: #{conv_block_forward.3} parent=23 // pred_check
        %p171 = pneg %p52
      $region26: #{conv_block_forward.3} parent=23 // pred_check_branch
        %173 = sbr.rel (%p171) target = $region28
      $region27: #{conv_block_forward.3} parent=23 // pred_region
        %s174 = smul.u32 16, %s18
        %p175 = scmp.lt.s32.totalorder %s17, 1
        %s176 = scalar_select %p175, %s17, 1
        %p177 = scmp.lt.s32.totalorder %s174, 15
        %s178 = scalar_select %p177, %s174, 15
        %p179 = scmp.lt.s32.totalorder %s16, 0
        %s180 = scalar_select %p179, %s16, 0
        %s181 = smul.addr %s178, 2
        %s182 = sadd.s32 %s180, %s181
        %s183 = smul.addr %s176, 32
        %s184 = sadd.s32 %s182, %s183
        %s185 = smul.addr %s184, 4
        %s186 = scalar_lea.vmem %s0, %s185
        %s187 = smul.u32 16, %s18
      $region28: #{conv_block_forward.3} parent=23 // pred_fallthru
        _
    $region24: #{conv_block_forward.3} parent=5 // pred_fallthru
      _
    %p188 = scmp.le.s32.totalorder 1, %s9
    %p189 = scmp.lt.s32.totalorder %s9, 3
    %p190 = pnand %p188, %p189
    %p191 = pneg %p190
    // Predicated region
    $region29: #{conv_block_forward.3} parent=5 // pred_check
      _
    $region30: #{conv_block_forward.3} parent=5 // pred_check_branch
      %193 = sbr.rel (%p190) target = $region32
    $region31: #{conv_block_forward.3} parent=5 // pred_region
      %s194 = ssub.s32 %s9, 1
      %s195 = smul.u32 16, %s21
      %p196 = scmp.lt.s32.totalorder %s20, 1
      %s197 = scalar_select %p196, %s20, 1
      %p198 = scmp.lt.s32.totalorder %s195, 15
      %s199 = scalar_select %p198, %s195, 15
      %p200 = scmp.lt.s32.totalorder %s19, 0
      %s201 = scalar_select %p200, %s19, 0
      %s202 = smul.addr %s199, 2
      %s203 = sadd.s32 %s201, %s202
      %s204 = smul.addr %s197, 32
      %s205 = sadd.s32 %s203, %s204
      %s206 = smul.addr %s205, 4
      %s207 = scalar_lea.vmem %s0, %s206
      %p208 = pneg %p58
      %p209 = pneg %p55
      %p210 = scmp.lt.s32.totalorder %s19, 0
      %s211 = scalar_select %p210, %s19, 0
      %s212 = scalar_lea.vmem %s1, %s211
      %p213 = pneg %p84
      %p214 = pneg %p81
      %p215 = scmp.lt.s32.totalorder %s19, 0
      %s216 = scalar_select %p215, %s19, 0
      %s217 = scalar_lea.vmem %s2, %s216
      %p218 = pneg %p110
      %p219 = pneg %p107
      %p220 = pneg %p140
      %p221 = pneg %p137
      %s222 = smul.u32 16, %s21
      %p223 = scmp.lt.s32.totalorder %s20, 1
      %s224 = scalar_select %p223, %s20, 1
      %p225 = scmp.lt.s32.totalorder %s222, 15
      %s226 = scalar_select %p225, %s222, 15
      %p227 = scmp.lt.s32.totalorder %s19, 0
      %s228 = scalar_select %p227, %s19, 0
      %s229 = smul.addr %s226, 2
      %s230 = sadd.s32 %s228, %s229
      %s231 = smul.addr %s224, 32
      %s232 = sadd.s32 %s230, %s231
      %s233 = smul.addr %s232, 8
      %s234 = scalar_lea.vmem %s3, %s233
      %s235 = smul.u32 16, %s21
      %p236 = scmp.lt.s32.totalorder %s20, 1
      %s237 = scalar_select %p236, %s20, 1
      %p238 = scmp.lt.s32.totalorder %s235, 15
      %s239 = scalar_select %p238, %s235, 15
      %p240 = scmp.lt.s32.totalorder %s19, 0
      %s241 = scalar_select %p240, %s19, 0
      %s242 = smul.addr %s239, 2
      %s243 = sadd.s32 %s241, %s242
      %s244 = smul.addr %s237, 32
      %s245 = sadd.s32 %s243, %s244
      %s246 = smul.addr %s245, 4
      %s247 = scalar_lea.vmem %s0, %s246
      %s248 = smul.u32 16, %s21
      %p249 = scmp.lt.s32.totalorder %s19, 0
      %s250 = scalar_select %p249, %s19, 0
      %s251 = scalar_lea.vmem %s1, %s250
      %p252 = scmp.lt.s32.totalorder %s19, 0
      %s253 = scalar_select %p252, %s19, 0
      %s254 = scalar_lea.vmem %s2, %s253
      %s255 = smul.u32 16, %s21
      %p256 = scmp.lt.s32.totalorder %s20, 1
      %s257 = scalar_select %p256, %s20, 1
      %p258 = scmp.lt.s32.totalorder %s255, 15
      %s259 = scalar_select %p258, %s255, 15
      %p260 = scmp.lt.s32.totalorder %s19, 0
      %s261 = scalar_select %p260, %s19, 0
      %s262 = smul.addr %s259, 2
      %s263 = sadd.s32 %s261, %s262
      %s264 = smul.addr %s257, 32
      %s265 = sadd.s32 %s263, %s264
      %s266 = smul.addr %s265, 8
      %s267 = scalar_lea.vmem %s3, %s266
      %s268 = smul.u32 16, %s21
      %v269 = vld [vmem:[%s247] sm:$0xf]
      %v270 = vld [vmem:[%s247 + $0x4] sm:$0xf]
      %v271 = vld [vmem:[%s247 + $0x8] sm:$0xf]
      %v272 = vld [vmem:[%s247 + $0xc] sm:$0xf]
      %v273 = vld [vmem:[%s247 + $0x10] sm:$0xf]
      %v274 = vld [vmem:[%s247 + $0x14] sm:$0xf]
      %v275 = vld [vmem:[%s247 + $0x18] sm:$0xf]
      %v276 = vld [vmem:[%s247 + $0x1c] sm:$0xf]
      %v277 = vld [vmem:[%s247 + $0x20] sm:$0xf]
      %v278 = vld [vmem:[%s247 + $0x24] sm:$0xf]
      %v279 = vld [vmem:[%s247 + $0x28] sm:$0xf]
      %v280 = vld [vmem:[%s247 + $0x2c] sm:$0xf]
      %v281 = vld [vmem:[%s247 + $0x30] sm:$0xf]
      %v282 = vld [vmem:[%s247 + $0x34] sm:$0xf]
      %v283 = vld [vmem:[%s247 + $0x38] sm:$0xf]
      %v284 = vld [vmem:[%s247 + $0x3c] sm:$0xf]
      %v285 = vld [vmem:[%s247 + $0x40] sm:$0xf]
      %v286 = vld [vmem:[%s247 + $0x44] sm:$0xf]
      %v287 = vld [vmem:[%s247 + $0x48] sm:$0xf]
      %v288 = vld [vmem:[%s247 + $0x4c] sm:$0xf]
      %v289 = vld [vmem:[%s247 + $0x50] sm:$0xf]
      %v290 = vld [vmem:[%s247 + $0x54] sm:$0xf]
      %v291 = vld [vmem:[%s247 + $0x58] sm:$0xf]
      %v292 = vld [vmem:[%s247 + $0x5c] sm:$0xf]
      %v293 = vld [vmem:[%s247 + $0x60] sm:$0xf]
      %v294 = vld [vmem:[%s247 + $0x64] sm:$0xf]
      %v295 = vld [vmem:[%s247 + $0x68] sm:$0xf]
      %v296 = vld [vmem:[%s247 + $0x6c] sm:$0xf]
      %v297 = vld [vmem:[%s247 + $0x70] sm:$0xf]
      %v298 = vld [vmem:[%s247 + $0x74] sm:$0xf]
      %v299 = vld [vmem:[%s247 + $0x78] sm:$0xf]
      %v300 = vld [vmem:[%s247 + $0x7c] sm:$0xf]
      %v301 = vunpack.c.l.bf16 %v269
      %v302 = vunpack.c.l.bf16 %v270
      %v303 = vunpack.c.l.bf16 %v271
      %v304 = vunpack.c.l.bf16 %v272
      %v305 = vunpack.c.l.bf16 %v273
      %v306 = vunpack.c.l.bf16 %v274
      %v307 = vunpack.c.l.bf16 %v275
      %v308 = vunpack.c.l.bf16 %v276
      %v309 = vunpack.c.l.bf16 %v277
      %v310 = vunpack.c.l.bf16 %v278
      %v311 = vunpack.c.l.bf16 %v279
      %v312 = vunpack.c.l.bf16 %v280
      %v313 = vunpack.c.l.bf16 %v281
      %v314 = vunpack.c.l.bf16 %v282
      %v315 = vunpack.c.l.bf16 %v283
      %v316 = vunpack.c.l.bf16 %v284
      %v317 = vunpack.c.l.bf16 %v285
      %v318 = vunpack.c.l.bf16 %v286
      %v319 = vunpack.c.l.bf16 %v287
      %v320 = vunpack.c.l.bf16 %v288
      %v321 = vunpack.c.l.bf16 %v289
      %v322 = vunpack.c.l.bf16 %v290
      %v323 = vunpack.c.l.bf16 %v291
      %v324 = vunpack.c.l.bf16 %v292
      %v325 = vunpack.c.l.bf16 %v293
      %v326 = vunpack.c.l.bf16 %v294
      %v327 = vunpack.c.l.bf16 %v295
      %v328 = vunpack.c.l.bf16 %v296
      %v329 = vunpack.c.l.bf16 %v297
      %v330 = vunpack.c.l.bf16 %v298
      %v331 = vunpack.c.l.bf16 %v299
      %v332 = vunpack.c.l.bf16 %v300
      %v333 = vld [vmem:[%s251] sm:$0x1]
      %v335 = vlaneseq
      %v336 = vshrl.u32 %v335, 7
      %v337 = vsub.s32 0, %v336
      %v338 = vrot.slane %v333, %v337
      %v340 = vmul.f32 %v301, %v338
      %v341 = vmul.f32 %v302, %v338
      %v342 = vmul.f32 %v303, %v338
      %v343 = vmul.f32 %v304, %v338
      %v344 = vmul.f32 %v305, %v338
      %v345 = vmul.f32 %v306, %v338
      %v346 = vmul.f32 %v307, %v338
      %v347 = vmul.f32 %v308, %v338
      %v348 = vmul.f32 %v309, %v338
      %v349 = vmul.f32 %v310, %v338
      %v350 = vmul.f32 %v311, %v338
      %v351 = vmul.f32 %v312, %v338
      %v352 = vmul.f32 %v313, %v338
      %v353 = vmul.f32 %v314, %v338
      %v354 = vmul.f32 %v315, %v338
      %v355 = vmul.f32 %v316, %v338
      %v356 = vmul.f32 %v317, %v338
      %v357 = vmul.f32 %v318, %v338
      %v358 = vmul.f32 %v319, %v338
      %v359 = vmul.f32 %v320, %v338
      %v360 = vmul.f32 %v321, %v338
      %v361 = vmul.f32 %v322, %v338
      %v362 = vmul.f32 %v323, %v338
      %v363 = vmul.f32 %v324, %v338
      %v364 = vmul.f32 %v325, %v338
      %v365 = vmul.f32 %v326, %v338
      %v366 = vmul.f32 %v327, %v338
      %v367 = vmul.f32 %v328, %v338
      %v368 = vmul.f32 %v329, %v338
      %v369 = vmul.f32 %v330, %v338
      %v370 = vmul.f32 %v331, %v338
      %v371 = vmul.f32 %v332, %v338
      %v372 = vld [vmem:[%s254] sm:$0x1]
      %v374 = vlaneseq
      %v375 = vshrl.u32 %v374, 7
      %v376 = vsub.s32 0, %v375
      %v377 = vrot.slane %v372, %v376
      %v379 = vadd.f32 %v340, %v377
      %v380 = vadd.f32 %v341, %v377
      %v381 = vadd.f32 %v342, %v377
      %v382 = vadd.f32 %v343, %v377
      %v383 = vadd.f32 %v344, %v377
      %v384 = vadd.f32 %v345, %v377
      %v385 = vadd.f32 %v346, %v377
      %v386 = vadd.f32 %v347, %v377
      %v387 = vadd.f32 %v348, %v377
      %v388 = vadd.f32 %v349, %v377
      %v389 = vadd.f32 %v350, %v377
      %v390 = vadd.f32 %v351, %v377
      %v391 = vadd.f32 %v352, %v377
      %v392 = vadd.f32 %v353, %v377
      %v393 = vadd.f32 %v354, %v377
      %v394 = vadd.f32 %v355, %v377
      %v395 = vadd.f32 %v356, %v377
      %v396 = vadd.f32 %v357, %v377
      %v397 = vadd.f32 %v358, %v377
      %v398 = vadd.f32 %v359, %v377
      %v399 = vadd.f32 %v360, %v377
      %v400 = vadd.f32 %v361, %v377
      %v401 = vadd.f32 %v362, %v377
      %v402 = vadd.f32 %v363, %v377
      %v403 = vadd.f32 %v364, %v377
      %v404 = vadd.f32 %v365, %v377
      %v405 = vadd.f32 %v366, %v377
      %v406 = vadd.f32 %v367, %v377
      %v407 = vadd.f32 %v368, %v377
      %v408 = vadd.f32 %v369, %v377
      %v409 = vadd.f32 %v370, %v377
      %v410 = vadd.f32 %v371, %v377
      %v411 = vmax.f32 %v379, 0.0
      %v412 = vmax.f32 %v380, 0.0
      %v413 = vmax.f32 %v381, 0.0
      %v414 = vmax.f32 %v382, 0.0
      %v415 = vmax.f32 %v383, 0.0
      %v416 = vmax.f32 %v384, 0.0
      %v417 = vmax.f32 %v385, 0.0
      %v418 = vmax.f32 %v386, 0.0
      %v419 = vmax.f32 %v387, 0.0
      %v420 = vmax.f32 %v388, 0.0
      %v421 = vmax.f32 %v389, 0.0
      %v422 = vmax.f32 %v390, 0.0
      %v423 = vmax.f32 %v391, 0.0
      %v424 = vmax.f32 %v392, 0.0
      %v425 = vmax.f32 %v393, 0.0
      %v426 = vmax.f32 %v394, 0.0
      %v427 = vmax.f32 %v395, 0.0
      %v428 = vmax.f32 %v396, 0.0
      %v429 = vmax.f32 %v397, 0.0
      %v430 = vmax.f32 %v398, 0.0
      %v431 = vmax.f32 %v399, 0.0
      %v432 = vmax.f32 %v400, 0.0
      %v433 = vmax.f32 %v401, 0.0
      %v434 = vmax.f32 %v402, 0.0
      %v435 = vmax.f32 %v403, 0.0
      %v436 = vmax.f32 %v404, 0.0
      %v437 = vmax.f32 %v405, 0.0
      %v438 = vmax.f32 %v406, 0.0
      %v439 = vmax.f32 %v407, 0.0
      %v440 = vmax.f32 %v408, 0.0
      %v441 = vmax.f32 %v409, 0.0
      %v442 = vmax.f32 %v410, 0.0
      %443 = vst [vmem:[%s267] sm:$0xff] %v411
      %444 = vst [vmem:[%s267 + $0x8] sm:$0xff] %v412
      %445 = vst [vmem:[%s267 + $0x10] sm:$0xff] %v413
      %446 = vst [vmem:[%s267 + $0x18] sm:$0xff] %v414
      %447 = vst [vmem:[%s267 + $0x20] sm:$0xff] %v415
      %448 = vst [vmem:[%s267 + $0x28] sm:$0xff] %v416
      %449 = vst [vmem:[%s267 + $0x30] sm:$0xff] %v417
      %450 = vst [vmem:[%s267 + $0x38] sm:$0xff] %v418
      %451 = vst [vmem:[%s267 + $0x40] sm:$0xff] %v419
      %452 = vst [vmem:[%s267 + $0x48] sm:$0xff] %v420
      %453 = vst [vmem:[%s267 + $0x50] sm:$0xff] %v421
      %454 = vst [vmem:[%s267 + $0x58] sm:$0xff] %v422
      %455 = vst [vmem:[%s267 + $0x60] sm:$0xff] %v423
      %456 = vst [vmem:[%s267 + $0x68] sm:$0xff] %v424
      %457 = vst [vmem:[%s267 + $0x70] sm:$0xff] %v425
      %458 = vst [vmem:[%s267 + $0x78] sm:$0xff] %v426
      %459 = vst [vmem:[%s267 + $0x80] sm:$0xff] %v427
      %460 = vst [vmem:[%s267 + $0x88] sm:$0xff] %v428
      %461 = vst [vmem:[%s267 + $0x90] sm:$0xff] %v429
      %462 = vst [vmem:[%s267 + $0x98] sm:$0xff] %v430
      %463 = vst [vmem:[%s267 + $0xa0] sm:$0xff] %v431
      %464 = vst [vmem:[%s267 + $0xa8] sm:$0xff] %v432
      %465 = vst [vmem:[%s267 + $0xb0] sm:$0xff] %v433
      %466 = vst [vmem:[%s267 + $0xb8] sm:$0xff] %v434
      %467 = vst [vmem:[%s267 + $0xc0] sm:$0xff] %v435
      %468 = vst [vmem:[%s267 + $0xc8] sm:$0xff] %v436
      %469 = vst [vmem:[%s267 + $0xd0] sm:$0xff] %v437
      %470 = vst [vmem:[%s267 + $0xd8] sm:$0xff] %v438
      %471 = vst [vmem:[%s267 + $0xe0] sm:$0xff] %v439
      %472 = vst [vmem:[%s267 + $0xe8] sm:$0xff] %v440
      %473 = vst [vmem:[%s267 + $0xf0] sm:$0xff] %v441
      %474 = vst [vmem:[%s267 + $0xf8] sm:$0xff] %v442
      %s475 = smul.u32 16, %s21
      %p476 = scmp.lt.s32.totalorder %s20, 1
      %s477 = scalar_select %p476, %s20, 1
      %p478 = scmp.lt.s32.totalorder %s475, 15
      %s479 = scalar_select %p478, %s475, 15
      %p480 = scmp.lt.s32.totalorder %s19, 0
      %s481 = scalar_select %p480, %s19, 0
      %s482 = smul.addr %s479, 2
      %s483 = sadd.s32 %s481, %s482
      %s484 = smul.addr %s477, 32
      %s485 = sadd.s32 %s483, %s484
      %s486 = smul.addr %s485, 8
      %s487 = scalar_lea.vmem %s3, %s486
      // Predicated region
      $region33: #{conv_block_forward.3} parent=31 // pred_check
        %p488 = pneg %p137
      $region34: #{conv_block_forward.3} parent=31 // pred_check_branch
        %490 = sbr.rel (%p488) target = $region36
      $region35: #{conv_block_forward.3} parent=31 // pred_region
        %s491 = smul.u32 16, %s21
      $region36: #{conv_block_forward.3} parent=31 // pred_fallthru
        _
    $region32: #{conv_block_forward.3} parent=5 // pred_fallthru
      _
    %p492 = scmp.le.s32.totalorder 2, %s9
    // Predicated region
    $region37: #{conv_block_forward.3} parent=5 // pred_check
      %p493 = pneg %p492
    $region38: #{conv_block_forward.3} parent=5 // pred_check_branch
      %495 = sbr.rel (%p493) target = $region40
    $region39: #{conv_block_forward.3} parent=5 // pred_region
      %s496 = ssub.s32 %s9, 2
      // Predicated region
      $region41: #{conv_block_forward.3} parent=39 // pred_check
        %p497 = pneg %p143
      $region42: #{conv_block_forward.3} parent=39 // pred_check_branch
        %499 = sbr.rel (%p497) target = $region44
      $region43: #{conv_block_forward.3} parent=39 // pred_region
        %s500 = smul.u32 16, %s24
        %p501 = scmp.lt.s32.totalorder %s23, 1
        %s502 = scalar_select %p501, %s23, 1
        %p503 = scmp.lt.s32.totalorder %s500, 15
        %s504 = scalar_select %p503, %s500, 15
        %p505 = scmp.lt.s32.totalorder %s22, 0
        %s506 = scalar_select %p505, %s22, 0
        %s507 = smul.addr %s504, 2
        %s508 = sadd.s32 %s506, %s507
        %s509 = smul.addr %s502, 32
        %s510 = sadd.s32 %s508, %s509
        %s511 = smul.addr %s510, 8
        %s512 = scalar_lea.vmem %s3, %s511
      $region44: #{conv_block_forward.3} parent=39 // pred_fallthru
        _
    $region40: #{conv_block_forward.3} parent=5 // pred_fallthru
      _
  $region6: #{conv_block_forward.3} parent=0 // loop_footer
    %s13 = sadd.s32 1, %s9
  $region7: #{conv_block_forward.3} parent=0 // loop_footer_branch
    %8 = sbr.rel target = $region3
  $region8: #{conv_block_forward.3} parent=0 // loop_exit
    _

// kernel: conv_block_forward.2
$region0: #{conv_block_forward.2}
  #allocation0 [shape = 'u32[]', space=smem, size = 0x4, offset = 0x4, fixed_abs, tag = 'smem constant byte address 0x4 - core index']
  #allocation1 [shape = 'u32[144,128]{1,0:T(1,128)}', space=vmem, size = 0x12000, scoped, tag = 'internal scratch']
  %s0 = inlined_call_operand.vmem [shape: bf16[2,18,18,4], index: 0, kind: input, shape index: {}]
  %s1 = inlined_call_operand.vmem [shape: bf16[9,4,128], index: 1, kind: input, shape index: {}]
  %s2 = inlined_call_operand.vmem [shape: bf16[2,16,16,128], index: 2, kind: output, shape index: {0}]
  %s3 = inlined_call_operand.vmem [shape: f32[1,128], index: 3, kind: output, shape index: {1}]
  %s4 = inlined_call_operand.vmem [shape: f32[1,128], index: 4, kind: output, shape index: {2}]
  %5 = xla_tuple %s2, %s3, %s4
  %s6 = sld [smem:[#allocation0]]
  $region61: #{conv_block_forward.2} parent=0
    _
  %s8 = ssub.s32 1, %s6
  %s9 = scalar_select 0, %s8, %s6
  loop: start=0, step=1, limit=4
  $region2: #{conv_block_forward.2} parent=0 // loop_pre_header
    _
  $region3: #{conv_block_forward.2} parent=0 // loop_header
    %s11 = sphi 0, %s15
    %p12 = scmp.ge.s32.totalorder %s11, 4
    %s18 = sphi 0, %s37
    %s19 = sphi 0, %s33
    %s20 = sphi 0, %s29
    %s21 = sphi 0, %s18
    %s22 = sphi 0, %s19
    %s23 = sphi 0, %s20
    %s24 = sphi 0, %s21
    %s25 = sphi 0, %s22
    %s26 = sphi 0, %s23
    %s40 = sphi 0, %s42
    %s43 = sphi 0, %s40
    %s44 = sphi 0, %s43
    %s60 = sphi 0, %s44
    %s66 = sphi 0, %s68
    %s69 = sphi 0, %s66
    %s70 = sphi 0, %s69
    %s86 = sphi 0, %s70
    %s96 = sphi 0, %s98
    %s99 = sphi 0, %s96
    %s100 = sphi 0, %s99
    %s116 = sphi 0, %s100
    %s122 = sphi 0, %s124
    %s125 = sphi 0, %s122
    %s126 = sphi 0, %s125
    %s142 = sphi 0, %s126
    %s148 = sphi 0, %s150
    %s151 = sphi 0, %s148
    %s152 = sphi 0, %s151
    %s168 = sphi 0, %s152
  $region4: #{conv_block_forward.2} parent=0 // loop_header_branch
    %14 = sbr.rel (%p12) target = $region8
  $region5: #{conv_block_forward.2} parent=0 // loop_body
    %s16 = ssub.s32 %s11, 1
    %s17 = ssub.s32 %s11, 2
    %s27 = sadd.s32 1, %s20
    %p28 = scmp.ge.s32.totalorder %s27, 1
    %s29 = scalar_select %p28, 0, %s27
    %s30 = sadd.s32 1, %s19
    %s31 = scalar_select %p28, %s30, %s19
    %p32 = scmp.ge.s32.totalorder %s31, 2
    %s33 = scalar_select %p32, 0, %s31
    %s34 = sadd.s32 1, %s18
    %s35 = scalar_select %p32, %s34, %s18
    %p36 = scmp.ge.s32.totalorder %s35, 1
    %s37 = scalar_select %p36, 0, %s35
    %s38 = ssub.s32 %s19, %s33
    %p39 = scmp.eq.s32.totalorder %s38, 0
    %s41 = sadd.s32 %s40, 1
    %s42 = scalar_select %p39, %s40, %s41
    %p45 = pneg %p39
    %p46 = scmp.eq.s32.totalorder %s11, 1
    %p47 = por %p45, %p46
    %p48 = scmp.ne.s32.totalorder %s40, %s43
    %p49 = scmp.eq.s32.totalorder %s11, 0
    %p50 = por %p48, %p49
    %p51 = scmp.ne.s32.totalorder %s40, %s43
    %p52 = scmp.eq.s32.totalorder %s16, 1
    %p53 = por %p51, %p52
    %p54 = scmp.ne.s32.totalorder %s43, %s44
    %p55 = scmp.eq.s32.totalorder %s16, 0
    %p56 = por %p54, %p55
    %p57 = scmp.ne.s32.totalorder %s43, %s44
    %p58 = scmp.eq.s32.totalorder %s17, 1
    %p59 = por %p57, %p58
    %p61 = scmp.ne.s32.totalorder %s44, %s60
    %p62 = scmp.eq.s32.totalorder %s17, 0
    %p63 = por %p61, %p62
    %s64 = ssub.s32 %s18, %s37
    %p65 = scmp.eq.s32.totalorder %s64, 0
    %s67 = sadd.s32 %s66, 1
    %s68 = scalar_select %p65, %s66, %s67
    %p71 = pneg %p65
    %p72 = scmp.eq.s32.totalorder %s11, 1
    %p73 = por %p71, %p72
    %p74 = scmp.ne.s32.totalorder %s66, %s69
    %p75 = scmp.eq.s32.totalorder %s11, 0
    %p76 = por %p74, %p75
    %p77 = scmp.ne.s32.totalorder %s66, %s69
    %p78 = scmp.eq.s32.totalorder %s16, 1
    %p79 = por %p77, %p78
    %p80 = scmp.ne.s32.totalorder %s69, %s70
    %p81 = scmp.eq.s32.totalorder %s16, 0
    %p82 = por %p80, %p81
    %p83 = scmp.ne.s32.totalorder %s69, %s70
    %p84 = scmp.eq.s32.totalorder %s17, 1
    %p85 = por %p83, %p84
    %p87 = scmp.ne.s32.totalorder %s70, %s86
    %p88 = scmp.eq.s32.totalorder %s17, 0
    %p89 = por %p87, %p88
    %s90 = ssub.s32 %s19, %s33
    %s91 = ssub.s32 %s20, %s29
    %s92 = sor.u32 %s90, %s91
    %s93 = ssub.s32 %s18, %s37
    %s94 = sor.u32 %s92, %s93
    %p95 = scmp.eq.s32.totalorder %s94, 0
    %s97 = sadd.s32 %s96, 1
    %s98 = scalar_select %p95, %s96, %s97
    %p101 = pneg %p95
    %p102 = scmp.eq.s32.totalorder %s11, 1
    %p103 = por %p101, %p102
    %p104 = scmp.ne.s32.totalorder %s96, %s99
    %p105 = scmp.eq.s32.totalorder %s11, 0
    %p106 = por %p104, %p105
    %p107 = scmp.ne.s32.totalorder %s96, %s99
    %p108 = scmp.eq.s32.totalorder %s16, 1
    %p109 = por %p107, %p108
    %p110 = scmp.ne.s32.totalorder %s99, %s100
    %p111 = scmp.eq.s32.totalorder %s16, 0
    %p112 = por %p110, %p111
    %p113 = scmp.ne.s32.totalorder %s99, %s100
    %p114 = scmp.eq.s32.totalorder %s17, 1
    %p115 = por %p113, %p114
    %p117 = scmp.ne.s32.totalorder %s100, %s116
    %p118 = scmp.eq.s32.totalorder %s17, 0
    %p119 = por %p117, %p118
    %s120 = ssub.s32 %s18, %s37
    %p121 = scmp.eq.s32.totalorder %s120, 0
    %s123 = sadd.s32 %s122, 1
    %s124 = scalar_select %p121, %s122, %s123
    %p127 = pneg %p121
    %p128 = scmp.eq.s32.totalorder %s11, 1
    %p129 = por %p127, %p128
    %p130 = scmp.ne.s32.totalorder %s122, %s125
    %p131 = scmp.eq.s32.totalorder %s11, 0
    %p132 = por %p130, %p131
    %p133 = scmp.ne.s32.totalorder %s122, %s125
    %p134 = scmp.eq.s32.totalorder %s16, 1
    %p135 = por %p133, %p134
    %p136 = scmp.ne.s32.totalorder %s125, %s126
    %p137 = scmp.eq.s32.totalorder %s16, 0
    %p138 = por %p136, %p137
    %p139 = scmp.ne.s32.totalorder %s125, %s126
    %p140 = scmp.eq.s32.totalorder %s17, 1
    %p141 = por %p139, %p140
    %p143 = scmp.ne.s32.totalorder %s126, %s142
    %p144 = scmp.eq.s32.totalorder %s17, 0
    %p145 = por %p143, %p144
    %s146 = ssub.s32 %s18, %s37
    %p147 = scmp.eq.s32.totalorder %s146, 0
    %s149 = sadd.s32 %s148, 1
    %s150 = scalar_select %p147, %s148, %s149
    %p153 = pneg %p147
    %p154 = scmp.eq.s32.totalorder %s11, 1
    %p155 = por %p153, %p154
    %p156 = scmp.ne.s32.totalorder %s148, %s151
    %p157 = scmp.eq.s32.totalorder %s11, 0
    %p158 = por %p156, %p157
    %p159 = scmp.ne.s32.totalorder %s148, %s151
    %p160 = scmp.eq.s32.totalorder %s16, 1
    %p161 = por %p159, %p160
    %p162 = scmp.ne.s32.totalorder %s151, %s152
    %p163 = scmp.eq.s32.totalorder %s16, 0
    %p164 = por %p162, %p163
    %p165 = scmp.ne.s32.totalorder %s151, %s152
    %p166 = scmp.eq.s32.totalorder %s17, 1
    %p167 = por %p165, %p166
    %p169 = scmp.ne.s32.totalorder %s152, %s168
    %p170 = scmp.eq.s32.totalorder %s17, 0
    %p171 = por %p169, %p170
    %p172 = scmp.le.s32.totalorder 1, %s11
    %p173 = scmp.lt.s32.totalorder %s11, 3
    %p174 = pnand %p172, %p173
    %p175 = pneg %p174
    // Predicated region
    $region9: #{conv_block_forward.2} parent=5 // pred_check
      _
    $region10: #{conv_block_forward.2} parent=5 // pred_check_branch
      %177 = sbr.rel (%p174) target = $region12
    $region11: #{conv_block_forward.2} parent=5 // pred_region
      %s178 = ssub.s32 %s11, 1
      // Predicated region
      $region13: #{conv_block_forward.2} parent=11 // pred_check
        %p179 = pneg %p82
      $region14: #{conv_block_forward.2} parent=11 // pred_check_branch
        %181 = sbr.rel (%p179) target = $region16
      $region15: #{conv_block_forward.2} parent=11 // pred_region
        %p182 = scmp.lt.s32.totalorder %s21, 0
        %s183 = scalar_select %p182, %s21, 0
        %s184 = smul.addr %s183, 2
        %s185 = scalar_lea.vmem %s1, %s184
      $region16: #{conv_block_forward.2} parent=11 // pred_fallthru
        _
    $region12: #{conv_block_forward.2} parent=5 // pred_fallthru
      _
    %p186 = scmp.lt.s32.totalorder %s11, 2
    // Predicated region
    $region17: #{conv_block_forward.2} parent=5 // pred_check
      %p187 = pneg %p186
    $region18: #{conv_block_forward.2} parent=5 // pred_check_branch
      %189 = sbr.rel (%p187) target = $region20
    $region19: #{conv_block_forward.2} parent=5 // pred_region
      // Predicated region
      $region21: #{conv_block_forward.2} parent=19 // pred_check
        %p190 = pneg %p50
      $region22: #{conv_block_forward.2} parent=19 // pred_check_branch
        %192 = sbr.rel (%p190) target = $region24
      $region23: #{conv_block_forward.2} parent=19 // pred_region
        %p193 = scmp.lt.s32.totalorder %s19, 1
        %s194 = scalar_select %p193, %s19, 1
        %s195 = smul.addr %s194, 54
        %s196 = smul.addr %s195, 4
        %s197 = scalar_lea.vmem %s0, %s196
      $region24: #{conv_block_forward.2} parent=19 // pred_fallthru
        _
    $region20: #{conv_block_forward.2} parent=5 // pred_fallthru
      _
    %p198 = scmp.le.s32.totalorder 1, %s11
    %p199 = scmp.lt.s32.totalorder %s11, 3
    %p200 = pnand %p198, %p199
    %p201 = pneg %p200
    // Predicated region
    $region25: #{conv_block_forward.2} parent=5 // pred_check
      _
    $region26: #{conv_block_forward.2} parent=5 // pred_check_branch
      %203 = sbr.rel (%p200) target = $region28
    $region27: #{conv_block_forward.2} parent=5 // pred_region
      %s204 = ssub.s32 %s11, 1
      %p205 = scmp.lt.s32.totalorder %s22, 1
      %s206 = scalar_select %p205, %s22, 1
      %s207 = smul.addr %s206, 54
      %s208 = smul.addr %s207, 4
      %s209 = scalar_lea.vmem %s0, %s208
      %p210 = pneg %p56
      %p211 = pneg %p53
      %p212 = scmp.lt.s32.totalorder %s21, 0
      %s213 = scalar_select %p212, %s21, 0
      %s214 = smul.addr %s213, 2
      %s215 = scalar_lea.vmem %s1, %s214
      %p216 = pneg %p82
      %p217 = pneg %p79
      %p218 = pneg %p112
      %p219 = pneg %p109
      %s220 = smul.u32 16, %s23
      %p221 = scmp.lt.s32.totalorder %s22, 1
      %s222 = scalar_select %p221, %s22, 1
      %p223 = scmp.lt.s32.totalorder %s220, 15
      %s224 = scalar_select %p223, %s220, 15
      %p225 = scmp.lt.s32.totalorder %s21, 0
      %s226 = scalar_select %p225, %s21, 0
      %s227 = smul.addr %s224, 2
      %s228 = sadd.s32 %s226, %s227
      %s229 = smul.addr %s222, 32
      %s230 = sadd.s32 %s228, %s229
      %s231 = smul.addr %s230, 4
      %s232 = scalar_lea.vmem %s2, %s231
      %p233 = pneg %p138
      %p234 = pneg %p135
      %p235 = scmp.lt.s32.totalorder %s21, 0
      %s236 = scalar_select %p235, %s21, 0
      %s237 = scalar_lea.vmem %s3, %s236
      %p238 = pneg %p164
      %p239 = pneg %p161
      %p240 = scmp.lt.s32.totalorder %s21, 0
      %s241 = scalar_select %p240, %s21, 0
      %s242 = scalar_lea.vmem %s4, %s241
      %p243 = scmp.lt.s32.totalorder %s22, 1
      %s244 = scalar_select %p243, %s22, 1
      %s245 = smul.addr %s244, 54
      %s246 = smul.addr %s245, 4
      %s247 = scalar_lea.vmem %s0, %s246
      %p248 = scmp.lt.s32.totalorder %s21, 0
      %s249 = scalar_select %p248, %s21, 0
      %s250 = smul.addr %s249, 2
      %s251 = scalar_lea.vmem %s1, %s250
      %s252 = smul.u32 16, %s23
      %p253 = scmp.lt.s32.totalorder %s22, 1
      %s254 = scalar_select %p253, %s22, 1
      %p255 = scmp.lt.s32.totalorder %s252, 15
      %s256 = scalar_select %p255, %s252, 15
      %p257 = scmp.lt.s32.totalorder %s21, 0
      %s258 = scalar_select %p257, %s21, 0
      %s259 = smul.addr %s256, 2
      %s260 = sadd.s32 %s258, %s259
      %s261 = smul.addr %s254, 32
      %s262 = sadd.s32 %s260, %s261
      %s263 = smul.addr %s262, 4
      %s264 = scalar_lea.vmem %s2, %s263
      %s265 = smul.u32 16, %s23
      %p266 = scmp.lt.s32.totalorder %s21, 0
      %s267 = scalar_select %p266, %s21, 0
      %s268 = scalar_lea.vmem %s3, %s267
      %p269 = scmp.lt.s32.totalorder %s21, 0
      %s270 = scalar_select %p269, %s21, 0
      %s271 = scalar_lea.vmem %s4, %s270
      %p273 = scmp.eq.s32.totalorder %s22, 0
      %p274 = scmp.eq.s32.totalorder %s23, 0
      %p275 = pnand %p273, %p274
      %p276 = pneg %p275
      // Predicated region
      $region29: #{conv_block_forward.2} parent=27 // pred_check
        _
      $region30: #{conv_block_forward.2} parent=27 // pred_check_branch
        %278 = sbr.rel (%p275) target = $region32
      $region31: #{conv_block_forward.2} parent=27 // pred_region
        %279 = vst [vmem:[%s268] sm:$0x1] 0.0
        %280 = vst [vmem:[%s271] sm:$0x1] 0.0
      $region32: #{conv_block_forward.2} parent=27 // pred_fallthru
        _
      %s281 = smul.u32 %s23, 16
      %s282 = smul.u32 %s281, 3
      %s283 = smul.addr %s282, 4
      %s284 = scalar_lea.vmem %s247, %s283
      %v285 = vld [vmem:[%s284] sm:$0xf]
      %v286 = vld [vmem:[%s284 + $0x4] sm:$0xf]
      %v287 = vld [vmem:[%s284 + $0xc] sm:$0xf]
      %v288 = vld [vmem:[%s284 + $0x10] sm:$0xf]
      %v289 = vld [vmem:[%s284 + $0x18] sm:$0xf]
      %v290 = vld [vmem:[%s284 + $0x1c] sm:$0xf]
      %v291 = vld [vmem:[%s284 + $0x24] sm:$0xf]
      %v292 = vld [vmem:[%s284 + $0x28] sm:$0xf]
      %v293 = vld [vmem:[%s284 + $0x30] sm:$0xf]
      %v294 = vld [vmem:[%s284 + $0x34] sm:$0xf]
      %v295 = vld [vmem:[%s284 + $0x3c] sm:$0xf]
      %v296 = vld [vmem:[%s284 + $0x40] sm:$0xf]
      %v297 = vld [vmem:[%s284 + $0x48] sm:$0xf]
      %v298 = vld [vmem:[%s284 + $0x4c] sm:$0xf]
      %v299 = vld [vmem:[%s284 + $0x54] sm:$0xf]
      %v300 = vld [vmem:[%s284 + $0x58] sm:$0xf]
      %v301 = vld [vmem:[%s284 + $0x60] sm:$0xf]
      %v302 = vld [vmem:[%s284 + $0x64] sm:$0xf]
      %v303 = vld [vmem:[%s284 + $0x6c] sm:$0xf]
      %v304 = vld [vmem:[%s284 + $0x70] sm:$0xf]
      %v305 = vld [vmem:[%s284 + $0x78] sm:$0xf]
      %v306 = vld [vmem:[%s284 + $0x7c] sm:$0xf]
      %v307 = vld [vmem:[%s284 + $0x84] sm:$0xf]
      %v308 = vld [vmem:[%s284 + $0x88] sm:$0xf]
      %v309 = vld [vmem:[%s284 + $0x90] sm:$0xf]
      %v310 = vld [vmem:[%s284 + $0x94] sm:$0xf]
      %v311 = vld [vmem:[%s284 + $0x9c] sm:$0xf]
      %v312 = vld [vmem:[%s284 + $0xa0] sm:$0xf]
      %v313 = vld [vmem:[%s284 + $0xa8] sm:$0xf]
      %v314 = vld [vmem:[%s284 + $0xac] sm:$0xf]
      %v315 = vld [vmem:[%s284 + $0xb4] sm:$0xf]
      %v316 = vld [vmem:[%s284 + $0xb8] sm:$0xf]
      %v317 = vld [vmem:[%s251] sm:$0x3]
      %v318 = vld [vmem:[%s284 + $0x8] sm:$0x1]
      %v319 = vld [vmem:[%s284 + $0x14] sm:$0x1]
      %v320 = vld [vmem:[%s284 + $0x20] sm:$0x1]
      %v321 = vld [vmem:[%s284 + $0x2c] sm:$0x1]
      %v322 = vld [vmem:[%s284 + $0x38] sm:$0x1]
      %v323 = vld [vmem:[%s284 + $0x44] sm:$0x1]
      %v324 = vld [vmem:[%s284 + $0x50] sm:$0x1]
      %v325 = vld [vmem:[%s284 + $0x5c] sm:$0x1]
      %v326 = vld [vmem:[%s284 + $0x68] sm:$0x1]
      %v327 = vld [vmem:[%s284 + $0x74] sm:$0x1]
      %v328 = vld [vmem:[%s284 + $0x80] sm:$0x1]
      %v329 = vld [vmem:[%s284 + $0x8c] sm:$0x1]
      %v330 = vld [vmem:[%s284 + $0x98] sm:$0x1]
      %v331 = vld [vmem:[%s284 + $0xa4] sm:$0x1]
      %v332 = vld [vmem:[%s284 + $0xb0] sm:$0x1]
      %v333 = vld [vmem:[%s284 + $0xbc] sm:$0x1]
      %vm334 = vsmask.f32 3328
      %vm335 = vsmask.f32 7440
      %vm336 = vmor %vm334, %vm335
      %v338 = vshrl.u32 %v285, 16
      %v340 = vrot.slane %v338, 4
      %v341 = vshll.u32 %v285, 16
      %v343 = vrot.slane %v341, 5
      %v344 = vor.u32 %v340, %v343
      %v345 = vrot.slane %v344, 4
      %v347 = vshll.u32 %v286, 16
      %v349 = vrot.slane %v347, 5
      %v350 = vsel %vm336, %v345, %v349
      %v351 = vshrl.u32 %v286, 16
      %v353 = vrot.slane %v351, 4
      %v354 = vor.u32 %v353, %v349
      %v355 = vrot.slane %v354, 4
      %v357 = vshll.u32 %v318, 16
      %v359 = vrot.slane %v357, 5
      %v360 = vsel %vm336, %v355, %v359
      %v362 = vshrl.u32 %v287, 16
      %v364 = vrot.slane %v362, 4
      %v365 = vshll.u32 %v287, 16
      %v367 = vrot.slane %v365, 5
      %v368 = vor.u32 %v364, %v367
      %v369 = vrot.slane %v368, 4
      %v371 = vshll.u32 %v288, 16
      %v373 = vrot.slane %v371, 5
      %v374 = vsel %vm336, %v369, %v373
      %v375 = vshrl.u32 %v288, 16
      %v377 = vrot.slane %v375, 4
      %v378 = vor.u32 %v377, %v373
      %v379 = vrot.slane %v378, 4
      %v381 = vshll.u32 %v319, 16
      %v383 = vrot.slane %v381, 5
      %v384 = vsel %vm336, %v379, %v383
      %v386 = vshrl.u32 %v289, 16
      %v388 = vrot.slane %v386, 4
      %v389 = vshll.u32 %v289, 16
      %v391 = vrot.slane %v389, 5
      %v392 = vor.u32 %v388, %v391
      %v393 = vrot.slane %v392, 4
      %v395 = vshll.u32 %v290, 16
      %v397 = vrot.slane %v395, 5
      %v398 = vsel %vm336, %v393, %v397
      %v399 = vshrl.u32 %v290, 16
      %v401 = vrot.slane %v399, 4
      %v402 = vor.u32 %v401, %v397
      %v403 = vrot.slane %v402, 4
      %v405 = vshll.u32 %v320, 16
      %v407 = vrot.slane %v405, 5
      %v408 = vsel %vm336, %v403, %v407
      %v410 = vshrl.u32 %v291, 16
      %v412 = vrot.slane %v410, 4
      %v413 = vshll.u32 %v291, 16
      %v415 = vrot.slane %v413, 5
      %v416 = vor.u32 %v412, %v415
      %v417 = vrot.slane %v416, 4
      %v419 = vshll.u32 %v292, 16
      %v421 = vrot.slane %v419, 5
      %v422 = vsel %vm336, %v417, %v421
      %v423 = vshrl.u32 %v292, 16
      %v425 = vrot.slane %v423, 4
      %v426 = vor.u32 %v425, %v421
      %v427 = vrot.slane %v426, 4
      %v429 = vshll.u32 %v321, 16
      %v431 = vrot.slane %v429, 5
      %v432 = vsel %vm336, %v427, %v431
      %v434 = vshrl.u32 %v293, 16
      %v436 = vrot.slane %v434, 4
      %v437 = vshll.u32 %v293, 16
      %v439 = vrot.slane %v437, 5
      %v440 = vor.u32 %v436, %v439
      %v441 = vrot.slane %v440, 4
      %v443 = vshll.u32 %v294, 16
      %v445 = vrot.slane %v443, 5
      %v446 = vsel %vm336, %v441, %v445
      %v447 = vshrl.u32 %v294, 16
      %v449 = vrot.slane %v447, 4
      %v450 = vor.u32 %v449, %v445
      %v451 = vrot.slane %v450, 4
      %v453 = vshll.u32 %v322, 16
      %v455 = vrot.slane %v453, 5
      %v456 = vsel %vm336, %v451, %v455
      %v458 = vshrl.u32 %v295, 16
      %v460 = vrot.slane %v458, 4
      %v461 = vshll.u32 %v295, 16
      %v463 = vrot.slane %v461, 5
      %v464 = vor.u32 %v460, %v463
      %v465 = vrot.slane %v464, 4
      %v467 = vshll.u32 %v296, 16
      %v469 = vrot.slane %v467, 5
      %v470 = vsel %vm336, %v465, %v469
      %v471 = vshrl.u32 %v296, 16
      %v473 = vrot.slane %v471, 4
      %v474 = vor.u32 %v473, %v469
      %v475 = vrot.slane %v474, 4
      %v477 = vshll.u32 %v323, 16
      %v479 = vrot.slane %v477, 5
      %v480 = vsel %vm336, %v475, %v479
      %v482 = vshrl.u32 %v297, 16
      %v484 = vrot.slane %v482, 4
      %v485 = vshll.u32 %v297, 16
      %v487 = vrot.slane %v485, 5
      %v488 = vor.u32 %v484, %v487
      %v489 = vrot.slane %v488, 4
      %v491 = vshll.u32 %v298, 16
      %v493 = vrot.slane %v491, 5
      %v494 = vsel %vm336, %v489, %v493
      %v495 = vshrl.u32 %v298, 16
      %v497 = vrot.slane %v495, 4
      %v498 = vor.u32 %v497, %v493
      %v499 = vrot.slane %v498, 4
      %v501 = vshll.u32 %v324, 16
      %v503 = vrot.slane %v501, 5
      %v504 = vsel %vm336, %v499, %v503
      %v506 = vshrl.u32 %v299, 16
      %v508 = vrot.slane %v506, 4
      %v509 = vshll.u32 %v299, 16
      %v511 = vrot.slane %v509, 5
      %v512 = vor.u32 %v508, %v511
      %v513 = vrot.slane %v512, 4
      %v515 = vshll.u32 %v300, 16
      %v517 = vrot.slane %v515, 5
      %v518 = vsel %vm336, %v513, %v517
      %v519 = vshrl.u32 %v300, 16
      %v521 = vrot.slane %v519, 4
      %v522 = vor.u32 %v521, %v517
      %v523 = vrot.slane %v522, 4
      %v525 = vshll.u32 %v325, 16
      %v527 = vrot.slane %v525, 5
      %v528 = vsel %vm336, %v523, %v527
      %v530 = vshrl.u32 %v301, 16
      %v532 = vrot.slane %v530, 4
      %v533 = vshll.u32 %v301, 16
      %v535 = vrot.slane %v533, 5
      %v536 = vor.u32 %v532, %v535
      %v537 = vrot.slane %v536, 4
      %v539 = vshll.u32 %v302, 16
      %v541 = vrot.slane %v539, 5
      %v542 = vsel %vm336, %v537, %v541
      %v543 = vshrl.u32 %v302, 16
      %v545 = vrot.slane %v543, 4
      %v546 = vor.u32 %v545, %v541
      %v547 = vrot.slane %v546, 4
      %v549 = vshll.u32 %v326, 16
      %v551 = vrot.slane %v549, 5
      %v552 = vsel %vm336, %v547, %v551
      %v554 = vshrl.u32 %v303, 16
      %v556 = vrot.slane %v554, 4
      %v557 = vshll.u32 %v303, 16
      %v559 = vrot.slane %v557, 5
      %v560 = vor.u32 %v556, %v559
      %v561 = vrot.slane %v560, 4
      %v563 = vshll.u32 %v304, 16
      %v565 = vrot.slane %v563, 5
      %v566 = vsel %vm336, %v561, %v565
      %v567 = vshrl.u32 %v304, 16
      %v569 = vrot.slane %v567, 4
      %v570 = vor.u32 %v569, %v565
      %v571 = vrot.slane %v570, 4
      %v573 = vshll.u32 %v327, 16
      %v575 = vrot.slane %v573, 5
      %v576 = vsel %vm336, %v571, %v575
      %v578 = vshrl.u32 %v305, 16
      %v580 = vrot.slane %v578, 4
      %v581 = vshll.u32 %v305, 16
      %v583 = vrot.slane %v581, 5
      %v584 = vor.u32 %v580, %v583
      %v585 = vrot.slane %v584, 4
      %v587 = vshll.u32 %v306, 16
      %v589 = vrot.slane %v587, 5
      %v590 = vsel %vm336, %v585, %v589
      %v591 = vshrl.u32 %v306, 16
      %v593 = vrot.slane %v591, 4
      %v594 = vor.u32 %v593, %v589
      %v595 = vrot.slane %v594, 4
      %v597 = vshll.u32 %v328, 16
      %v599 = vrot.slane %v597, 5
      %v600 = vsel %vm336, %v595, %v599
      %v602 = vshrl.u32 %v307, 16
      %v604 = vrot.slane %v602, 4
      %v605 = vshll.u32 %v307, 16
      %v607 = vrot.slane %v605, 5
      %v608 = vor.u32 %v604, %v607
      %v609 = vrot.slane %v608, 4
      %v611 = vshll.u32 %v308, 16
      %v613 = vrot.slane %v611, 5
      %v614 = vsel %vm336, %v609, %v613
      %v615 = vshrl.u32 %v308, 16
      %v617 = vrot.slane %v615, 4
      %v618 = vor.u32 %v617, %v613
      %v619 = vrot.slane %v618, 4
      %v621 = vshll.u32 %v329, 16
      %v623 = vrot.slane %v621, 5
      %v624 = vsel %vm336, %v619, %v623
      %v626 = vshrl.u32 %v309, 16
      %v628 = vrot.slane %v626, 4
      %v629 = vshll.u32 %v309, 16
      %v631 = vrot.slane %v629, 5
      %v632 = vor.u32 %v628, %v631
      %v633 = vrot.slane %v632, 4
      %v635 = vshll.u32 %v310, 16
      %v637 = vrot.slane %v635, 5
      %v638 = vsel %vm336, %v633, %v637
      %v639 = vshrl.u32 %v310, 16
      %v641 = vrot.slane %v639, 4
      %v642 = vor.u32 %v641, %v637
      %v643 = vrot.slane %v642, 4
      %v645 = vshll.u32 %v330, 16
      %v647 = vrot.slane %v645, 5
      %v648 = vsel %vm336, %v643, %v647
      %v650 = vshrl.u32 %v311, 16
      %v652 = vrot.slane %v650, 4
      %v653 = vshll.u32 %v311, 16
      %v655 = vrot.slane %v653, 5
      %v656 = vor.u32 %v652, %v655
      %v657 = vrot.slane %v656, 4
      %v659 = vshll.u32 %v312, 16
      %v661 = vrot.slane %v659, 5
      %v662 = vsel %vm336, %v657, %v661
      %v663 = vshrl.u32 %v312, 16
      %v665 = vrot.slane %v663, 4
      %v666 = vor.u32 %v665, %v661
      %v667 = vrot.slane %v666, 4
      %v669 = vshll.u32 %v331, 16
      %v671 = vrot.slane %v669, 5
      %v672 = vsel %vm336, %v667, %v671
      %v674 = vshrl.u32 %v313, 16
      %v676 = vrot.slane %v674, 4
      %v677 = vshll.u32 %v313, 16
      %v679 = vrot.slane %v677, 5
      %v680 = vor.u32 %v676, %v679
      %v681 = vrot.slane %v680, 4
      %v683 = vshll.u32 %v314, 16
      %v685 = vrot.slane %v683, 5
      %v686 = vsel %vm336, %v681, %v685
      %v687 = vshrl.u32 %v314, 16
      %v689 = vrot.slane %v687, 4
      %v690 = vor.u32 %v689, %v685
      %v691 = vrot.slane %v690, 4
      %v693 = vshll.u32 %v332, 16
      %v695 = vrot.slane %v693, 5
      %v696 = vsel %vm336, %v691, %v695
      %v698 = vshrl.u32 %v315, 16
      %v700 = vrot.slane %v698, 4
      %v701 = vshll.u32 %v315, 16
      %v703 = vrot.slane %v701, 5
      %v704 = vor.u32 %v700, %v703
      %v705 = vrot.slane %v704, 4
      %v707 = vshll.u32 %v316, 16
      %v709 = vrot.slane %v707, 5
      %v710 = vsel %vm336, %v705, %v709
      %v711 = vshrl.u32 %v316, 16
      %v713 = vrot.slane %v711, 4
      %v714 = vor.u32 %v713, %v709
      %v715 = vrot.slane %v714, 4
      %v717 = vshll.u32 %v333, 16
      %v719 = vrot.slane %v717, 5
      %v720 = vsel %vm336, %v715, %v719
      %s721 = scalar_lea.vmem %s251, 2
      %v722 = vld [vmem:[%s721] sm:$0x3]
      %v723 = vunpack.c.l.b16 %v350
      %v724 = vunpack.c.l.b16 %v360
      %v725 = vunpack.c.l.b16 %v374
      %v726 = vunpack.c.l.b16 %v384
      %v727 = vunpack.c.l.b16 %v398
      %v728 = vunpack.c.l.b16 %v408
      %v729 = vunpack.c.l.b16 %v422
      %v730 = vunpack.c.l.b16 %v432
      %v731 = vunpack.c.l.b16 %v446
      %v732 = vunpack.c.l.b16 %v456
      %v733 = vunpack.c.l.b16 %v470
      %v734 = vunpack.c.l.b16 %v480
      %v735 = vunpack.c.l.b16 %v494
      %v736 = vunpack.c.l.b16 %v504
      %v737 = vunpack.c.l.b16 %v518
      %v738 = vunpack.c.l.b16 %v528
      %v739 = vunpack.c.l.b16 %v542
      %v740 = vunpack.c.l.b16 %v552
      %v741 = vunpack.c.l.b16 %v566
      %v742 = vunpack.c.l.b16 %v576
      %v743 = vunpack.c.l.b16 %v590
      %v744 = vunpack.c.l.b16 %v600
      %v745 = vunpack.c.l.b16 %v614
      %v746 = vunpack.c.l.b16 %v624
      %v747 = vunpack.c.l.b16 %v638
      %v748 = vunpack.c.l.b16 %v648
      %v749 = vunpack.c.l.b16 %v662
      %v750 = vunpack.c.l.b16 %v672
      %v751 = vunpack.c.l.b16 %v686
      %v752 = vunpack.c.l.b16 %v696
      %v753 = vunpack.c.l.b16 %v710
      %v754 = vunpack.c.l.b16 %v720
      %v755 = vpack.c.b16 %v724, %v723
      %v756 = vpack.c.b16 %v726, %v725
      %v757 = vpack.c.b16 %v728, %v727
      %v758 = vpack.c.b16 %v730, %v729
      %v759 = vpack.c.b16 %v732, %v731
      %v760 = vpack.c.b16 %v734, %v733
      %v761 = vpack.c.b16 %v736, %v735
      %v762 = vpack.c.b16 %v738, %v737
      %v763 = vpack.c.b16 %v740, %v739
      %v764 = vpack.c.b16 %v742, %v741
      %v765 = vpack.c.b16 %v744, %v743
      %v766 = vpack.c.b16 %v746, %v745
      %v767 = vpack.c.b16 %v748, %v747
      %v768 = vpack.c.b16 %v750, %v749
      %v769 = vpack.c.b16 %v752, %v751
      %v770 = vpack.c.b16 %v754, %v753
      %vm771 = vcmask 31744
      %v773 = vsel %vm771, %v755, 0
      %v776 = vsel %vm771, %v756, 0
      %v779 = vsel %vm771, %v757, 0
      %v782 = vsel %vm771, %v758, 0
      %v785 = vsel %vm771, %v759, 0
      %v788 = vsel %vm771, %v760, 0
      %v791 = vsel %vm771, %v761, 0
      %v794 = vsel %vm771, %v762, 0
      %v797 = vsel %vm771, %v763, 0
      %v800 = vsel %vm771, %v764, 0
      %v803 = vsel %vm771, %v765, 0
      %v806 = vsel %vm771, %v766, 0
      %v809 = vsel %vm771, %v767, 0
      %v812 = vsel %vm771, %v768, 0
      %v815 = vsel %vm771, %v769, 0
      %v818 = vsel %vm771, %v770, 0
      %vm820 = vcmask 1041408
      %v822 = vsel %vm820, %v722, 0
      %824 = vmatprep.subr.bf16.mxu0 0
      %825 = vmatpush1.bf16.msra.mxu0 %v822
      %826 = vmatprep.subr.bf16.mxu0 0
      %827 = vmatpush1.bf16.msra.mxu0 0
      %828 = vmatprep.subr.bf16.mxu0 0
      %829 = vmatpush1.bf16.msra.mxu0 0
      %830 = vmatprep.subr.bf16.mxu0 0
      %831 = vmatpush1.bf16.msra.mxu0 0
      %832 = vmatprep.subr.bf16.mxu0 0
      %833 = vmatpush1.bf16.msra.mxu0 0
      %834 = vmatprep.subr.bf16.mxu0 0
      %835 = vmatpush1.bf16.msra.mxu0 0
      %836 = vmatprep.subr.bf16.mxu0 0
      %837 = vmatpush1.bf16.msra.mxu0 0
      %838 = vmatprep.subr.bf16.mxu0 0
      %839 = vmatpush1.bf16.msra.mxu0 0
      %840 = vmatprep.subr.bf16.mxu0 0
      %841 = vmatpush1.bf16.msra.mxu0 0
      %842 = vmatprep.subr.bf16.mxu0 0
      %843 = vmatpush1.bf16.msra.mxu0 0
      %844 = vmatprep.subr.bf16.mxu0 0
      %845 = vmatpush1.bf16.msra.mxu0 0
      %846 = vmatprep.subr.bf16.mxu0 0
      %847 = vmatpush1.bf16.msra.mxu0 0
      %848 = vmatprep.subr.bf16.mxu0 0
      %849 = vmatpush1.bf16.msra.mxu0 0
      %850 = vmatprep.subr.bf16.mxu0 0
      %851 = vmatpush1.bf16.msra.mxu0 0
      %852 = vmatprep.subr.bf16.mxu0 0
      %853 = vmatpush1.bf16.msra.mxu0 0
      %854 = vmatprep.subr.bf16.mxu0 0
      %855 = vmatpush1.bf16.msra.mxu0 0
      %856 = vmatprep.mubr.bf16.mxu0 0
      %857 = vmatmul.mubr.bf16.gmra.mrb[0].mxu0 %v773
      %v858 = vpop.f32.mrb[0].mxu0
      %v859 = vadd.f32 0.0, %v858
      %v860 = vpop.f32.mrb[0].mxu0
      %v861 = vpop.f32.mrb[0].mxu0
      %v862 = vadd.f32 0.0, %v861
      %v863 = vpop.f32.mrb[0].mxu0
      %864 = vmatprep.mubr.bf16.mxu0 0
      %865 = vmatmul.mubr.bf16.gmra.mrb[0].mxu0 %v776
      %v866 = vpop.f32.mrb[0].mxu0
      %v867 = vadd.f32 0.0, %v866
      %v868 = vpop.f32.mrb[0].mxu0
      %v869 = vpop.f32.mrb[0].mxu0
      %v870 = vadd.f32 0.0, %v869
      %v871 = vpop.f32.mrb[0].mxu0
      %872 = vmatprep.mubr.bf16.mxu0 0
      %873 = vmatmul.mubr.bf16.gmra.mrb[0].mxu0 %v779
      %v874 = vpop.f32.mrb[0].mxu0
      %v875 = vadd.f32 0.0, %v874
      %v876 = vpop.f32.mrb[0].mxu0
      %v877 = vpop.f32.mrb[0].mxu0
      %v878 = vadd.f32 0.0, %v877
      %v879 = vpop.f32.mrb[0].mxu0
      %880 = vmatprep.mubr.bf16.mxu0 0
      %881 = vmatmul.mubr.bf16.gmra.mrb[0].mxu0 %v782
      %v882 = vpop.f32.mrb[0].mxu0
      %v883 = vadd.f32 0.0, %v882
      %v884 = vpop.f32.mrb[0].mxu0
      %v885 = vpop.f32.mrb[0].mxu0
      %v886 = vadd.f32 0.0, %v885
      %v887 = vpop.f32.mrb[0].mxu0
      %888 = vmatprep.mubr.bf16.mxu0 0
      %889 = vmatmul.mubr.bf16.gmra.mrb[0].mxu0 %v785
      %v890 = vpop.f32.mrb[0].mxu0
      %v891 = vadd.f32 0.0, %v890
      %v892 = vpop.f32.mrb[0].mxu0
      %v893 = vpop.f32.mrb[0].mxu0
      %v894 = vadd.f32 0.0, %v893
      %v895 = vpop.f32.mrb[0].mxu0
      %896 = vmatprep.mubr.bf16.mxu0 0
      %897 = vmatmul.mubr.bf16.gmra.mrb[0].mxu0 %v788
      %v898 = vpop.f32.mrb[0].mxu0
      %v899 = vadd.f32 0.0, %v898
      %v900 = vpop.f32.mrb[0].mxu0
      %v901 = vpop.f32.mrb[0].mxu0
      %v902 = vadd.f32 0.0, %v901
      %v903 = vpop.f32.mrb[0].mxu0
      %904 = vmatprep.mubr.bf16.mxu0 0
      %905 = vmatmul.mubr.bf16.gmra.mrb[0].mxu0 %v791
      %v906 = vpop.f32.mrb[0].mxu0
      %v907 = vadd.f32 0.0, %v906
      %v908 = vpop.f32.mrb[0].mxu0
      %v909 = vpop.f32.mrb[0].mxu0
      %v910 = vadd.f32 0.0, %v909
      %v911 = vpop.f32.mrb[0].mxu0
      %912 = vmatprep.mubr.bf16.mxu0 0
      %913 = vmatmul.mubr.bf16.gmra.mrb[0].mxu0 %v794
      %v914 = vpop.f32.mrb[0].mxu0
      %v915 = vadd.f32 0.0, %v914
      %v916 = vpop.f32.mrb[0].mxu0
      %v917 = vpop.f32.mrb[0].mxu0
      %v918 = vadd.f32 0.0, %v917
      %v919 = vpop.f32.mrb[0].mxu0
      %920 = vmatprep.mubr.bf16.mxu0 0
      %921 = vmatmul.mubr.bf16.gmra.mrb[0].mxu0 %v797
      %v922 = vpop.f32.mrb[0].mxu0
      %v923 = vadd.f32 0.0, %v922
      %v924 = vpop.f32.mrb[0].mxu0
      %v925 = vpop.f32.mrb[0].mxu0
      %v926 = vadd.f32 0.0, %v925
      %v927 = vpop.f32.mrb[0].mxu0
      %928 = vmatprep.mubr.bf16.mxu0 0
      %929 = vmatmul.mubr.bf16.gmra.mrb[0].mxu0 %v800
      %v930 = vpop.f32.mrb[0].mxu0
      %v931 = vadd.f32 0.0, %v930
      %v932 = vpop.f32.mrb[0].mxu0
      %v933 = vpop.f32.mrb[0].mxu0
      %v934 = vadd.f32 0.0, %v933
      %v935 = vpop.f32.mrb[0].mxu0
      %936 = vmatprep.mubr.bf16.mxu0 0
      %937 = vmatmul.mubr.bf16.gmra.mrb[0].mxu0 %v803
      %v938 = vpop.f32.mrb[0].mxu0
      %v939 = vadd.f32 0.0, %v938
      %v940 = vpop.f32.mrb[0].mxu0
      %v941 = vpop.f32.mrb[0].mxu0
      %v942 = vadd.f32 0.0, %v941
      %v943 = vpop.f32.mrb[0].mxu0
      %944 = vmatprep.mubr.bf16.mxu0 0
      %945 = vmatmul.mubr.bf16.gmra.mrb[0].mxu0 %v806
      %v946 = vpop.f32.mrb[0].mxu0
      %v947 = vadd.f32 0.0, %v946
      %v948 = vpop.f32.mrb[0].mxu0
      %v949 = vpop.f32.mrb[0].mxu0
      %v950 = vadd.f32 0.0, %v949
      %v951 = vpop.f32.mrb[0].mxu0
      %952 = vmatprep.mubr.bf16.mxu0 0
      %953 = vmatmul.mubr.bf16.gmra.mrb[0].mxu0 %v809
      %v954 = vpop.f32.mrb[0].mxu0
      %v955 = vadd.f32 0.0, %v954
      %v956 = vpop.f32.mrb[0].mxu0
      %v957 = vpop.f32.mrb[0].mxu0
      %v958 = vadd.f32 0.0, %v957
      %v959 = vpop.f32.mrb[0].mxu0
      %960 = vmatprep.mubr.bf16.mxu0 0
      %961 = vmatmul.mubr.bf16.gmra.mrb[0].mxu0 %v812
      %v962 = vpop.f32.mrb[0].mxu0
      %v963 = vadd.f32 0.0, %v962
      %v964 = vpop.f32.mrb[0].mxu0
      %v965 = vpop.f32.mrb[0].mxu0
      %v966 = vadd.f32 0.0, %v965
      %v967 = vpop.f32.mrb[0].mxu0
      %968 = vmatprep.mubr.bf16.mxu0 0
      %969 = vmatmul.mubr.bf16.gmra.mrb[0].mxu0 %v815
      %v970 = vpop.f32.mrb[0].mxu0
      %v971 = vadd.f32 0.0, %v970
      %v972 = vpop.f32.mrb[0].mxu0
      %v973 = vpop.f32.mrb[0].mxu0
      %v974 = vadd.f32 0.0, %v973
      %v975 = vpop.f32.mrb[0].mxu0
      %976 = vmatprep.mubr.bf16.mxu0 0
      %977 = vmatmul.mubr.bf16.gmra.mrb[0].mxu0 %v818
      %v978 = vpop.f32.mrb[0].mxu0
      %v979 = vadd.f32 0.0, %v978
      %v980 = vpop.f32.mrb[0].mxu0
      %v981 = vpop.f32.mrb[0].mxu0
      %v982 = vadd.f32 0.0, %v981
      %v983 = vpop.f32.mrb[0].mxu0
      %984 = vdwg.mxu0
      %v1017 = vunpack.c.l.b16 %v285
      %v1018 = vunpack.c.l.b16 %v286
      %v1019 = vunpack.c.l.b16 %v287
      %v1020 = vunpack.c.l.b16 %v288
      %v1021 = vunpack.c.l.b16 %v289
      %v1022 = vunpack.c.l.b16 %v290
      %v1023 = vunpack.c.l.b16 %v291
      %v1024 = vunpack.c.l.b16 %v292
      %v1025 = vunpack.c.l.b16 %v293
      %v1026 = vunpack.c.l.b16 %v294
      %v1027 = vunpack.c.l.b16 %v295
      %v1028 = vunpack.c.l.b16 %v296
      %v1029 = vunpack.c.l.b16 %v297
      %v1030 = vunpack.c.l.b16 %v298
      %v1031 = vunpack.c.l.b16 %v299
      %v1032 = vunpack.c.l.b16 %v300
      %v1033 = vunpack.c.l.b16 %v301
      %v1034 = vunpack.c.l.b16 %v302
      %v1035 = vunpack.c.l.b16 %v303
      %v1036 = vunpack.c.l.b16 %v304
      %v1037 = vunpack.c.l.b16 %v305
      %v1038 = vunpack.c.l.b16 %v306
      %v1039 = vunpack.c.l.b16 %v307
      %v1040 = vunpack.c.l.b16 %v308
      %v1041 = vunpack.c.l.b16 %v309
      %v1042 = vunpack.c.l.b16 %v310
      %v1043 = vunpack.c.l.b16 %v311
      %v1044 = vunpack.c.l.b16 %v312
      %v1045 = vunpack.c.l.b16 %v313
      %v1046 = vunpack.c.l.b16 %v314
      %v1047 = vunpack.c.l.b16 %v315
      %v1048 = vunpack.c.l.b16 %v316
      %v1049 = vpack.c.b16 %v1018, %v1017
      %v1050 = vpack.c.b16 %v1020, %v1019
      %v1051 = vpack.c.b16 %v1022, %v1021
      %v1052 = vpack.c.b16 %v1024, %v1023
      %v1053 = vpack.c.b16 %v1026, %v1025
      %v1054 = vpack.c.b16 %v1028, %v1027
      %v1055 = vpack.c.b16 %v1030, %v1029
      %v1056 = vpack.c.b16 %v1032, %v1031
      %v1057 = vpack.c.b16 %v1034, %v1033
      %v1058 = vpack.c.b16 %v1036, %v1035
      %v1059 = vpack.c.b16 %v1038, %v1037
      %v1060 = vpack.c.b16 %v1040, %v1039
      %v1061 = vpack.c.b16 %v1042, %v1041
      %v1062 = vpack.c.b16 %v1044, %v1043
      %v1063 = vpack.c.b16 %v1046, %v1045
      %v1064 = vpack.c.b16 %v1048, %v1047
      %v1066 = vsel %vm771, %v1049, 0
      %v1069 = vsel %vm771, %v1050, 0
      %v1072 = vsel %vm771, %v1051, 0
      %v1075 = vsel %vm771, %v1052, 0
      %v1078 = vsel %vm771, %v1053, 0
      %v1081 = vsel %vm771, %v1054, 0
      %v1084 = vsel %vm771, %v1055, 0
      %v1087 = vsel %vm771, %v1056, 0
      %v1090 = vsel %vm771, %v1057, 0
      %v1093 = vsel %vm771, %v1058, 0
      %v1096 = vsel %vm771, %v1059, 0
      %v1099 = vsel %vm771, %v1060, 0
      %v1102 = vsel %vm771, %v1061, 0
      %v1105 = vsel %vm771, %v1062, 0
      %v1108 = vsel %vm771, %v1063, 0
      %v1111 = vsel %vm771, %v1064, 0
      %v1114 = vsel %vm820, %v317, 0
      %1116 = vmatprep.subr.bf16.mxu0 0
      %1117 = vmatpush1.bf16.msra.mxu0 %v1114
      %1118 = vmatprep.subr.bf16.mxu0 0
      %1119 = vmatpush1.bf16.msra.mxu0 0
      %1120 = vmatprep.subr.bf16.mxu0 0
      %1121 = vmatpush1.bf16.msra.mxu0 0
      %1122 = vmatprep.subr.bf16.mxu0 0
      %1123 = vmatpush1.bf16.msra.mxu0 0
      %1124 = vmatprep.subr.bf16.mxu0 0
      %1125 = vmatpush1.bf16.msra.mxu0 0
      %1126 = vmatprep.subr.bf16.mxu0 0
      %1127 = vmatpush1.bf16.msra.mxu0 0
      %1128 = vmatprep.subr.bf16.mxu0 0
      %1129 = vmatpush1.bf16.msra.mxu0 0
      %1130 = vmatprep.subr.bf16.mxu0 0
      %1131 = vmatpush1.bf16.msra.mxu0 0
      %1132 = vmatprep.subr.bf16.mxu0 0
      %1133 = vmatpush1.bf16.msra.mxu0 0
      %1134 = vmatprep.subr.bf16.mxu0 0
      %1135 = vmatpush1.bf16.msra.mxu0 0
      %1136 = vmatprep.subr.bf16.mxu0 0
      %1137 = vmatpush1.bf16.msra.mxu0 0
      %1138 = vmatprep.subr.bf16.mxu0 0
      %1139 = vmatpush1.bf16.msra.mxu0 0
      %1140 = vmatprep.subr.bf16.mxu0 0
      %1141 = vmatpush1.bf16.msra.mxu0 0
      %1142 = vmatprep.subr.bf16.mxu0 0
      %1143 = vmatpush1.bf16.msra.mxu0 0
      %1144 = vmatprep.subr.bf16.mxu0 0
      %1145 = vmatpush1.bf16.msra.mxu0 0
      %1146 = vmatprep.subr.bf16.mxu0 0
      %1147 = vmatpush1.bf16.msra.mxu0 0
      %1148 = vmatprep.mubr.bf16.mxu0 0
      %1149 = vmatmul.mubr.bf16.gmra.mrb[0].mxu0 %v1066
      %v1150 = vpop.f32.mrb[0].mxu0
      %v1151 = vadd.f32 %v859, %v1150
      %v1152 = vpop.f32.mrb[0].mxu0
      %v1153 = vpop.f32.mrb[0].mxu0
      %v1154 = vadd.f32 %v862, %v1153
      %v1155 = vpop.f32.mrb[0].mxu0
      %1156 = vmatprep.mubr.bf16.mxu0 0
      %1157 = vmatmul.mubr.bf16.gmra.mrb[0].mxu0 %v1069
      %v1158 = vpop.f32.mrb[0].mxu0
      %v1159 = vadd.f32 %v867, %v1158
      %v1160 = vpop.f32.mrb[0].mxu0
      %v1161 = vpop.f32.mrb[0].mxu0
      %v1162 = vadd.f32 %v870, %v1161
      %v1163 = vpop.f32.mrb[0].mxu0
      %1164 = vmatprep.mubr.bf16.mxu0 0
      %1165 = vmatmul.mubr.bf16.gmra.mrb[0].mxu0 %v1072
      %v1166 = vpop.f32.mrb[0].mxu0
      %v1167 = vadd.f32 %v875, %v1166
      %v1168 = vpop.f32.mrb[0].mxu0
      %v1169 = vpop.f32.mrb[0].mxu0
      %v1170 = vadd.f32 %v878, %v1169
      %v1171 = vpop.f32.mrb[0].mxu0
      %1172 = vmatprep.mubr.bf16.mxu0 0
      %1173 = vmatmul.mubr.bf16.gmra.mrb[0].mxu0 %v1075
      %v1174 = vpop.f32.mrb[0].mxu0
      %v1175 = vadd.f32 %v883, %v1174
      %v1176 = vpop.f32.mrb[0].mxu0
      %v1177 = vpop.f32.mrb[0].mxu0
      %v1178 = vadd.f32 %v886, %v1177
      %v1179 = vpop.f32.mrb[0].mxu0
      %1180 = vmatprep.mubr.bf16.mxu0 0
      %1181 = vmatmul.mubr.bf16.gmra.mrb[0].mxu0 %v1078
      %v1182 = vpop.f32.mrb[0].mxu0
      %v1183 = vadd.f32 %v891, %v1182
      %v1184 = vpop.f32.mrb[0].mxu0
      %v1185 = vpop.f32.mrb[0].mxu0
      %v1186 = vadd.f32 %v894, %v1185
      %v1187 = vpop.f32.mrb[0].mxu0
      %1188 = vmatprep.mubr.bf16.mxu0 0
      %1189 = vmatmul.mubr.bf16.gmra.mrb[0].mxu0 %v1081
      %v1190 = vpop.f32.mrb[0].mxu0
      %v1191 = vadd.f32 %v899, %v1190
      %v1192 = vpop.f32.mrb[0].mxu0
      %v1193 = vpop.f32.mrb[0].mxu0
      %v1194 = vadd.f32 %v902, %v1193
      %v1195 = vpop.f32.mrb[0].mxu0
      %1196 = vmatprep.mubr.bf16.mxu0 0
      %1197 = vmatmul.mubr.bf16.gmra.mrb[0].mxu0 %v1084
      %v1198 = vpop.f32.mrb[0].mxu0
      %v1199 = vadd.f32 %v907, %v1198
      %v1200 = vpop.f32.mrb[0].mxu0
      %v1201 = vpop.f32.mrb[0].mxu0
      %v1202 = vadd.f32 %v910, %v1201
      %v1203 = vpop.f32.mrb[0].mxu0
      %1204 = vmatprep.mubr.bf16.mxu0 0
      %1205 = vmatmul.mubr.bf16.gmra.mrb[0].mxu0 %v1087
      %v1206 = vpop.f32.mrb[0].mxu0
      %v1207 = vadd.f32 %v915, %v1206
      %v1208 = vpop.f32.mrb[0].mxu0
      %v1209 = vpop.f32.mrb[0].mxu0
      %v1210 = vadd.f32 %v918, %v1209
      %v1211 = vpop.f32.mrb[0].mxu0
      %1212 = vmatprep.mubr.bf16.mxu0 0
      %1213 = vmatmul.mubr.bf16.gmra.mrb[0].mxu0 %v1090
      %v1214 = vpop.f32.mrb[0].mxu0
      %v1215 = vadd.f32 %v923, %v1214
      %v1216 = vpop.f32.mrb[0].mxu0
      %v1217 = vpop.f32.mrb[0].mxu0
      %v1218 = vadd.f32 %v926, %v1217
      %v1219 = vpop.f32.mrb[0].mxu0
      %1220 = vmatprep.mubr.bf16.mxu0 0
      %1221 = vmatmul.mubr.bf16.gmra.mrb[0].mxu0 %v1093
      %v1222 = vpop.f32.mrb[0].mxu0
      %v1223 = vadd.f32 %v931, %v1222
      %v1224 = vpop.f32.mrb[0].mxu0
      %v1225 = vpop.f32.mrb[0].mxu0
      %v1226 = vadd.f32 %v934, %v1225
      %v1227 = vpop.f32.mrb[0].mxu0
      %1228 = vmatprep.mubr.bf16.mxu0 0
      %1229 = vmatmul.mubr.bf16.gmra.mrb[0].mxu0 %v1096
      %v1230 = vpop.f32.mrb[0].mxu0
      %v1231 = vadd.f32 %v939, %v1230
      %v1232 = vpop.f32.mrb[0].mxu0
      %v1233 = vpop.f32.mrb[0].mxu0
      %v1234 = vadd.f32 %v942, %v1233
      %v1235 = vpop.f32.mrb[0].mxu0
      %1236 = vmatprep.mubr.bf16.mxu0 0
      %1237 = vmatmul.mubr.bf16.gmra.mrb[0].mxu0 %v1099
      %v1238 = vpop.f32.mrb[0].mxu0
      %v1239 = vadd.f32 %v947, %v1238
      %v1240 = vpop.f32.mrb[0].mxu0
      %v1241 = vpop.f32.mrb[0].mxu0
      %v1242 = vadd.f32 %v950, %v1241
      %v1243 = vpop.f32.mrb[0].mxu0
      %1244 = vmatprep.mubr.bf16.mxu0 0
      %1245 = vmatmul.mubr.bf16.gmra.mrb[0].mxu0 %v1102
      %v1246 = vpop.f32.mrb[0].mxu0
      %v1247 = vadd.f32 %v955, %v1246
      %v1248 = vpop.f32.mrb[0].mxu0
      %v1249 = vpop.f32.mrb[0].mxu0
      %v1250 = vadd.f32 %v958, %v1249
      %v1251 = vpop.f32.mrb[0].mxu0
      %1252 = vmatprep.mubr.bf16.mxu0 0
      %1253 = vmatmul.mubr.bf16.gmra.mrb[0].mxu0 %v1105
      %v1254 = vpop.f32.mrb[0].mxu0
      %v1255 = vadd.f32 %v963, %v1254
      %v1256 = vpop.f32.mrb[0].mxu0
      %v1257 = vpop.f32.mrb[0].mxu0
      %v1258 = vadd.f32 %v966, %v1257
      %v1259 = vpop.f32.mrb[0].mxu0
      %1260 = vmatprep.mubr.bf16.mxu0 0
      %1261 = vmatmul.mubr.bf16.gmra.mrb[0].mxu0 %v1108
      %v1262 = vpop.f32.mrb[0].mxu0
      %v1263 = vadd.f32 %v971, %v1262
      %v1264 = vpop.f32.mrb[0].mxu0
      %v1265 = vpop.f32.mrb[0].mxu0
      %v1266 = vadd.f32 %v974, %v1265
      %v1267 = vpop.f32.mrb[0].mxu0
      %1268 = vmatprep.mubr.bf16.mxu0 0
      %1269 = vmatmul.mubr.bf16.gmra.mrb[0].mxu0 %v1111
      %v1270 = vpop.f32.mrb[0].mxu0
      %v1271 = vadd.f32 %v979, %v1270
      %v1272 = vpop.f32.mrb[0].mxu0
      %v1273 = vpop.f32.mrb[0].mxu0
      %v1274 = vadd.f32 %v982, %v1273
      %v1275 = vpop.f32.mrb[0].mxu0
      %1276 = vdwg.mxu0
      %v1277 = vld [vmem:[%s284] sm:$0xe]
      %v1278 = vld [vmem:[%s284 + $0xc] sm:$0xe]
      %v1279 = vld [vmem:[%s284 + $0x18] sm:$0xe]
      %v1280 = vld [vmem:[%s284 + $0x24] sm:$0xe]
      %v1281 = vld [vmem:[%s284 + $0x30] sm:$0xe]
      %v1282 = vld [vmem:[%s284 + $0x3c] sm:$0xe]
      %v1283 = vld [vmem:[%s284 + $0x48] sm:$0xe]
      %v1284 = vld [vmem:[%s284 + $0x54] sm:$0xe]
      %v1285 = vld [vmem:[%s284 + $0x60] sm:$0xe]
      %v1286 = vld [vmem:[%s284 + $0x6c] sm:$0xe]
      %v1287 = vld [vmem:[%s284 + $0x78] sm:$0xe]
      %v1288 = vld [vmem:[%s284 + $0x84] sm:$0xe]
      %v1289 = vld [vmem:[%s284 + $0x90] sm:$0xe]
      %v1290 = vld [vmem:[%s284 + $0x9c] sm:$0xe]
      %v1291 = vld [vmem:[%s284 + $0xa8] sm:$0xe]
      %v1292 = vld [vmem:[%s284 + $0xb4] sm:$0xe]
      %vm1325 = vcmask 1042432
      %vm1326 = vcmask 1046532
      %vm1327 = vmor %vm1325, %vm1326
      %v1328 = vrot.slane %v1277, 5
      %v1329 = vrot.slane %v1328, 4
      %v1330 = vrot.slane %v286, 5
      %v1331 = vsel %vm1327, %v1329, %v1330
      %v1332 = vrot.slane %v1330, 4
      %v1333 = vrot.slane %v318, 5
      %v1334 = vsel %vm1327, %v1332, %v1333
      %v1335 = vrot.slane %v1278, 5
      %v1336 = vrot.slane %v1335, 4
      %v1337 = vrot.slane %v288, 5
      %v1338 = vsel %vm1327, %v1336, %v1337
      %v1339 = vrot.slane %v1337, 4
      %v1340 = vrot.slane %v319, 5
      %v1341 = vsel %vm1327, %v1339, %v1340
      %v1342 = vrot.slane %v1279, 5
      %v1343 = vrot.slane %v1342, 4
      %v1344 = vrot.slane %v290, 5
      %v1345 = vsel %vm1327, %v1343, %v1344
      %v1346 = vrot.slane %v1344, 4
      %v1347 = vrot.slane %v320, 5
      %v1348 = vsel %vm1327, %v1346, %v1347
      %v1349 = vrot.slane %v1280, 5
      %v1350 = vrot.slane %v1349, 4
      %v1351 = vrot.slane %v292, 5
      %v1352 = vsel %vm1327, %v1350, %v1351
      %v1353 = vrot.slane %v1351, 4
      %v1354 = vrot.slane %v321, 5
      %v1355 = vsel %vm1327, %v1353, %v1354
      %v1356 = vrot.slane %v1281, 5
      %v1357 = vrot.slane %v1356, 4
      %v1358 = vrot.slane %v294, 5
      %v1359 = vsel %vm1327, %v1357, %v1358
      %v1360 = vrot.slane %v1358, 4
      %v1361 = vrot.slane %v322, 5
      %v1362 = vsel %vm1327, %v1360, %v1361
      %v1363 = vrot.slane %v1282, 5
      %v1364 = vrot.slane %v1363, 4
      %v1365 = vrot.slane %v296, 5
      %v1366 = vsel %vm1327, %v1364, %v1365
      %v1367 = vrot.slane %v1365, 4
      %v1368 = vrot.slane %v323, 5
      %v1369 = vsel %vm1327, %v1367, %v1368
      %v1370 = vrot.slane %v1283, 5
      %v1371 = vrot.slane %v1370, 4
      %v1372 = vrot.slane %v298, 5
      %v1373 = vsel %vm1327, %v1371, %v1372
      %v1374 = vrot.slane %v1372, 4
      %v1375 = vrot.slane %v324, 5
      %v1376 = vsel %vm1327, %v1374, %v1375
      %v1377 = vrot.slane %v1284, 5
      %v1378 = vrot.slane %v1377, 4
      %v1379 = vrot.slane %v300, 5
      %v1380 = vsel %vm1327, %v1378, %v1379
      %v1381 = vrot.slane %v1379, 4
      %v1382 = vrot.slane %v325, 5
      %v1383 = vsel %vm1327, %v1381, %v1382
      %v1384 = vrot.slane %v1285, 5
      %v1385 = vrot.slane %v1384, 4
      %v1386 = vrot.slane %v302, 5
      %v1387 = vsel %vm1327, %v1385, %v1386
      %v1388 = vrot.slane %v1386, 4
      %v1389 = vrot.slane %v326, 5
      %v1390 = vsel %vm1327, %v1388, %v1389
      %v1391 = vrot.slane %v1286, 5
      %v1392 = vrot.slane %v1391, 4
      %v1393 = vrot.slane %v304, 5
      %v1394 = vsel %vm1327, %v1392, %v1393
      %v1395 = vrot.slane %v1393, 4
      %v1396 = vrot.slane %v327, 5
      %v1397 = vsel %vm1327, %v1395, %v1396
      %v1398 = vrot.slane %v1287, 5
      %v1399 = vrot.slane %v1398, 4
      %v1400 = vrot.slane %v306, 5
      %v1401 = vsel %vm1327, %v1399, %v1400
      %v1402 = vrot.slane %v1400, 4
      %v1403 = vrot.slane %v328, 5
      %v1404 = vsel %vm1327, %v1402, %v1403
      %v1405 = vrot.slane %v1288, 5
      %v1406 = vrot.slane %v1405, 4
      %v1407 = vrot.slane %v308, 5
      %v1408 = vsel %vm1327, %v1406, %v1407
      %v1409 = vrot.slane %v1407, 4
      %v1410 = vrot.slane %v329, 5
      %v1411 = vsel %vm1327, %v1409, %v1410
      %v1412 = vrot.slane %v1289, 5
      %v1413 = vrot.slane %v1412, 4
      %v1414 = vrot.slane %v310, 5
      %v1415 = vsel %vm1327, %v1413, %v1414
      %v1416 = vrot.slane %v1414, 4
      %v1417 = vrot.slane %v330, 5
      %v1418 = vsel %vm1327, %v1416, %v1417
      %v1419 = vrot.slane %v1290, 5
      %v1420 = vrot.slane %v1419, 4
      %v1421 = vrot.slane %v312, 5
      %v1422 = vsel %vm1327, %v1420, %v1421
      %v1423 = vrot.slane %v1421, 4
      %v1424 = vrot.slane %v331, 5
      %v1425 = vsel %vm1327, %v1423, %v1424
      %v1426 = vrot.slane %v1291, 5
      %v1427 = vrot.slane %v1426, 4
      %v1428 = vrot.slane %v314, 5
      %v1429 = vsel %vm1327, %v1427, %v1428
      %v1430 = vrot.slane %v1428, 4
      %v1431 = vrot.slane %v332, 5
      %v1432 = vsel %vm1327, %v1430, %v1431
      %v1433 = vrot.slane %v1292, 5
      %v1434 = vrot.slane %v1433, 4
      %v1435 = vrot.slane %v316, 5
      %v1436 = vsel %vm1327, %v1434, %v1435
      %v1437 = vrot.slane %v1435, 4
      %v1438 = vrot.slane %v333, 5
      %v1439 = vsel %vm1327, %v1437, %v1438
      %s1440 = scalar_lea.vmem %s251, 4
      %v1441 = vld [vmem:[%s1440] sm:$0x3]
      %v1442 = vunpack.c.l.b16 %v1331
      %v1443 = vunpack.c.l.b16 %v1334
      %v1444 = vunpack.c.l.b16 %v1338
      %v1445 = vunpack.c.l.b16 %v1341
      %v1446 = vunpack.c.l.b16 %v1345
      %v1447 = vunpack.c.l.b16 %v1348
      %v1448 = vunpack.c.l.b16 %v1352
      %v1449 = vunpack.c.l.b16 %v1355
      %v1450 = vunpack.c.l.b16 %v1359
      %v1451 = vunpack.c.l.b16 %v1362
      %v1452 = vunpack.c.l.b16 %v1366
      %v1453 = vunpack.c.l.b16 %v1369
      %v1454 = vunpack.c.l.b16 %v1373
      %v1455 = vunpack.c.l.b16 %v1376
      %v1456 = vunpack.c.l.b16 %v1380
      %v1457 = vunpack.c.l.b16 %v1383
      %v1458 = vunpack.c.l.b16 %v1387
      %v1459 = vunpack.c.l.b16 %v1390
      %v1460 = vunpack.c.l.b16 %v1394
      %v1461 = vunpack.c.l.b16 %v1397
      %v1462 = vunpack.c.l.b16 %v1401
      %v1463 = vunpack.c.l.b16 %v1404
      %v1464 = vunpack.c.l.b16 %v1408
      %v1465 = vunpack.c.l.b16 %v1411
      %v1466 = vunpack.c.l.b16 %v1415
      %v1467 = vunpack.c.l.b16 %v1418
      %v1468 = vunpack.c.l.b16 %v1422
      %v1469 = vunpack.c.l.b16 %v1425
      %v1470 = vunpack.c.l.b16 %v1429
      %v1471 = vunpack.c.l.b16 %v1432
      %v1472 = vunpack.c.l.b16 %v1436
      %v1473 = vunpack.c.l.b16 %v1439
      %v1474 = vpack.c.b16 %v1443, %v1442
      %v1475 = vpack.c.b16 %v1445, %v1444
      %v1476 = vpack.c.b16 %v1447, %v1446
      %v1477 = vpack.c.b16 %v1449, %v1448
      %v1478 = vpack.c.b16 %v1451, %v1450
      %v1479 = vpack.c.b16 %v1453, %v1452
      %v1480 = vpack.c.b16 %v1455, %v1454
      %v1481 = vpack.c.b16 %v1457, %v1456
      %v1482 = vpack.c.b16 %v1459, %v1458
      %v1483 = vpack.c.b16 %v1461, %v1460
      %v1484 = vpack.c.b16 %v1463, %v1462
      %v1485 = vpack.c.b16 %v1465, %v1464
      %v1486 = vpack.c.b16 %v1467, %v1466
      %v1487 = vpack.c.b16 %v1469, %v1468
      %v1488 = vpack.c.b16 %v1471, %v1470
      %v1489 = vpack.c.b16 %v1473, %v1472
      %v1491 = vsel %vm771, %v1474, 0
      %v1494 = vsel %vm771, %v1475, 0
      %v1497 = vsel %vm771, %v1476, 0
      %v1500 = vsel %vm771, %v1477, 0
      %v1503 = vsel %vm771, %v1478, 0
      %v1506 = vsel %vm771, %v1479, 0
      %v1509 = vsel %vm771, %v1480, 0
      %v1512 = vsel %vm771, %v1481, 0
      %v1515 = vsel %vm771, %v1482, 0
      %v1518 = vsel %vm771, %v1483, 0
      %v1521 = vsel %vm771, %v1484, 0
      %v1524 = vsel %vm771, %v1485, 0
      %v1527 = vsel %vm771, %v1486, 0
      %v1530 = vsel %vm771, %v1487, 0
      %v1533 = vsel %vm771, %v1488, 0
      %v1536 = vsel %vm771, %v1489, 0
      %v1539 = vsel %vm820, %v1441, 0
      %1541 = vmatprep.subr.bf16.mxu0 0
      %1542 = vmatpush1.bf16.msra.mxu0 %v1539
      %1543 = vmatprep.subr.bf16.mxu0 0
      %1544 = vmatpush1.bf16.msra.mxu0 0
      %1545 = vmatprep.subr.bf16.mxu0 0
      %1546 = vmatpush1.bf16.msra.mxu0 0
      %1547 = vmatprep.subr.bf16.mxu0 0
      %1548 = vmatpush1.bf16.msra.mxu0 0
      %1549 = vmatprep.subr.bf16.mxu0 0
      %1550 = vmatpush1.bf16.msra.mxu0 0
      %1551 = vmatprep.subr.bf16.mxu0 0
      %1552 = vmatpush1.bf16.msra.mxu0 0
      %1553 = vmatprep.subr.bf16.mxu0 0
      %1554 = vmatpush1.bf16.msra.mxu0 0
      %1555 = vmatprep.subr.bf16.mxu0 0
      %1556 = vmatpush1.bf16.msra.mxu0 0
      %1557 = vmatprep.subr.bf16.mxu0 0
      %1558 = vmatpush1.bf16.msra.mxu0 0
      %1559 = vmatprep.subr.bf16.mxu0 0
      %1560 = vmatpush1.bf16.msra.mxu0 0
      %1561 = vmatprep.subr.bf16.mxu0 0
      %1562 = vmatpush1.bf16.msra.mxu0 0
      %1563 = vmatprep.subr.bf16.mxu0 0
      %1564 = vmatpush1.bf16.msra.mxu0 0
      %1565 = vmatprep.subr.bf16.mxu0 0
      %1566 = vmatpush1.bf16.msra.mxu0 0
      %1567 = vmatprep.subr.bf16.mxu0 0
      %1568 = vmatpush1.bf16.msra.mxu0 0
      %1569 = vmatprep.subr.bf16.mxu0 0
      %1570 = vmatpush1.bf16.msra.mxu0 0
      %1571 = vmatprep.subr.bf16.mxu0 0
      %1572 = vmatpush1.bf16.msra.mxu0 0
      %1573 = vmatprep.mubr.bf16.mxu0 0
      %1574 = vmatmul.mubr.bf16.gmra.mrb[0].mxu0 %v1491
      %v1575 = vpop.f32.mrb[0].mxu0
      %v1576 = vadd.f32 0.0, %v1575
      %v1577 = vpop.f32.mrb[0].mxu0
      %v1578 = vpop.f32.mrb[0].mxu0
      %v1579 = vadd.f32 0.0, %v1578
      %v1580 = vpop.f32.mrb[0].mxu0
      %1581 = vmatprep.mubr.bf16.mxu0 0
      %1582 = vmatmul.mubr.bf16.gmra.mrb[0].mxu0 %v1494
      %v1583 = vpop.f32.mrb[0].mxu0
      %v1584 = vadd.f32 0.0, %v1583
      %v1585 = vpop.f32.mrb[0].mxu0
      %v1586 = vpop.f32.mrb[0].mxu0
      %v1587 = vadd.f32 0.0, %v1586
      %v1588 = vpop.f32.mrb[0].mxu0
      %1589 = vmatprep.mubr.bf16.mxu0 0
      %1590 = vmatmul.mubr.bf16.gmra.mrb[0].mxu0 %v1497
      %v1591 = vpop.f32.mrb[0].mxu0
      %v1592 = vadd.f32 0.0, %v1591
      %v1593 = vpop.f32.mrb[0].mxu0
      %v1594 = vpop.f32.mrb[0].mxu0
      %v1595 = vadd.f32 0.0, %v1594
      %v1596 = vpop.f32.mrb[0].mxu0
      %1597 = vmatprep.mubr.bf16.mxu0 0
      %1598 = vmatmul.mubr.bf16.gmra.mrb[0].mxu0 %v1500
      %v1599 = vpop.f32.mrb[0].mxu0
      %v1600 = vadd.f32 0.0, %v1599
      %v1601 = vpop.f32.mrb[0].mxu0
      %v1602 = vpop.f32.mrb[0].mxu0
      %v1603 = vadd.f32 0.0, %v1602
      %v1604 = vpop.f32.mrb[0].mxu0
      %1605 = vmatprep.mubr.bf16.mxu0 0
      %1606 = vmatmul.mubr.bf16.gmra.mrb[0].mxu0 %v1503
      %v1607 = vpop.f32.mrb[0].mxu0
      %v1608 = vadd.f32 0.0, %v1607
      %v1609 = vpop.f32.mrb[0].mxu0
      %v1610 = vpop.f32.mrb[0].mxu0
      %v1611 = vadd.f32 0.0, %v1610
      %v1612 = vpop.f32.mrb[0].mxu0
      %1613 = vmatprep.mubr.bf16.mxu0 0
      %1614 = vmatmul.mubr.bf16.gmra.mrb[0].mxu0 %v1506
      %v1615 = vpop.f32.mrb[0].mxu0
      %v1616 = vadd.f32 0.0, %v1615
      %v1617 = vpop.f32.mrb[0].mxu0
      %v1618 = vpop.f32.mrb[0].mxu0
      %v1619 = vadd.f32 0.0, %v1618
      %v1620 = vpop.f32.mrb[0].mxu0
      %1621 = vmatprep.mubr.bf16.mxu0 0
      %1622 = vmatmul.mubr.bf16.gmra.mrb[0].mxu0 %v1509
      %v1623 = vpop.f32.mrb[0].mxu0
      %v1624 = vadd.f32 0.0, %v1623
      %v1625 = vpop.f32.mrb[0].mxu0
      %v1626 = vpop.f32.mrb[0].mxu0
      %v1627 = vadd.f32 0.0, %v1626
      %v1628 = vpop.f32.mrb[0].mxu0
      %1629 = vmatprep.mubr.bf16.mxu0 0
      %1630 = vmatmul.mubr.bf16.gmra.mrb[0].mxu0 %v1512
      %v1631 = vpop.f32.mrb[0].mxu0
      %v1632 = vadd.f32 0.0, %v1631
      %v1633 = vpop.f32.mrb[0].mxu0
      %v1634 = vpop.f32.mrb[0].mxu0
      %v1635 = vadd.f32 0.0, %v1634
      %v1636 = vpop.f32.mrb[0].mxu0
      %1637 = vmatprep.mubr.bf16.mxu0 0
      %1638 = vmatmul.mubr.bf16.gmra.mrb[0].mxu0 %v1515
      %v1639 = vpop.f32.mrb[0].mxu0
      %v1640 = vadd.f32 0.0, %v1639
      %v1641 = vpop.f32.mrb[0].mxu0
      %v1642 = vpop.f32.mrb[0].mxu0
      %v1643 = vadd.f32 0.0, %v1642
      %v1644 = vpop.f32.mrb[0].mxu0
      %1645 = vmatprep.mubr.bf16.mxu0 0
      %1646 = vmatmul.mubr.bf16.gmra.mrb[0].mxu0 %v1518
      %v1647 = vpop.f32.mrb[0].mxu0
      %v1648 = vadd.f32 0.0, %v1647
      %v1649 = vpop.f32.mrb[0].mxu0
      %v1650 = vpop.f32.mrb[0].mxu0
      %v1651 = vadd.f32 0.0, %v1650
      %v1652 = vpop.f32.mrb[0].mxu0
      %1653 = vmatprep.mubr.bf16.mxu0 0
      %1654 = vmatmul.mubr.bf16.gmra.mrb[0].mxu0 %v1521
      %v1655 = vpop.f32.mrb[0].mxu0
      %v1656 = vadd.f32 0.0, %v1655
      %v1657 = vpop.f32.mrb[0].mxu0
      %v1658 = vpop.f32.mrb[0].mxu0
      %v1659 = vadd.f32 0.0, %v1658
      %v1660 = vpop.f32.mrb[0].mxu0
      %1661 = vmatprep.mubr.bf16.mxu0 0
      %1662 = vmatmul.mubr.bf16.gmra.mrb[0].mxu0 %v1524
      %v1663 = vpop.f32.mrb[0].mxu0
      %v1664 = vadd.f32 0.0, %v1663
      %v1665 = vpop.f32.mrb[0].mxu0
      %v1666 = vpop.f32.mrb[0].mxu0
      %v1667 = vadd.f32 0.0, %v1666
      %v1668 = vpop.f32.mrb[0].mxu0
      %1669 = vmatprep.mubr.bf16.mxu0 0
      %1670 = vmatmul.mubr.bf16.gmra.mrb[0].mxu0 %v1527
      %v1671 = vpop.f32.mrb[0].mxu0
      %v1672 = vadd.f32 0.0, %v1671
      %v1673 = vpop.f32.mrb[0].mxu0
      %v1674 = vpop.f32.mrb[0].mxu0
      %v1675 = vadd.f32 0.0, %v1674
      %v1676 = vpop.f32.mrb[0].mxu0
      %1677 = vmatprep.mubr.bf16.mxu0 0
      %1678 = vmatmul.mubr.bf16.gmra.mrb[0].mxu0 %v1530
      %v1679 = vpop.f32.mrb[0].mxu0
      %v1680 = vadd.f32 0.0, %v1679
      %v1681 = vpop.f32.mrb[0].mxu0
      %v1682 = vpop.f32.mrb[0].mxu0
      %v1683 = vadd.f32 0.0, %v1682
      %v1684 = vpop.f32.mrb[0].mxu0
      %1685 = vmatprep.mubr.bf16.mxu0 0
      %1686 = vmatmul.mubr.bf16.gmra.mrb[0].mxu0 %v1533
      %v1687 = vpop.f32.mrb[0].mxu0
      %v1688 = vadd.f32 0.0, %v1687
      %v1689 = vpop.f32.mrb[0].mxu0
      %v1690 = vpop.f32.mrb[0].mxu0
      %v1691 = vadd.f32 0.0, %v1690
      %v1692 = vpop.f32.mrb[0].mxu0
      %1693 = vmatprep.mubr.bf16.mxu0 0
      %1694 = vmatmul.mubr.bf16.gmra.mrb[0].mxu0 %v1536
      %v1695 = vpop.f32.mrb[0].mxu0
      %v1696 = vadd.f32 0.0, %v1695
      %v1697 = vpop.f32.mrb[0].mxu0
      %v1698 = vpop.f32.mrb[0].mxu0
      %v1699 = vadd.f32 0.0, %v1698
      %v1700 = vpop.f32.mrb[0].mxu0
      %1701 = vdwg.mxu0
      %v1702 = vadd.f32 %v1151, %v1576
      %v1703 = vadd.f32 %v1154, %v1579
      %v1704 = vadd.f32 %v1159, %v1584
      %v1705 = vadd.f32 %v1162, %v1587
      %v1706 = vadd.f32 %v1167, %v1592
      %v1707 = vadd.f32 %v1170, %v1595
      %v1708 = vadd.f32 %v1175, %v1600
      %v1709 = vadd.f32 %v1178, %v1603
      %v1710 = vadd.f32 %v1183, %v1608
      %v1711 = vadd.f32 %v1186, %v1611
      %v1712 = vadd.f32 %v1191, %v1616
      %v1713 = vadd.f32 %v1194, %v1619
      %v1714 = vadd.f32 %v1199, %v1624
      %v1715 = vadd.f32 %v1202, %v1627
      %v1716 = vadd.f32 %v1207, %v1632
      %v1717 = vadd.f32 %v1210, %v1635
      %v1718 = vadd.f32 %v1215, %v1640
      %v1719 = vadd.f32 %v1218, %v1643
      %v1720 = vadd.f32 %v1223, %v1648
      %v1721 = vadd.f32 %v1226, %v1651
      %v1722 = vadd.f32 %v1231, %v1656
      %v1723 = vadd.f32 %v1234, %v1659
      %v1724 = vadd.f32 %v1239, %v1664
      %v1725 = vadd.f32 %v1242, %v1667
      %v1726 = vadd.f32 %v1247, %v1672
      %v1727 = vadd.f32 %v1250, %v1675
      %v1728 = vadd.f32 %v1255, %v1680
      %v1729 = vadd.f32 %v1258, %v1683
      %v1730 = vadd.f32 %v1263, %v1688
      %v1731 = vadd.f32 %v1266, %v1691
      %v1732 = vadd.f32 %v1271, %v1696
      %v1733 = vadd.f32 %v1274, %v1699
      %s1734 = sadd.s32 %s281, 1
      %s1735 = smul.u32 %s1734, 3
      %s1736 = smul.addr %s1735, 4
      %s1737 = scalar_lea.vmem %s247, %s1736
      %v1738 = vld [vmem:[%s1737] sm:$0xf]
      %v1739 = vld [vmem:[%s1737 + $0x4] sm:$0xf]
      %v1740 = vld [vmem:[%s1737 + $0xc] sm:$0xf]
      %v1741 = vld [vmem:[%s1737 + $0x10] sm:$0xf]
      %v1742 = vld [vmem:[%s1737 + $0x18] sm:$0xf]
      %v1743 = vld [vmem:[%s1737 + $0x1c] sm:$0xf]
      %v1744 = vld [vmem:[%s1737 + $0x24] sm:$0xf]
      %v1745 = vld [vmem:[%s1737 + $0x28] sm:$0xf]
      %v1746 = vld [vmem:[%s1737 + $0x30] sm:$0xf]
      %v1747 = vld [vmem:[%s1737 + $0x34] sm:$0xf]
      %v1748 = vld [vmem:[%s1737 + $0x3c] sm:$0xf]
      %v1749 = vld [vmem:[%s1737 + $0x40] sm:$0xf]
      %v1750 = vld [vmem:[%s1737 + $0x48] sm:$0xf]
      %v1751 = vld [vmem:[%s1737 + $0x4c] sm:$0xf]
      %v1752 = vld [vmem:[%s1737 + $0x54] sm:$0xf]
      %v1753 = vld [vmem:[%s1737 + $0x58] sm:$0xf]
      %v1754 = vld [vmem:[%s1737 + $0x60] sm:$0xf]
      %v1755 = vld [vmem:[%s1737 + $0x64] sm:$0xf]
      %v1756 = vld [vmem:[%s1737 + $0x6c] sm:$0xf]
      %v1757 = vld [vmem:[%s1737 + $0x70] sm:$0xf]
      %v1758 = vld [vmem:[%s1737 + $0x78] sm:$0xf]
      %v1759 = vld [vmem:[%s1737 + $0x7c] sm:$0xf]
      %v1760 = vld [vmem:[%s1737 + $0x84] sm:$0xf]
      %v1761 = vld [vmem:[%s1737 + $0x88] sm:$0xf]
      %v1762 = vld [vmem:[%s1737 + $0x90] sm:$0xf]
      %v1763 = vld [vmem:[%s1737 + $0x94] sm:$0xf]
      %v1764 = vld [vmem:[%s1737 + $0x9c] sm:$0xf]
      %v1765 = vld [vmem:[%s1737 + $0xa0] sm:$0xf]
      %v1766 = vld [vmem:[%s1737 + $0xa8] sm:$0xf]
      %v1767 = vld [vmem:[%s1737 + $0xac] sm:$0xf]
      %v1768 = vld [vmem:[%s1737 + $0xb4] sm:$0xf]
      %v1769 = vld [vmem:[%s1737 + $0xb8] sm:$0xf]
      %s1770 = scalar_lea.vmem %s251, 6
      %v1771 = vld [vmem:[%s1770] sm:$0x3]
      %v1804 = vunpack.c.l.b16 %v1738
      %v1805 = vunpack.c.l.b16 %v1739
      %v1806 = vunpack.c.l.b16 %v1740
      %v1807 = vunpack.c.l.b16 %v1741
      %v1808 = vunpack.c.l.b16 %v1742
      %v1809 = vunpack.c.l.b16 %v1743
      %v1810 = vunpack.c.l.b16 %v1744
      %v1811 = vunpack.c.l.b16 %v1745
      %v1812 = vunpack.c.l.b16 %v1746
      %v1813 = vunpack.c.l.b16 %v1747
      %v1814 = vunpack.c.l.b16 %v1748
      %v1815 = vunpack.c.l.b16 %v1749
      %v1816 = vunpack.c.l.b16 %v1750
      %v1817 = vunpack.c.l.b16 %v1751
      %v1818 = vunpack.c.l.b16 %v1752
      %v1819 = vunpack.c.l.b16 %v1753
      %v1820 = vunpack.c.l.b16 %v1754
      %v1821 = vunpack.c.l.b16 %v1755
      %v1822 = vunpack.c.l.b16 %v1756
      %v1823 = vunpack.c.l.b16 %v1757
      %v1824 = vunpack.c.l.b16 %v1758
      %v1825 = vunpack.c.l.b16 %v1759
      %v1826 = vunpack.c.l.b16 %v1760
      %v1827 = vunpack.c.l.b16 %v1761
      %v1828 = vunpack.c.l.b16 %v1762
      %v1829 = vunpack.c.l.b16 %v1763
      %v1830 = vunpack.c.l.b16 %v1764
      %v1831 = vunpack.c.l.b16 %v1765
      %v1832 = vunpack.c.l.b16 %v1766
      %v1833 = vunpack.c.l.b16 %v1767
      %v1834 = vunpack.c.l.b16 %v1768
      %v1835 = vunpack.c.l.b16 %v1769
      %v1836 = vpack.c.b16 %v1805, %v1804
      %v1837 = vpack.c.b16 %v1807, %v1806
      %v1838 = vpack.c.b16 %v1809, %v1808
      %v1839 = vpack.c.b16 %v1811, %v1810
      %v1840 = vpack.c.b16 %v1813, %v1812
      %v1841 = vpack.c.b16 %v1815, %v1814
      %v1842 = vpack.c.b16 %v1817, %v1816
      %v1843 = vpack.c.b16 %v1819, %v1818
      %v1844 = vpack.c.b16 %v1821, %v1820
      %v1845 = vpack.c.b16 %v1823, %v1822
      %v1846 = vpack.c.b16 %v1825, %v1824
      %v1847 = vpack.c.b16 %v1827, %v1826
      %v1848 = vpack.c.b16 %v1829, %v1828
      %v1849 = vpack.c.b16 %v1831, %v1830
      %v1850 = vpack.c.b16 %v1833, %v1832
      %v1851 = vpack.c.b16 %v1835, %v1834
      %v1853 = vsel %vm771, %v1836, 0
      %v1856 = vsel %vm771, %v1837, 0
      %v1859 = vsel %vm771, %v1838, 0
      %v1862 = vsel %vm771, %v1839, 0
      %v1865 = vsel %vm771, %v1840, 0
      %v1868 = vsel %vm771, %v1841, 0
      %v1871 = vsel %vm771, %v1842, 0
      %v1874 = vsel %vm771, %v1843, 0
      %v1877 = vsel %vm771, %v1844, 0
      %v1880 = vsel %vm771, %v1845, 0
      %v1883 = vsel %vm771, %v1846, 0
      %v1886 = vsel %vm771, %v1847, 0
      %v1889 = vsel %vm771, %v1848, 0
      %v1892 = vsel %vm771, %v1849, 0
      %v1895 = vsel %vm771, %v1850, 0
      %v1898 = vsel %vm771, %v1851, 0
      %v1901 = vsel %vm820, %v1771, 0
      %1903 = vmatprep.subr.bf16.mxu0 0
      %1904 = vmatpush1.bf16.msra.mxu0 %v1901
      %1905 = vmatprep.subr.bf16.mxu0 0
      %1906 = vmatpush1.bf16.msra.mxu0 0
      %1907 = vmatprep.subr.bf16.mxu0 0
      %1908 = vmatpush1.bf16.msra.mxu0 0
      %1909 = vmatprep.subr.bf16.mxu0 0
      %1910 = vmatpush1.bf16.msra.mxu0 0
      %1911 = vmatprep.subr.bf16.mxu0 0
      %1912 = vmatpush1.bf16.msra.mxu0 0
      %1913 = vmatprep.subr.bf16.mxu0 0
      %1914 = vmatpush1.bf16.msra.mxu0 0
      %1915 = vmatprep.subr.bf16.mxu0 0
      %1916 = vmatpush1.bf16.msra.mxu0 0
      %1917 = vmatprep.subr.bf16.mxu0 0
      %1918 = vmatpush1.bf16.msra.mxu0 0
      %1919 = vmatprep.subr.bf16.mxu0 0
      %1920 = vmatpush1.bf16.msra.mxu0 0
      %1921 = vmatprep.subr.bf16.mxu0 0
      %1922 = vmatpush1.bf16.msra.mxu0 0
      %1923 = vmatprep.subr.bf16.mxu0 0
      %1924 = vmatpush1.bf16.msra.mxu0 0
      %1925 = vmatprep.subr.bf16.mxu0 0
      %1926 = vmatpush1.bf16.msra.mxu0 0
      %1927 = vmatprep.subr.bf16.mxu0 0
      %1928 = vmatpush1.bf16.msra.mxu0 0
      %1929 = vmatprep.subr.bf16.mxu0 0
      %1930 = vmatpush1.bf16.msra.mxu0 0
      %1931 = vmatprep.subr.bf16.mxu0 0
      %1932 = vmatpush1.bf16.msra.mxu0 0
      %1933 = vmatprep.subr.bf16.mxu0 0
      %1934 = vmatpush1.bf16.msra.mxu0 0
      %1935 = vmatprep.mubr.bf16.mxu0 0
      %1936 = vmatmul.mubr.bf16.gmra.mrb[0].mxu0 %v1853
      %v1937 = vpop.f32.mrb[0].mxu0
      %v1938 = vadd.f32 0.0, %v1937
      %v1939 = vpop.f32.mrb[0].mxu0
      %v1940 = vpop.f32.mrb[0].mxu0
      %v1941 = vadd.f32 0.0, %v1940
      %v1942 = vpop.f32.mrb[0].mxu0
      %1943 = vmatprep.mubr.bf16.mxu0 0
      %1944 = vmatmul.mubr.bf16.gmra.mrb[0].mxu0 %v1856
      %v1945 = vpop.f32.mrb[0].mxu0
      %v1946 = vadd.f32 0.0, %v1945
      %v1947 = vpop.f32.mrb[0].mxu0
      %v1948 = vpop.f32.mrb[0].mxu0
      %v1949 = vadd.f32 0.0, %v1948
      %v1950 = vpop.f32.mrb[0].mxu0
      %1951 = vmatprep.mubr.bf16.mxu0 0
      %1952 = vmatmul.mubr.bf16.gmra.mrb[0].mxu0 %v1859
      %v1953 = vpop.f32.mrb[0].mxu0
      %v1954 = vadd.f32 0.0, %v1953
      %v1955 = vpop.f32.mrb[0].mxu0
      %v1956 = vpop.f32.mrb[0].mxu0
      %v1957 = vadd.f32 0.0, %v1956
      %v1958 = vpop.f32.mrb[0].mxu0
      %1959 = vmatprep.mubr.bf16.mxu0 0
      %1960 = vmatmul.mubr.bf16.gmra.mrb[0].mxu0 %v1862
      %v1961 = vpop.f32.mrb[0].mxu0
      %v1962 = vadd.f32 0.0, %v1961
      %v1963 = vpop.f32.mrb[0].mxu0
      %v1964 = vpop.f32.mrb[0].mxu0
      %v1965 = vadd.f32 0.0, %v1964
      %v1966 = vpop.f32.mrb[0].mxu0
      %1967 = vmatprep.mubr.bf16.mxu0 0
      %1968 = vmatmul.mubr.bf16.gmra.mrb[0].mxu0 %v1865
      %v1969 = vpop.f32.mrb[0].mxu0
      %v1970 = vadd.f32 0.0, %v1969
      %v1971 = vpop.f32.mrb[0].mxu0
      %v1972 = vpop.f32.mrb[0].mxu0
      %v1973 = vadd.f32 0.0, %v1972
      %v1974 = vpop.f32.mrb[0].mxu0
      %1975 = vmatprep.mubr.bf16.mxu0 0
      %1976 = vmatmul.mubr.bf16.gmra.mrb[0].mxu0 %v1868
      %v1977 = vpop.f32.mrb[0].mxu0
      %v1978 = vadd.f32 0.0, %v1977
      %v1979 = vpop.f32.mrb[0].mxu0
      %v1980 = vpop.f32.mrb[0].mxu0
      %v1981 = vadd.f32 0.0, %v1980
      %v1982 = vpop.f32.mrb[0].mxu0
      %1983 = vmatprep.mubr.bf16.mxu0 0
      %1984 = vmatmul.mubr.bf16.gmra.mrb[0].mxu0 %v1871
      %v1985 = vpop.f32.mrb[0].mxu0
      %v1986 = vadd.f32 0.0, %v1985
      %v1987 = vpop.f32.mrb[0].mxu0
      %v1988 = vpop.f32.mrb[0].mxu0
      %v1989 = vadd.f32 0.0, %v1988
      %v1990 = vpop.f32.mrb[0].mxu0
      %1991 = vmatprep.mubr.bf16.mxu0 0
      %1992 = vmatmul.mubr.bf16.gmra.mrb[0].mxu0 %v1874
      %v1993 = vpop.f32.mrb[0].mxu0
      %v1994 = vadd.f32 0.0, %v1993
      %v1995 = vpop.f32.mrb[0].mxu0
      %v1996 = vpop.f32.mrb[0].mxu0
      %v1997 = vadd.f32 0.0, %v1996
      %v1998 = vpop.f32.mrb[0].mxu0
      %1999 = vmatprep.mubr.bf16.mxu0 0
      %2000 = vmatmul.mubr.bf16.gmra.mrb[0].mxu0 %v1877
      %v2001 = vpop.f32.mrb[0].mxu0
      %v2002 = vadd.f32 0.0, %v2001
      %v2003 = vpop.f32.mrb[0].mxu0
      %v2004 = vpop.f32.mrb[0].mxu0
      %v2005 = vadd.f32 0.0, %v2004
      %v2006 = vpop.f32.mrb[0].mxu0
      %2007 = vmatprep.mubr.bf16.mxu0 0
      %2008 = vmatmul.mubr.bf16.gmra.mrb[0].mxu0 %v1880
      %v2009 = vpop.f32.mrb[0].mxu0
      %v2010 = vadd.f32 0.0, %v2009
      %v2011 = vpop.f32.mrb[0].mxu0
      %v2012 = vpop.f32.mrb[0].mxu0
      %v2013 = vadd.f32 0.0, %v2012
      %v2014 = vpop.f32.mrb[0].mxu0
      %2015 = vmatprep.mubr.bf16.mxu0 0
      %2016 = vmatmul.mubr.bf16.gmra.mrb[0].mxu0 %v1883
      %v2017 = vpop.f32.mrb[0].mxu0
      %v2018 = vadd.f32 0.0, %v2017
      %v2019 = vpop.f32.mrb[0].mxu0
      %v2020 = vpop.f32.mrb[0].mxu0
      %v2021 = vadd.f32 0.0, %v2020
      %v2022 = vpop.f32.mrb[0].mxu0
      %2023 = vmatprep.mubr.bf16.mxu0 0
      %2024 = vmatmul.mubr.bf16.gmra.mrb[0].mxu0 %v1886
      %v2025 = vpop.f32.mrb[0].mxu0
      %v2026 = vadd.f32 0.0, %v2025
      %v2027 = vpop.f32.mrb[0].mxu0
      %v2028 = vpop.f32.mrb[0].mxu0
      %v2029 = vadd.f32 0.0, %v2028
      %v2030 = vpop.f32.mrb[0].mxu0
      %2031 = vmatprep.mubr.bf16.mxu0 0
      %2032 = vmatmul.mubr.bf16.gmra.mrb[0].mxu0 %v1889
      %v2033 = vpop.f32.mrb[0].mxu0
      %v2034 = vadd.f32 0.0, %v2033
      %v2035 = vpop.f32.mrb[0].mxu0
      %v2036 = vpop.f32.mrb[0].mxu0
      %v2037 = vadd.f32 0.0, %v2036
      %v2038 = vpop.f32.mrb[0].mxu0
      %2039 = vmatprep.mubr.bf16.mxu0 0
      %2040 = vmatmul.mubr.bf16.gmra.mrb[0].mxu0 %v1892
      %v2041 = vpop.f32.mrb[0].mxu0
      %v2042 = vadd.f32 0.0, %v2041
      %v2043 = vpop.f32.mrb[0].mxu0
      %v2044 = vpop.f32.mrb[0].mxu0
      %v2045 = vadd.f32 0.0, %v2044
      %v2046 = vpop.f32.mrb[0].mxu0
      %2047 = vmatprep.mubr.bf16.mxu0 0
      %2048 = vmatmul.mubr.bf16.gmra.mrb[0].mxu0 %v1895
      %v2049 = vpop.f32.mrb[0].mxu0
      %v2050 = vadd.f32 0.0, %v2049
      %v2051 = vpop.f32.mrb[0].mxu0
      %v2052 = vpop.f32.mrb[0].mxu0
      %v2053 = vadd.f32 0.0, %v2052
      %v2054 = vpop.f32.mrb[0].mxu0
      %2055 = vmatprep.mubr.bf16.mxu0 0
      %2056 = vmatmul.mubr.bf16.gmra.mrb[0].mxu0 %v1898
      %v2057 = vpop.f32.mrb[0].mxu0
      %v2058 = vadd.f32 0.0, %v2057
      %v2059 = vpop.f32.mrb[0].mxu0
      %v2060 = vpop.f32.mrb[0].mxu0
      %v2061 = vadd.f32 0.0, %v2060
      %v2062 = vpop.f32.mrb[0].mxu0
      %2063 = vdwg.mxu0
      %v2064 = vadd.f32 %v1702, %v1938
      %v2065 = vadd.f32 %v1703, %v1941
      %v2066 = vadd.f32 %v1704, %v1946
      %v2067 = vadd.f32 %v1705, %v1949
      %v2068 = vadd.f32 %v1706, %v1954
      %v2069 = vadd.f32 %v1707, %v1957
      %v2070 = vadd.f32 %v1708, %v1962
      %v2071 = vadd.f32 %v1709, %v1965
      %v2072 = vadd.f32 %v1710, %v1970
      %v2073 = vadd.f32 %v1711, %v1973
      %v2074 = vadd.f32 %v1712, %v1978
      %v2075 = vadd.f32 %v1713, %v1981
      %v2076 = vadd.f32 %v1714, %v1986
      %v2077 = vadd.f32 %v1715, %v1989
      %v2078 = vadd.f32 %v1716, %v1994
      %v2079 = vadd.f32 %v1717, %v1997
      %v2080 = vadd.f32 %v1718, %v2002
      %v2081 = vadd.f32 %v1719, %v2005
      %v2082 = vadd.f32 %v1720, %v2010
      %v2083 = vadd.f32 %v1721, %v2013
      %v2084 = vadd.f32 %v1722, %v2018
      %v2085 = vadd.f32 %v1723, %v2021
      %v2086 = vadd.f32 %v1724, %v2026
      %v2087 = vadd.f32 %v1725, %v2029
      %v2088 = vadd.f32 %v1726, %v2034
      %v2089 = vadd.f32 %v1727, %v2037
      %v2090 = vadd.f32 %v1728, %v2042
      %v2091 = vadd.f32 %v1729, %v2045
      %v2092 = vadd.f32 %v1730, %v2050
      %v2093 = vadd.f32 %v1731, %v2053
      %v2094 = vadd.f32 %v1732, %v2058
      %v2095 = vadd.f32 %v1733, %v2061
      %v2096 = vld [vmem:[%s1737] sm:$0xf]
      %v2097 = vld [vmem:[%s1737 + $0x4] sm:$0xf]
      %v2098 = vld [vmem:[%s1737 + $0x8] sm:$0x1]
      %v2099 = vld [vmem:[%s1737 + $0xc] sm:$0xf]
      %v2100 = vld [vmem:[%s1737 + $0x10] sm:$0xf]
      %v2101 = vld [vmem:[%s1737 + $0x14] sm:$0x1]
      %v2102 = vld [vmem:[%s1737 + $0x18] sm:$0xf]
      %v2103 = vld [vmem:[%s1737 + $0x1c] sm:$0xf]
      %v2104 = vld [vmem:[%s1737 + $0x20] sm:$0x1]
      %v2105 = vld [vmem:[%s1737 + $0x24] sm:$0xf]
      %v2106 = vld [vmem:[%s1737 + $0x28] sm:$0xf]
      %v2107 = vld [vmem:[%s1737 + $0x2c] sm:$0x1]
      %v2108 = vld [vmem:[%s1737 + $0x30] sm:$0xf]
      %v2109 = vld [vmem:[%s1737 + $0x34] sm:$0xf]
      %v2110 = vld [vmem:[%s1737 + $0x38] sm:$0x1]
      %v2111 = vld [vmem:[%s1737 + $0x3c] sm:$0xf]
      %v2112 = vld [vmem:[%s1737 + $0x40] sm:$0xf]
      %v2113 = vld [vmem:[%s1737 + $0x44] sm:$0x1]
      %v2114 = vld [vmem:[%s1737 + $0x48] sm:$0xf]
      %v2115 = vld [vmem:[%s1737 + $0x4c] sm:$0xf]
      %v2116 = vld [vmem:[%s1737 + $0x50] sm:$0x1]
      %v2117 = vld [vmem:[%s1737 + $0x54] sm:$0xf]
      %v2118 = vld [vmem:[%s1737 + $0x58] sm:$0xf]
      %v2119 = vld [vmem:[%s1737 + $0x5c] sm:$0x1]
      %v2120 = vld [vmem:[%s1737 + $0x60] sm:$0xf]
      %v2121 = vld [vmem:[%s1737 + $0x64] sm:$0xf]
      %v2122 = vld [vmem:[%s1737 + $0x68] sm:$0x1]
      %v2123 = vld [vmem:[%s1737 + $0x6c] sm:$0xf]
      %v2124 = vld [vmem:[%s1737 + $0x70] sm:$0xf]
      %v2125 = vld [vmem:[%s1737 + $0x74] sm:$0x1]
      %v2126 = vld [vmem:[%s1737 + $0x78] sm:$0xf]
      %v2127 = vld [vmem:[%s1737 + $0x7c] sm:$0xf]
      %v2128 = vld [vmem:[%s1737 + $0x80] sm:$0x1]
      %v2129 = vld [vmem:[%s1737 + $0x84] sm:$0xf]
      %v2130 = vld [vmem:[%s1737 + $0x88] sm:$0xf]
      %v2131 = vld [vmem:[%s1737 + $0x8c] sm:$0x1]
      %v2132 = vld [vmem:[%s1737 + $0x90] sm:$0xf]
      %v2133 = vld [vmem:[%s1737 + $0x94] sm:$0xf]
      %v2134 = vld [vmem:[%s1737 + $0x98] sm:$0x1]
      %v2135 = vld [vmem:[%s1737 + $0x9c] sm:$0xf]
      %v2136 = vld [vmem:[%s1737 + $0xa0] sm:$0xf]
      %v2137 = vld [vmem:[%s1737 + $0xa4] sm:$0x1]
      %v2138 = vld [vmem:[%s1737 + $0xa8] sm:$0xf]
      %v2139 = vld [vmem:[%s1737 + $0xac] sm:$0xf]
      %v2140 = vld [vmem:[%s1737 + $0xb0] sm:$0x1]
      %v2141 = vld [vmem:[%s1737 + $0xb4] sm:$0xf]
      %v2142 = vld [vmem:[%s1737 + $0xb8] sm:$0xf]
      %v2143 = vld [vmem:[%s1737 + $0xbc] sm:$0x1]
      %v2145 = vshrl.u32 %v2096, 16
      %v2147 = vrot.slane %v2145, 4
      %v2148 = vshll.u32 %v2096, 16
      %v2150 = vrot.slane %v2148, 5
      %v2151 = vor.u32 %v2147, %v2150
      %v2152 = vrot.slane %v2151, 4
      %v2154 = vshll.u32 %v2097, 16
      %v2156 = vrot.slane %v2154, 5
      %v2157 = vsel %vm336, %v2152, %v2156
      %v2158 = vshrl.u32 %v2097, 16
      %v2160 = vrot.slane %v2158, 4
      %v2161 = vor.u32 %v2160, %v2156
      %v2162 = vrot.slane %v2161, 4
      %v2164 = vshll.u32 %v2098, 16
      %v2166 = vrot.slane %v2164, 5
      %v2167 = vsel %vm336, %v2162, %v2166
      %v2169 = vshrl.u32 %v2099, 16
      %v2171 = vrot.slane %v2169, 4
      %v2172 = vshll.u32 %v2099, 16
      %v2174 = vrot.slane %v2172, 5
      %v2175 = vor.u32 %v2171, %v2174
      %v2176 = vrot.slane %v2175, 4
      %v2178 = vshll.u32 %v2100, 16
      %v2180 = vrot.slane %v2178, 5
      %v2181 = vsel %vm336, %v2176, %v2180
      %v2182 = vshrl.u32 %v2100, 16
      %v2184 = vrot.slane %v2182, 4
      %v2185 = vor.u32 %v2184, %v2180
      %v2186 = vrot.slane %v2185, 4
      %v2188 = vshll.u32 %v2101, 16
      %v2190 = vrot.slane %v2188, 5
      %v2191 = vsel %vm336, %v2186, %v2190
      %v2193 = vshrl.u32 %v2102, 16
      %v2195 = vrot.slane %v2193, 4
      %v2196 = vshll.u32 %v2102, 16
      %v2198 = vrot.slane %v2196, 5
      %v2199 = vor.u32 %v2195, %v2198
      %v2200 = vrot.slane %v2199, 4
      %v2202 = vshll.u32 %v2103, 16
      %v2204 = vrot.slane %v2202, 5
      %v2205 = vsel %vm336, %v2200, %v2204
      %v2206 = vshrl.u32 %v2103, 16
      %v2208 = vrot.slane %v2206, 4
      %v2209 = vor.u32 %v2208, %v2204
      %v2210 = vrot.slane %v2209, 4
      %v2212 = vshll.u32 %v2104, 16
      %v2214 = vrot.slane %v2212, 5
      %v2215 = vsel %vm336, %v2210, %v2214
      %v2217 = vshrl.u32 %v2105, 16
      %v2219 = vrot.slane %v2217, 4
      %v2220 = vshll.u32 %v2105, 16
      %v2222 = vrot.slane %v2220, 5
      %v2223 = vor.u32 %v2219, %v2222
      %v2224 = vrot.slane %v2223, 4
      %v2226 = vshll.u32 %v2106, 16
      %v2228 = vrot.slane %v2226, 5
      %v2229 = vsel %vm336, %v2224, %v2228
      %v2230 = vshrl.u32 %v2106, 16
      %v2232 = vrot.slane %v2230, 4
      %v2233 = vor.u32 %v2232, %v2228
      %v2234 = vrot.slane %v2233, 4
      %v2236 = vshll.u32 %v2107, 16
      %v2238 = vrot.slane %v2236, 5
      %v2239 = vsel %vm336, %v2234, %v2238
      %v2241 = vshrl.u32 %v2108, 16
      %v2243 = vrot.slane %v2241, 4
      %v2244 = vshll.u32 %v2108, 16
      %v2246 = vrot.slane %v2244, 5
      %v2247 = vor.u32 %v2243, %v2246
      %v2248 = vrot.slane %v2247, 4
      %v2250 = vshll.u32 %v2109, 16
      %v2252 = vrot.slane %v2250, 5
      %v2253 = vsel %vm336, %v2248, %v2252
      %v2254 = vshrl.u32 %v2109, 16
      %v2256 = vrot.slane %v2254, 4
      %v2257 = vor.u32 %v2256, %v2252
      %v2258 = vrot.slane %v2257, 4
      %v2260 = vshll.u32 %v2110, 16
      %v2262 = vrot.slane %v2260, 5
      %v2263 = vsel %vm336, %v2258, %v2262
      %v2265 = vshrl.u32 %v2111, 16
      %v2267 = vrot.slane %v2265, 4
      %v2268 = vshll.u32 %v2111, 16
      %v2270 = vrot.slane %v2268, 5
      %v2271 = vor.u32 %v2267, %v2270
      %v2272 = vrot.slane %v2271, 4
      %v2274 = vshll.u32 %v2112, 16
      %v2276 = vrot.slane %v2274, 5
      %v2277 = vsel %vm336, %v2272, %v2276
      %v2278 = vshrl.u32 %v2112, 16
      %v2280 = vrot.slane %v2278, 4
      %v2281 = vor.u32 %v2280, %v2276
      %v2282 = vrot.slane %v2281, 4
      %v2284 = vshll.u32 %v2113, 16
      %v2286 = vrot.slane %v2284, 5
      %v2287 = vsel %vm336, %v2282, %v2286
      %v2289 = vshrl.u32 %v2114, 16
      %v2291 = vrot.slane %v2289, 4
      %v2292 = vshll.u32 %v2114, 16
      %v2294 = vrot.slane %v2292, 5
      %v2295 = vor.u32 %v2291, %v2294
      %v2296 = vrot.slane %v2295, 4
      %v2298 = vshll.u32 %v2115, 16
      %v2300 = vrot.slane %v2298, 5
      %v2301 = vsel %vm336, %v2296, %v2300
      %v2302 = vshrl.u32 %v2115, 16
      %v2304 = vrot.slane %v2302, 4
      %v2305 = vor.u32 %v2304, %v2300
      %v2306 = vrot.slane %v2305, 4
      %v2308 = vshll.u32 %v2116, 16
      %v2310 = vrot.slane %v2308, 5
      %v2311 = vsel %vm336, %v2306, %v2310
      %v2313 = vshrl.u32 %v2117, 16
      %v2315 = vrot.slane %v2313, 4
      %v2316 = vshll.u32 %v2117, 16
      %v2318 = vrot.slane %v2316, 5
      %v2319 = vor.u32 %v2315, %v2318
      %v2320 = vrot.slane %v2319, 4
      %v2322 = vshll.u32 %v2118, 16
      %v2324 = vrot.slane %v2322, 5
      %v2325 = vsel %vm336, %v2320, %v2324
      %v2326 = vshrl.u32 %v2118, 16
      %v2328 = vrot.slane %v2326, 4
      %v2329 = vor.u32 %v2328, %v2324
      %v2330 = vrot.slane %v2329, 4
      %v2332 = vshll.u32 %v2119, 16
      %v2334 = vrot.slane %v2332, 5
      %v2335 = vsel %vm336, %v2330, %v2334
      %v2337 = vshrl.u32 %v2120, 16
      %v2339 = vrot.slane %v2337, 4
      %v2340 = vshll.u32 %v2120, 16
      %v2342 = vrot.slane %v2340, 5
      %v2343 = vor.u32 %v2339, %v2342
      %v2344 = vrot.slane %v2343, 4
      %v2346 = vshll.u32 %v2121, 16
      %v2348 = vrot.slane %v2346, 5
      %v2349 = vsel %vm336, %v2344, %v2348
      %v2350 = vshrl.u32 %v2121, 16
      %v2352 = vrot.slane %v2350, 4
      %v2353 = vor.u32 %v2352, %v2348
      %v2354 = vrot.slane %v2353, 4
      %v2356 = vshll.u32 %v2122, 16
      %v2358 = vrot.slane %v2356, 5
      %v2359 = vsel %vm336, %v2354, %v2358
      %v2361 = vshrl.u32 %v2123, 16
      %v2363 = vrot.slane %v2361, 4
      %v2364 = vshll.u32 %v2123, 16
      %v2366 = vrot.slane %v2364, 5
      %v2367 = vor.u32 %v2363, %v2366
      %v2368 = vrot.slane %v2367, 4
      %v2370 = vshll.u32 %v2124, 16
      %v2372 = vrot.slane %v2370, 5
      %v2373 = vsel %vm336, %v2368, %v2372
      %v2374 = vshrl.u32 %v2124, 16
      %v2376 = vrot.slane %v2374, 4
      %v2377 = vor.u32 %v2376, %v2372
      %v2378 = vrot.slane %v2377, 4
      %v2380 = vshll.u32 %v2125, 16
      %v2382 = vrot.slane %v2380, 5
      %v2383 = vsel %vm336, %v2378, %v2382
      %v2385 = vshrl.u32 %v2126, 16
      %v2387 = vrot.slane %v2385, 4
      %v2388 = vshll.u32 %v2126, 16
      %v2390 = vrot.slane %v2388, 5
      %v2391 = vor.u32 %v2387, %v2390
      %v2392 = vrot.slane %v2391, 4
      %v2394 = vshll.u32 %v2127, 16
      %v2396 = vrot.slane %v2394, 5
      %v2397 = vsel %vm336, %v2392, %v2396
      %v2398 = vshrl.u32 %v2127, 16
      %v2400 = vrot.slane %v2398, 4
      %v2401 = vor.u32 %v2400, %v2396
      %v2402 = vrot.slane %v2401, 4
      %v2404 = vshll.u32 %v2128, 16
      %v2406 = vrot.slane %v2404, 5
      %v2407 = vsel %vm336, %v2402, %v2406
      %v2409 = vshrl.u32 %v2129, 16
      %v2411 = vrot.slane %v2409, 4
      %v2412 = vshll.u32 %v2129, 16
      %v2414 = vrot.slane %v2412, 5
      %v2415 = vor.u32 %v2411, %v2414
      %v2416 = vrot.slane %v2415, 4
      %v2418 = vshll.u32 %v2130, 16
      %v2420 = vrot.slane %v2418, 5
      %v2421 = vsel %vm336, %v2416, %v2420
      %v2422 = vshrl.u32 %v2130, 16
      %v2424 = vrot.slane %v2422, 4
      %v2425 = vor.u32 %v2424, %v2420
      %v2426 = vrot.slane %v2425, 4
      %v2428 = vshll.u32 %v2131, 16
      %v2430 = vrot.slane %v2428, 5
      %v2431 = vsel %vm336, %v2426, %v2430
      %v2433 = vshrl.u32 %v2132, 16
      %v2435 = vrot.slane %v2433, 4
      %v2436 = vshll.u32 %v2132, 16
      %v2438 = vrot.slane %v2436, 5
      %v2439 = vor.u32 %v2435, %v2438
      %v2440 = vrot.slane %v2439, 4
      %v2442 = vshll.u32 %v2133, 16
      %v2444 = vrot.slane %v2442, 5
      %v2445 = vsel %vm336, %v2440, %v2444
      %v2446 = vshrl.u32 %v2133, 16
      %v2448 = vrot.slane %v2446, 4
      %v2449 = vor.u32 %v2448, %v2444
      %v2450 = vrot.slane %v2449, 4
      %v2452 = vshll.u32 %v2134, 16
      %v2454 = vrot.slane %v2452, 5
      %v2455 = vsel %vm336, %v2450, %v2454
      %v2457 = vshrl.u32 %v2135, 16
      %v2459 = vrot.slane %v2457, 4
      %v2460 = vshll.u32 %v2135, 16
      %v2462 = vrot.slane %v2460, 5
      %v2463 = vor.u32 %v2459, %v2462
      %v2464 = vrot.slane %v2463, 4
      %v2466 = vshll.u32 %v2136, 16
      %v2468 = vrot.slane %v2466, 5
      %v2469 = vsel %vm336, %v2464, %v2468
      %v2470 = vshrl.u32 %v2136, 16
      %v2472 = vrot.slane %v2470, 4
      %v2473 = vor.u32 %v2472, %v2468
      %v2474 = vrot.slane %v2473, 4
      %v2476 = vshll.u32 %v2137, 16
      %v2478 = vrot.slane %v2476, 5
      %v2479 = vsel %vm336, %v2474, %v2478
      %v2481 = vshrl.u32 %v2138, 16
      %v2483 = vrot.slane %v2481, 4
      %v2484 = vshll.u32 %v2138, 16
      %v2486 = vrot.slane %v2484, 5
      %v2487 = vor.u32 %v2483, %v2486
      %v2488 = vrot.slane %v2487, 4
      %v2490 = vshll.u32 %v2139, 16
      %v2492 = vrot.slane %v2490, 5
      %v2493 = vsel %vm336, %v2488, %v2492
      %v2494 = vshrl.u32 %v2139, 16
      %v2496 = vrot.slane %v2494, 4
      %v2497 = vor.u32 %v2496, %v2492
      %v2498 = vrot.slane %v2497, 4
      %v2500 = vshll.u32 %v2140, 16
      %v2502 = vrot.slane %v2500, 5
      %v2503 = vsel %vm336, %v2498, %v2502
      %v2505 = vshrl.u32 %v2141, 16
      %v2507 = vrot.slane %v2505, 4
      %v2508 = vshll.u32 %v2141, 16
      %v2510 = vrot.slane %v2508, 5
      %v2511 = vor.u32 %v2507, %v2510
      %v2512 = vrot.slane %v2511, 4
      %v2514 = vshll.u32 %v2142, 16
      %v2516 = vrot.slane %v2514, 5
      %v2517 = vsel %vm336, %v2512, %v2516
      %v2518 = vshrl.u32 %v2142, 16
      %v2520 = vrot.slane %v2518, 4
      %v2521 = vor.u32 %v2520, %v2516
      %v2522 = vrot.slane %v2521, 4
      %v2524 = vshll.u32 %v2143, 16
      %v2526 = vrot.slane %v2524, 5
      %v2527 = vsel %vm336, %v2522, %v2526
      %s2528 = scalar_lea.vmem %s251, 8
      %v2529 = vld [vmem:[%s2528] sm:$0x3]
      %v2530 = vunpack.c.l.b16 %v2157
      %v2531 = vunpack.c.l.b16 %v2167
      %v2532 = vunpack.c.l.b16 %v2181
      %v2533 = vunpack.c.l.b16 %v2191
      %v2534 = vunpack.c.l.b16 %v2205
      %v2535 = vunpack.c.l.b16 %v2215
      %v2536 = vunpack.c.l.b16 %v2229
      %v2537 = vunpack.c.l.b16 %v2239
      %v2538 = vunpack.c.l.b16 %v2253
      %v2539 = vunpack.c.l.b16 %v2263
      %v2540 = vunpack.c.l.b16 %v2277
      %v2541 = vunpack.c.l.b16 %v2287
      %v2542 = vunpack.c.l.b16 %v2301
      %v2543 = vunpack.c.l.b16 %v2311
      %v2544 = vunpack.c.l.b16 %v2325
      %v2545 = vunpack.c.l.b16 %v2335
      %v2546 = vunpack.c.l.b16 %v2349
      %v2547 = vunpack.c.l.b16 %v2359
      %v2548 = vunpack.c.l.b16 %v2373
      %v2549 = vunpack.c.l.b16 %v2383
      %v2550 = vunpack.c.l.b16 %v2397
      %v2551 = vunpack.c.l.b16 %v2407
      %v2552 = vunpack.c.l.b16 %v2421
      %v2553 = vunpack.c.l.b16 %v2431
      %v2554 = vunpack.c.l.b16 %v2445
      %v2555 = vunpack.c.l.b16 %v2455
      %v2556 = vunpack.c.l.b16 %v2469
      %v2557 = vunpack.c.l.b16 %v2479
      %v2558 = vunpack.c.l.b16 %v2493
      %v2559 = vunpack.c.l.b16 %v2503
      %v2560 = vunpack.c.l.b16 %v2517
      %v2561 = vunpack.c.l.b16 %v2527
      %v2562 = vpack.c.b16 %v2531, %v2530
      %v2563 = vpack.c.b16 %v2533, %v2532
      %v2564 = vpack.c.b16 %v2535, %v2534
      %v2565 = vpack.c.b16 %v2537, %v2536
      %v2566 = vpack.c.b16 %v2539, %v2538
      %v2567 = vpack.c.b16 %v2541, %v2540
      %v2568 = vpack.c.b16 %v2543, %v2542
      %v2569 = vpack.c.b16 %v2545, %v2544
      %v2570 = vpack.c.b16 %v2547, %v2546
      %v2571 = vpack.c.b16 %v2549, %v2548
      %v2572 = vpack.c.b16 %v2551, %v2550
      %v2573 = vpack.c.b16 %v2553, %v2552
      %v2574 = vpack.c.b16 %v2555, %v2554
      %v2575 = vpack.c.b16 %v2557, %v2556
      %v2576 = vpack.c.b16 %v2559, %v2558
      %v2577 = vpack.c.b16 %v2561, %v2560
      %v2579 = vsel %vm771, %v2562, 0
      %v2582 = vsel %vm771, %v2563, 0
      %v2585 = vsel %vm771, %v2564, 0
      %v2588 = vsel %vm771, %v2565, 0
      %v2591 = vsel %vm771, %v2566, 0
      %v2594 = vsel %vm771, %v2567, 0
      %v2597 = vsel %vm771, %v2568, 0
      %v2600 = vsel %vm771, %v2569, 0
      %v2603 = vsel %vm771, %v2570, 0
      %v2606 = vsel %vm771, %v2571, 0
      %v2609 = vsel %vm771, %v2572, 0
      %v2612 = vsel %vm771, %v2573, 0
      %v2615 = vsel %vm771, %v2574, 0
      %v2618 = vsel %vm771, %v2575, 0
      %v2621 = vsel %vm771, %v2576, 0
      %v2624 = vsel %vm771, %v2577, 0
      %v2627 = vsel %vm820, %v2529, 0
      %2629 = vmatprep.subr.bf16.mxu0 0
      %2630 = vmatpush1.bf16.msra.mxu0 %v2627
      %2631 = vmatprep.subr.bf16.mxu0 0
      %2632 = vmatpush1.bf16.msra.mxu0 0
      %2633 = vmatprep.subr.bf16.mxu0 0
      %2634 = vmatpush1.bf16.msra.mxu0 0
      %2635 = vmatprep.subr.bf16.mxu0 0
      %2636 = vmatpush1.bf16.msra.mxu0 0
      %2637 = vmatprep.subr.bf16.mxu0 0
      %2638 = vmatpush1.bf16.msra.mxu0 0
      %2639 = vmatprep.subr.bf16.mxu0 0
      %2640 = vmatpush1.bf16.msra.mxu0 0
      %2641 = vmatprep.subr.bf16.mxu0 0
      %2642 = vmatpush1.bf16.msra.mxu0 0
      %2643 = vmatprep.subr.bf16.mxu0 0
      %2644 = vmatpush1.bf16.msra.mxu0 0
      %2645 = vmatprep.subr.bf16.mxu0 0
      %2646 = vmatpush1.bf16.msra.mxu0 0
      %2647 = vmatprep.subr.bf16.mxu0 0
      %2648 = vmatpush1.bf16.msra.mxu0 0
      %2649 = vmatprep.subr.bf16.mxu0 0
      %2650 = vmatpush1.bf16.msra.mxu0 0
      %2651 = vmatprep.subr.bf16.mxu0 0
      %2652 = vmatpush1.bf16.msra.mxu0 0
      %2653 = vmatprep.subr.bf16.mxu0 0
      %2654 = vmatpush1.bf16.msra.mxu0 0
      %2655 = vmatprep.subr.bf16.mxu0 0
      %2656 = vmatpush1.bf16.msra.mxu0 0
      %2657 = vmatprep.subr.bf16.mxu0 0
      %2658 = vmatpush1.bf16.msra.mxu0 0
      %2659 = vmatprep.subr.bf16.mxu0 0
      %2660 = vmatpush1.bf16.msra.mxu0 0
      %2661 = vmatprep.mubr.bf16.mxu0 0
      %2662 = vmatmul.mubr.bf16.gmra.mrb[0].mxu0 %v2579
      %v2663 = vpop.f32.mrb[0].mxu0
      %v2664 = vadd.f32 0.0, %v2663
      %v2665 = vpop.f32.mrb[0].mxu0
      %v2666 = vpop.f32.mrb[0].mxu0
      %v2667 = vadd.f32 0.0, %v2666
      %v2668 = vpop.f32.mrb[0].mxu0
      %2669 = vmatprep.mubr.bf16.mxu0 0
      %2670 = vmatmul.mubr.bf16.gmra.mrb[0].mxu0 %v2582
      %v2671 = vpop.f32.mrb[0].mxu0
      %v2672 = vadd.f32 0.0, %v2671
      %v2673 = vpop.f32.mrb[0].mxu0
      %v2674 = vpop.f32.mrb[0].mxu0
      %v2675 = vadd.f32 0.0, %v2674
      %v2676 = vpop.f32.mrb[0].mxu0
      %2677 = vmatprep.mubr.bf16.mxu0 0
      %2678 = vmatmul.mubr.bf16.gmra.mrb[0].mxu0 %v2585
      %v2679 = vpop.f32.mrb[0].mxu0
      %v2680 = vadd.f32 0.0, %v2679
      %v2681 = vpop.f32.mrb[0].mxu0
      %v2682 = vpop.f32.mrb[0].mxu0
      %v2683 = vadd.f32 0.0, %v2682
      %v2684 = vpop.f32.mrb[0].mxu0
      %2685 = vmatprep.mubr.bf16.mxu0 0
      %2686 = vmatmul.mubr.bf16.gmra.mrb[0].mxu0 %v2588
      %v2687 = vpop.f32.mrb[0].mxu0
      %v2688 = vadd.f32 0.0, %v2687
      %v2689 = vpop.f32.mrb[0].mxu0
      %v2690 = vpop.f32.mrb[0].mxu0
      %v2691 = vadd.f32 0.0, %v2690
      %v2692 = vpop.f32.mrb[0].mxu0
      %2693 = vmatprep.mubr.bf16.mxu0 0
      %2694 = vmatmul.mubr.bf16.gmra.mrb[0].mxu0 %v2591
      %v2695 = vpop.f32.mrb[0].mxu0
      %v2696 = vadd.f32 0.0, %v2695
      %v2697 = vpop.f32.mrb[0].mxu0
      %v2698 = vpop.f32.mrb[0].mxu0
      %v2699 = vadd.f32 0.0, %v2698
      %v2700 = vpop.f32.mrb[0].mxu0
      %2701 = vmatprep.mubr.bf16.mxu0 0
      %2702 = vmatmul.mubr.bf16.gmra.mrb[0].mxu0 %v2594
      %v2703 = vpop.f32.mrb[0].mxu0
      %v2704 = vadd.f32 0.0, %v2703
      %v2705 = vpop.f32.mrb[0].mxu0
      %v2706 = vpop.f32.mrb[0].mxu0
      %v2707 = vadd.f32 0.0, %v2706
      %v2708 = vpop.f32.mrb[0].mxu0
      %2709 = vmatprep.mubr.bf16.mxu0 0
      %2710 = vmatmul.mubr.bf16.gmra.mrb[0].mxu0 %v2597
      %v2711 = vpop.f32.mrb[0].mxu0
      %v2712 = vadd.f32 0.0, %v2711
      %v2713 = vpop.f32.mrb[0].mxu0
      %v2714 = vpop.f32.mrb[0].mxu0
      %v2715 = vadd.f32 0.0, %v2714
      %v2716 = vpop.f32.mrb[0].mxu0
      %2717 = vmatprep.mubr.bf16.mxu0 0
      %2718 = vmatmul.mubr.bf16.gmra.mrb[0].mxu0 %v2600
      %v2719 = vpop.f32.mrb[0].mxu0
      %v2720 = vadd.f32 0.0, %v2719
      %v2721 = vpop.f32.mrb[0].mxu0
      %v2722 = vpop.f32.mrb[0].mxu0
      %v2723 = vadd.f32 0.0, %v2722
      %v2724 = vpop.f32.mrb[0].mxu0
      %2725 = vmatprep.mubr.bf16.mxu0 0
      %2726 = vmatmul.mubr.bf16.gmra.mrb[0].mxu0 %v2603
      %v2727 = vpop.f32.mrb[0].mxu0
      %v2728 = vadd.f32 0.0, %v2727
      %v2729 = vpop.f32.mrb[0].mxu0
      %v2730 = vpop.f32.mrb[0].mxu0
      %v2731 = vadd.f32 0.0, %v2730
      %v2732 = vpop.f32.mrb[0].mxu0
      %2733 = vmatprep.mubr.bf16.mxu0 0
      %2734 = vmatmul.mubr.bf16.gmra.mrb[0].mxu0 %v2606
      %v2735 = vpop.f32.mrb[0].mxu0
      %v2736 = vadd.f32 0.0, %v2735
      %v2737 = vpop.f32.mrb[0].mxu0
      %v2738 = vpop.f32.mrb[0].mxu0
      %v2739 = vadd.f32 0.0, %v2738
      %v2740 = vpop.f32.mrb[0].mxu0
      %2741 = vmatprep.mubr.bf16.mxu0 0
      %2742 = vmatmul.mubr.bf16.gmra.mrb[0].mxu0 %v2609
      %v2743 = vpop.f32.mrb[0].mxu0
      %v2744 = vadd.f32 0.0, %v2743
      %v2745 = vpop.f32.mrb[0].mxu0
      %v2746 = vpop.f32.mrb[0].mxu0
      %v2747 = vadd.f32 0.0, %v2746
      %v2748 = vpop.f32.mrb[0].mxu0
      %2749 = vmatprep.mubr.bf16.mxu0 0
      %2750 = vmatmul.mubr.bf16.gmra.mrb[0].mxu0 %v2612
      %v2751 = vpop.f32.mrb[0].mxu0
      %v2752 = vadd.f32 0.0, %v2751
      %v2753 = vpop.f32.mrb[0].mxu0
      %v2754 = vpop.f32.mrb[0].mxu0
      %v2755 = vadd.f32 0.0, %v2754
      %v2756 = vpop.f32.mrb[0].mxu0
      %2757 = vmatprep.mubr.bf16.mxu0 0
      %2758 = vmatmul.mubr.bf16.gmra.mrb[0].mxu0 %v2615
      %v2759 = vpop.f32.mrb[0].mxu0
      %v2760 = vadd.f32 0.0, %v2759
      %v2761 = vpop.f32.mrb[0].mxu0
      %v2762 = vpop.f32.mrb[0].mxu0
      %v2763 = vadd.f32 0.0, %v2762
      %v2764 = vpop.f32.mrb[0].mxu0
      %2765 = vmatprep.mubr.bf16.mxu0 0
      %2766 = vmatmul.mubr.bf16.gmra.mrb[0].mxu0 %v2618
      %v2767 = vpop.f32.mrb[0].mxu0
      %v2768 = vadd.f32 0.0, %v2767
      %v2769 = vpop.f32.mrb[0].mxu0
      %v2770 = vpop.f32.mrb[0].mxu0
      %v2771 = vadd.f32 0.0, %v2770
      %v2772 = vpop.f32.mrb[0].mxu0
      %2773 = vmatprep.mubr.bf16.mxu0 0
      %2774 = vmatmul.mubr.bf16.gmra.mrb[0].mxu0 %v2621
      %v2775 = vpop.f32.mrb[0].mxu0
      %v2776 = vadd.f32 0.0, %v2775
      %v2777 = vpop.f32.mrb[0].mxu0
      %v2778 = vpop.f32.mrb[0].mxu0
      %v2779 = vadd.f32 0.0, %v2778
      %v2780 = vpop.f32.mrb[0].mxu0
      %2781 = vmatprep.mubr.bf16.mxu0 0
      %2782 = vmatmul.mubr.bf16.gmra.mrb[0].mxu0 %v2624
      %v2783 = vpop.f32.mrb[0].mxu0
      %v2784 = vadd.f32 0.0, %v2783
      %v2785 = vpop.f32.mrb[0].mxu0
      %v2786 = vpop.f32.mrb[0].mxu0
      %v2787 = vadd.f32 0.0, %v2786
      %v2788 = vpop.f32.mrb[0].mxu0
      %2789 = vdwg.mxu0
      %v2790 = vadd.f32 %v2064, %v2664
      %v2791 = vadd.f32 %v2065, %v2667
      %v2792 = vadd.f32 %v2066, %v2672
      %v2793 = vadd.f32 %v2067, %v2675
      %v2794 = vadd.f32 %v2068, %v2680
      %v2795 = vadd.f32 %v2069, %v2683
      %v2796 = vadd.f32 %v2070, %v2688
      %v2797 = vadd.f32 %v2071, %v2691
      %v2798 = vadd.f32 %v2072, %v2696
      %v2799 = vadd.f32 %v2073, %v2699
      %v2800 = vadd.f32 %v2074, %v2704
      %v2801 = vadd.f32 %v2075, %v2707
      %v2802 = vadd.f32 %v2076, %v2712
      %v2803 = vadd.f32 %v2077, %v2715
      %v2804 = vadd.f32 %v2078, %v2720
      %v2805 = vadd.f32 %v2079, %v2723
      %v2806 = vadd.f32 %v2080, %v2728
      %v2807 = vadd.f32 %v2081, %v2731
      %v2808 = vadd.f32 %v2082, %v2736
      %v2809 = vadd.f32 %v2083, %v2739
      %v2810 = vadd.f32 %v2084, %v2744
      %v2811 = vadd.f32 %v2085, %v2747
      %v2812 = vadd.f32 %v2086, %v2752
      %v2813 = vadd.f32 %v2087, %v2755
      %v2814 = vadd.f32 %v2088, %v2760
      %v2815 = vadd.f32 %v2089, %v2763
      %v2816 = vadd.f32 %v2090, %v2768
      %v2817 = vadd.f32 %v2091, %v2771
      %v2818 = vadd.f32 %v2092, %v2776
      %v2819 = vadd.f32 %v2093, %v2779
      %v2820 = vadd.f32 %v2094, %v2784
      %v2821 = vadd.f32 %v2095, %v2787
      %v2822 = vld [vmem:[%s1737] sm:$0xe]
      %v2823 = vld [vmem:[%s1737 + $0xc] sm:$0xe]
      %v2824 = vld [vmem:[%s1737 + $0x18] sm:$0xe]
      %v2825 = vld [vmem:[%s1737 + $0x24] sm:$0xe]
      %v2826 = vld [vmem:[%s1737 + $0x30] sm:$0xe]
      %v2827 = vld [vmem:[%s1737 + $0x3c] sm:$0xe]
      %v2828 = vld [vmem:[%s1737 + $0x48] sm:$0xe]
      %v2829 = vld [vmem:[%s1737 + $0x54] sm:$0xe]
      %v2830 = vld [vmem:[%s1737 + $0x60] sm:$0xe]
      %v2831 = vld [vmem:[%s1737 + $0x6c] sm:$0xe]
      %v2832 = vld [vmem:[%s1737 + $0x78] sm:$0xe]
      %v2833 = vld [vmem:[%s1737 + $0x84] sm:$0xe]
      %v2834 = vld [vmem:[%s1737 + $0x90] sm:$0xe]
      %v2835 = vld [vmem:[%s1737 + $0x9c] sm:$0xe]
      %v2836 = vld [vmem:[%s1737 + $0xa8] sm:$0xe]
      %v2837 = vld [vmem:[%s1737 + $0xb4] sm:$0xe]
      %v2886 = vrot.slane %v2822, 5
      %v2887 = vrot.slane %v2886, 4
      %v2888 = vrot.slane %v2097, 5
      %v2889 = vsel %vm1327, %v2887, %v2888
      %v2890 = vrot.slane %v2888, 4
      %v2891 = vrot.slane %v2098, 5
      %v2892 = vsel %vm1327, %v2890, %v2891
      %v2893 = vrot.slane %v2823, 5
      %v2894 = vrot.slane %v2893, 4
      %v2895 = vrot.slane %v2100, 5
      %v2896 = vsel %vm1327, %v2894, %v2895
      %v2897 = vrot.slane %v2895, 4
      %v2898 = vrot.slane %v2101, 5
      %v2899 = vsel %vm1327, %v2897, %v2898
      %v2900 = vrot.slane %v2824, 5
      %v2901 = vrot.slane %v2900, 4
      %v2902 = vrot.slane %v2103, 5
      %v2903 = vsel %vm1327, %v2901, %v2902
      %v2904 = vrot.slane %v2902, 4
      %v2905 = vrot.slane %v2104, 5
      %v2906 = vsel %vm1327, %v2904, %v2905
      %v2907 = vrot.slane %v2825, 5
      %v2908 = vrot.slane %v2907, 4
      %v2909 = vrot.slane %v2106, 5
      %v2910 = vsel %vm1327, %v2908, %v2909
      %v2911 = vrot.slane %v2909, 4
      %v2912 = vrot.slane %v2107, 5
      %v2913 = vsel %vm1327, %v2911, %v2912
      %v2914 = vrot.slane %v2826, 5
      %v2915 = vrot.slane %v2914, 4
      %v2916 = vrot.slane %v2109, 5
      %v2917 = vsel %vm1327, %v2915, %v2916
      %v2918 = vrot.slane %v2916, 4
      %v2919 = vrot.slane %v2110, 5
      %v2920 = vsel %vm1327, %v2918, %v2919
      %v2921 = vrot.slane %v2827, 5
      %v2922 = vrot.slane %v2921, 4
      %v2923 = vrot.slane %v2112, 5
      %v2924 = vsel %vm1327, %v2922, %v2923
      %v2925 = vrot.slane %v2923, 4
      %v2926 = vrot.slane %v2113, 5
      %v2927 = vsel %vm1327, %v2925, %v2926
      %v2928 = vrot.slane %v2828, 5
      %v2929 = vrot.slane %v2928, 4
      %v2930 = vrot.slane %v2115, 5
      %v2931 = vsel %vm1327, %v2929, %v2930
      %v2932 = vrot.slane %v2930, 4
      %v2933 = vrot.slane %v2116, 5
      %v2934 = vsel %vm1327, %v2932, %v2933
      %v2935 = vrot.slane %v2829, 5
      %v2936 = vrot.slane %v2935, 4
      %v2937 = vrot.slane %v2118, 5
      %v2938 = vsel %vm1327, %v2936, %v2937
      %v2939 = vrot.slane %v2937, 4
      %v2940 = vrot.slane %v2119, 5
      %v2941 = vsel %vm1327, %v2939, %v2940
      %v2942 = vrot.slane %v2830, 5
      %v2943 = vrot.slane %v2942, 4
      %v2944 = vrot.slane %v2121, 5
      %v2945 = vsel %vm1327, %v2943, %v2944
      %v2946 = vrot.slane %v2944, 4
      %v2947 = vrot.slane %v2122, 5
      %v2948 = vsel %vm1327, %v2946, %v2947
      %v2949 = vrot.slane %v2831, 5
      %v2950 = vrot.slane %v2949, 4
      %v2951 = vrot.slane %v2124, 5
      %v2952 = vsel %vm1327, %v2950, %v2951
      %v2953 = vrot.slane %v2951, 4
      %v2954 = vrot.slane %v2125, 5
      %v2955 = vsel %vm1327, %v2953, %v2954
      %v2956 = vrot.slane %v2832, 5
      %v2957 = vrot.slane %v2956, 4
      %v2958 = vrot.slane %v2127, 5
      %v2959 = vsel %vm1327, %v2957, %v2958
      %v2960 = vrot.slane %v2958, 4
      %v2961 = vrot.slane %v2128, 5
      %v2962 = vsel %vm1327, %v2960, %v2961
      %v2963 = vrot.slane %v2833, 5
      %v2964 = vrot.slane %v2963, 4
      %v2965 = vrot.slane %v2130, 5
      %v2966 = vsel %vm1327, %v2964, %v2965
      %v2967 = vrot.slane %v2965, 4
      %v2968 = vrot.slane %v2131, 5
      %v2969 = vsel %vm1327, %v2967, %v2968
      %v2970 = vrot.slane %v2834, 5
      %v2971 = vrot.slane %v2970, 4
      %v2972 = vrot.slane %v2133, 5
      %v2973 = vsel %vm1327, %v2971, %v2972
      %v2974 = vrot.slane %v2972, 4
      %v2975 = vrot.slane %v2134, 5
      %v2976 = vsel %vm1327, %v2974, %v2975
      %v2977 = vrot.slane %v2835, 5
      %v2978 = vrot.slane %v2977, 4
      %v2979 = vrot.slane %v2136, 5
      %v2980 = vsel %vm1327, %v2978, %v2979
      %v2981 = vrot.slane %v2979, 4
      %v2982 = vrot.slane %v2137, 5
      %v2983 = vsel %vm1327, %v2981, %v2982
      %v2984 = vrot.slane %v2836, 5
      %v2985 = vrot.slane %v2984, 4
      %v2986 = vrot.slane %v2139, 5
      %v2987 = vsel %vm1327, %v2985, %v2986
      %v2988 = vrot.slane %v2986, 4
      %v2989 = vrot.slane %v2140, 5
      %v2990 = vsel %vm1327, %v2988, %v2989
      %v2991 = vrot.slane %v2837, 5
      %v2992 = vrot.slane %v2991, 4
      %v2993 = vrot.slane %v2142, 5
      %v2994 = vsel %vm1327, %v2992, %v2993
      %v2995 = vrot.slane %v2993, 4
      %v2996 = vrot.slane %v2143, 5
      %v2997 = vsel %vm1327, %v2995, %v2996
      %s2998 = scalar_lea.vmem %s251, 10
      %v2999 = vld [vmem:[%s2998] sm:$0x3]
      %v3000 = vunpack.c.l.b16 %v2889
      %v3001 = vunpack.c.l.b16 %v2892
      %v3002 = vunpack.c.l.b16 %v2896
      %v3003 = vunpack.c.l.b16 %v2899
      %v3004 = vunpack.c.l.b16 %v2903
      %v3005 = vunpack.c.l.b16 %v2906
      %v3006 = vunpack.c.l.b16 %v2910
      %v3007 = vunpack.c.l.b16 %v2913
      %v3008 = vunpack.c.l.b16 %v2917
      %v3009 = vunpack.c.l.b16 %v2920
      %v3010 = vunpack.c.l.b16 %v2924
      %v3011 = vunpack.c.l.b16 %v2927
      %v3012 = vunpack.c.l.b16 %v2931
      %v3013 = vunpack.c.l.b16 %v2934
      %v3014 = vunpack.c.l.b16 %v2938
      %v3015 = vunpack.c.l.b16 %v2941
      %v3016 = vunpack.c.l.b16 %v2945
      %v3017 = vunpack.c.l.b16 %v2948
      %v3018 = vunpack.c.l.b16 %v2952
      %v3019 = vunpack.c.l.b16 %v2955
      %v3020 = vunpack.c.l.b16 %v2959
      %v3021 = vunpack.c.l.b16 %v2962
      %v3022 = vunpack.c.l.b16 %v2966
      %v3023 = vunpack.c.l.b16 %v2969
      %v3024 = vunpack.c.l.b16 %v2973
      %v3025 = vunpack.c.l.b16 %v2976
      %v3026 = vunpack.c.l.b16 %v2980
      %v3027 = vunpack.c.l.b16 %v2983
      %v3028 = vunpack.c.l.b16 %v2987
      %v3029 = vunpack.c.l.b16 %v2990
      %v3030 = vunpack.c.l.b16 %v2994
      %v3031 = vunpack.c.l.b16 %v2997
      %v3032 = vpack.c.b16 %v3001, %v3000
      %v3033 = vpack.c.b16 %v3003, %v3002
      %v3034 = vpack.c.b16 %v3005, %v3004
      %v3035 = vpack.c.b16 %v3007, %v3006
      %v3036 = vpack.c.b16 %v3009, %v3008
      %v3037 = vpack.c.b16 %v3011, %v3010
      %v3038 = vpack.c.b16 %v3013, %v3012
      %v3039 = vpack.c.b16 %v3015, %v3014
      %v3040 = vpack.c.b16 %v3017, %v3016
      %v3041 = vpack.c.b16 %v3019, %v3018
      %v3042 = vpack.c.b16 %v3021, %v3020
      %v3043 = vpack.c.b16 %v3023, %v3022
      %v3044 = vpack.c.b16 %v3025, %v3024
      %v3045 = vpack.c.b16 %v3027, %v3026
      %v3046 = vpack.c.b16 %v3029, %v3028
      %v3047 = vpack.c.b16 %v3031, %v3030
      %v3049 = vsel %vm771, %v3032, 0
      %v3052 = vsel %vm771, %v3033, 0
      %v3055 = vsel %vm771, %v3034, 0
      %v3058 = vsel %vm771, %v3035, 0
      %v3061 = vsel %vm771, %v3036, 0
      %v3064 = vsel %vm771, %v3037, 0
      %v3067 = vsel %vm771, %v3038, 0
      %v3070 = vsel %vm771, %v3039, 0
      %v3073 = vsel %vm771, %v3040, 0
      %v3076 = vsel %vm771, %v3041, 0
      %v3079 = vsel %vm771, %v3042, 0
      %v3082 = vsel %vm771, %v3043, 0
      %v3085 = vsel %vm771, %v3044, 0
      %v3088 = vsel %vm771, %v3045, 0
      %v3091 = vsel %vm771, %v3046, 0
      %v3094 = vsel %vm771, %v3047, 0
      %v3097 = vsel %vm820, %v2999, 0
      %3099 = vmatprep.subr.bf16.mxu0 0
      %3100 = vmatpush1.bf16.msra.mxu0 %v3097
      %3101 = vmatprep.subr.bf16.mxu0 0
      %3102 = vmatpush1.bf16.msra.mxu0 0
      %3103 = vmatprep.subr.bf16.mxu0 0
      %3104 = vmatpush1.bf16.msra.mxu0 0
      %3105 = vmatprep.subr.bf16.mxu0 0
      %3106 = vmatpush1.bf16.msra.mxu0 0
      %3107 = vmatprep.subr.bf16.mxu0 0
      %3108 = vmatpush1.bf16.msra.mxu0 0
      %3109 = vmatprep.subr.bf16.mxu0 0
      %3110 = vmatpush1.bf16.msra.mxu0 0
      %3111 = vmatprep.subr.bf16.mxu0 0
      %3112 = vmatpush1.bf16.msra.mxu0 0
      %3113 = vmatprep.subr.bf16.mxu0 0
      %3114 = vmatpush1.bf16.msra.mxu0 0
      %3115 = vmatprep.subr.bf16.mxu0 0
      %3116 = vmatpush1.bf16.msra.mxu0 0
      %3117 = vmatprep.subr.bf16.mxu0 0
      %3118 = vmatpush1.bf16.msra.mxu0 0
      %3119 = vmatprep.subr.bf16.mxu0 0
      %3120 = vmatpush1.bf16.msra.mxu0 0
      %3121 = vmatprep.subr.bf16.mxu0 0
      %3122 = vmatpush1.bf16.msra.mxu0 0
      %3123 = vmatprep.subr.bf16.mxu0 0
      %3124 = vmatpush1.bf16.msra.mxu0 0
      %3125 = vmatprep.subr.bf16.mxu0 0
      %3126 = vmatpush1.bf16.msra.mxu0 0
      %3127 = vmatprep.subr.bf16.mxu0 0
      %3128 = vmatpush1.bf16.msra.mxu0 0
      %3129 = vmatprep.subr.bf16.mxu0 0
      %3130 = vmatpush1.bf16.msra.mxu0 0
      %3131 = vmatprep.mubr.bf16.mxu0 0
      %3132 = vmatmul.mubr.bf16.gmra.mrb[0].mxu0 %v3049
      %v3133 = vpop.f32.mrb[0].mxu0
      %v3134 = vadd.f32 0.0, %v3133
      %v3135 = vpop.f32.mrb[0].mxu0
      %v3136 = vpop.f32.mrb[0].mxu0
      %v3137 = vadd.f32 0.0, %v3136
      %v3138 = vpop.f32.mrb[0].mxu0
      %3139 = vmatprep.mubr.bf16.mxu0 0
      %3140 = vmatmul.mubr.bf16.gmra.mrb[0].mxu0 %v3052
      %v3141 = vpop.f32.mrb[0].mxu0
      %v3142 = vadd.f32 0.0, %v3141
      %v3143 = vpop.f32.mrb[0].mxu0
      %v3144 = vpop.f32.mrb[0].mxu0
      %v3145 = vadd.f32 0.0, %v3144
      %v3146 = vpop.f32.mrb[0].mxu0
      %3147 = vmatprep.mubr.bf16.mxu0 0
      %3148 = vmatmul.mubr.bf16.gmra.mrb[0].mxu0 %v3055
      %v3149 = vpop.f32.mrb[0].mxu0
      %v3150 = vadd.f32 0.0, %v3149
      %v3151 = vpop.f32.mrb[0].mxu0
      %v3152 = vpop.f32.mrb[0].mxu0
      %v3153 = vadd.f32 0.0, %v3152
      %v3154 = vpop.f32.mrb[0].mxu0
      %3155 = vmatprep.mubr.bf16.mxu0 0
      %3156 = vmatmul.mubr.bf16.gmra.mrb[0].mxu0 %v3058
      %v3157 = vpop.f32.mrb[0].mxu0
      %v3158 = vadd.f32 0.0, %v3157
      %v3159 = vpop.f32.mrb[0].mxu0
      %v3160 = vpop.f32.mrb[0].mxu0
      %v3161 = vadd.f32 0.0, %v3160
      %v3162 = vpop.f32.mrb[0].mxu0
      %3163 = vmatprep.mubr.bf16.mxu0 0
      %3164 = vmatmul.mubr.bf16.gmra.mrb[0].mxu0 %v3061
      %v3165 = vpop.f32.mrb[0].mxu0
      %v3166 = vadd.f32 0.0, %v3165
      %v3167 = vpop.f32.mrb[0].mxu0
      %v3168 = vpop.f32.mrb[0].mxu0
      %v3169 = vadd.f32 0.0, %v3168
      %v3170 = vpop.f32.mrb[0].mxu0
      %3171 = vmatprep.mubr.bf16.mxu0 0
      %3172 = vmatmul.mubr.bf16.gmra.mrb[0].mxu0 %v3064
      %v3173 = vpop.f32.mrb[0].mxu0
      %v3174 = vadd.f32 0.0, %v3173
      %v3175 = vpop.f32.mrb[0].mxu0
      %v3176 = vpop.f32.mrb[0].mxu0
      %v3177 = vadd.f32 0.0, %v3176
      %v3178 = vpop.f32.mrb[0].mxu0
      %3179 = vmatprep.mubr.bf16.mxu0 0
      %3180 = vmatmul.mubr.bf16.gmra.mrb[0].mxu0 %v3067
      %v3181 = vpop.f32.mrb[0].mxu0
      %v3182 = vadd.f32 0.0, %v3181
      %v3183 = vpop.f32.mrb[0].mxu0
      %v3184 = vpop.f32.mrb[0].mxu0
      %v3185 = vadd.f32 0.0, %v3184
      %v3186 = vpop.f32.mrb[0].mxu0
      %3187 = vmatprep.mubr.bf16.mxu0 0
      %3188 = vmatmul.mubr.bf16.gmra.mrb[0].mxu0 %v3070
      %v3189 = vpop.f32.mrb[0].mxu0
      %v3190 = vadd.f32 0.0, %v3189
      %v3191 = vpop.f32.mrb[0].mxu0
      %v3192 = vpop.f32.mrb[0].mxu0
      %v3193 = vadd.f32 0.0, %v3192
      %v3194 = vpop.f32.mrb[0].mxu0
      %3195 = vmatprep.mubr.bf16.mxu0 0
      %3196 = vmatmul.mubr.bf16.gmra.mrb[0].mxu0 %v3073
      %v3197 = vpop.f32.mrb[0].mxu0
      %v3198 = vadd.f32 0.0, %v3197
      %v3199 = vpop.f32.mrb[0].mxu0
      %v3200 = vpop.f32.mrb[0].mxu0
      %v3201 = vadd.f32 0.0, %v3200
      %v3202 = vpop.f32.mrb[0].mxu0
      %3203 = vmatprep.mubr.bf16.mxu0 0
      %3204 = vmatmul.mubr.bf16.gmra.mrb[0].mxu0 %v3076
      %v3205 = vpop.f32.mrb[0].mxu0
      %v3206 = vadd.f32 0.0, %v3205
      %v3207 = vpop.f32.mrb[0].mxu0
      %v3208 = vpop.f32.mrb[0].mxu0
      %v3209 = vadd.f32 0.0, %v3208
      %v3210 = vpop.f32.mrb[0].mxu0
      %3211 = vmatprep.mubr.bf16.mxu0 0
      %3212 = vmatmul.mubr.bf16.gmra.mrb[0].mxu0 %v3079
      %v3213 = vpop.f32.mrb[0].mxu0
      %v3214 = vadd.f32 0.0, %v3213
      %v3215 = vpop.f32.mrb[0].mxu0
      %v3216 = vpop.f32.mrb[0].mxu0
      %v3217 = vadd.f32 0.0, %v3216
      %v3218 = vpop.f32.mrb[0].mxu0
      %3219 = vmatprep.mubr.bf16.mxu0 0
      %3220 = vmatmul.mubr.bf16.gmra.mrb[0].mxu0 %v3082
      %v3221 = vpop.f32.mrb[0].mxu0
      %v3222 = vadd.f32 0.0, %v3221
      %v3223 = vpop.f32.mrb[0].mxu0
      %v3224 = vpop.f32.mrb[0].mxu0
      %v3225 = vadd.f32 0.0, %v3224
      %v3226 = vpop.f32.mrb[0].mxu0
      %3227 = vmatprep.mubr.bf16.mxu0 0
      %3228 = vmatmul.mubr.bf16.gmra.mrb[0].mxu0 %v3085
      %v3229 = vpop.f32.mrb[0].mxu0
      %v3230 = vadd.f32 0.0, %v3229
      %v3231 = vpop.f32.mrb[0].mxu0
      %v3232 = vpop.f32.mrb[0].mxu0
      %v3233 = vadd.f32 0.0, %v3232
      %v3234 = vpop.f32.mrb[0].mxu0
      %3235 = vmatprep.mubr.bf16.mxu0 0
      %3236 = vmatmul.mubr.bf16.gmra.mrb[0].mxu0 %v3088
      %v3237 = vpop.f32.mrb[0].mxu0
      %v3238 = vadd.f32 0.0, %v3237
      %v3239 = vpop.f32.mrb[0].mxu0
      %v3240 = vpop.f32.mrb[0].mxu0
      %v3241 = vadd.f32 0.0, %v3240
      %v3242 = vpop.f32.mrb[0].mxu0
      %3243 = vmatprep.mubr.bf16.mxu0 0
      %3244 = vmatmul.mubr.bf16.gmra.mrb[0].mxu0 %v3091
      %v3245 = vpop.f32.mrb[0].mxu0
      %v3246 = vadd.f32 0.0, %v3245
      %v3247 = vpop.f32.mrb[0].mxu0
      %v3248 = vpop.f32.mrb[0].mxu0
      %v3249 = vadd.f32 0.0, %v3248
      %v3250 = vpop.f32.mrb[0].mxu0
      %3251 = vmatprep.mubr.bf16.mxu0 0
      %3252 = vmatmul.mubr.bf16.gmra.mrb[0].mxu0 %v3094
      %v3253 = vpop.f32.mrb[0].mxu0
      %v3254 = vadd.f32 0.0, %v3253
      %v3255 = vpop.f32.mrb[0].mxu0
      %v3256 = vpop.f32.mrb[0].mxu0
      %v3257 = vadd.f32 0.0, %v3256
      %v3258 = vpop.f32.mrb[0].mxu0
      %3259 = vdwg.mxu0
      %v3260 = vadd.f32 %v2790, %v3134
      %v3261 = vadd.f32 %v2791, %v3137
      %v3262 = vadd.f32 %v2792, %v3142
      %v3263 = vadd.f32 %v2793, %v3145
      %v3264 = vadd.f32 %v2794, %v3150
      %v3265 = vadd.f32 %v2795, %v3153
      %v3266 = vadd.f32 %v2796, %v3158
      %v3267 = vadd.f32 %v2797, %v3161
      %v3268 = vadd.f32 %v2798, %v3166
      %v3269 = vadd.f32 %v2799, %v3169
      %v3270 = vadd.f32 %v2800, %v3174
      %v3271 = vadd.f32 %v2801, %v3177
      %v3272 = vadd.f32 %v2802, %v3182
      %v3273 = vadd.f32 %v2803, %v3185
      %v3274 = vadd.f32 %v2804, %v3190
      %v3275 = vadd.f32 %v2805, %v3193
      %v3276 = vadd.f32 %v2806, %v3198
      %v3277 = vadd.f32 %v2807, %v3201
      %v3278 = vadd.f32 %v2808, %v3206
      %v3279 = vadd.f32 %v2809, %v3209
      %v3280 = vadd.f32 %v2810, %v3214
      %v3281 = vadd.f32 %v2811, %v3217
      %v3282 = vadd.f32 %v2812, %v3222
      %v3283 = vadd.f32 %v2813, %v3225
      %v3284 = vadd.f32 %v2814, %v3230
      %v3285 = vadd.f32 %v2815, %v3233
      %v3286 = vadd.f32 %v2816, %v3238
      %v3287 = vadd.f32 %v2817, %v3241
      %v3288 = vadd.f32 %v2818, %v3246
      %v3289 = vadd.f32 %v2819, %v3249
      %v3290 = vadd.f32 %v2820, %v3254
      %v3291 = vadd.f32 %v2821, %v3257
      %s3292 = sadd.s32 %s281, 2
      %s3293 = smul.u32 %s3292, 3
      %s3294 = smul.addr %s3293, 4
      %s3295 = scalar_lea.vmem %s247, %s3294
      %v3296 = vld [vmem:[%s3295] sm:$0xf]
      %v3297 = vld [vmem:[%s3295 + $0x4] sm:$0xf]
      %v3298 = vld [vmem:[%s3295 + $0xc] sm:$0xf]
      %v3299 = vld [vmem:[%s3295 + $0x10] sm:$0xf]
      %v3300 = vld [vmem:[%s3295 + $0x18] sm:$0xf]
      %v3301 = vld [vmem:[%s3295 + $0x1c] sm:$0xf]
      %v3302 = vld [vmem:[%s3295 + $0x24] sm:$0xf]
      %v3303 = vld [vmem:[%s3295 + $0x28] sm:$0xf]
      %v3304 = vld [vmem:[%s3295 + $0x30] sm:$0xf]
      %v3305 = vld [vmem:[%s3295 + $0x34] sm:$0xf]
      %v3306 = vld [vmem:[%s3295 + $0x3c] sm:$0xf]
      %v3307 = vld [vmem:[%s3295 + $0x40] sm:$0xf]
      %v3308 = vld [vmem:[%s3295 + $0x48] sm:$0xf]
      %v3309 = vld [vmem:[%s3295 + $0x4c] sm:$0xf]
      %v3310 = vld [vmem:[%s3295 + $0x54] sm:$0xf]
      %v3311 = vld [vmem:[%s3295 + $0x58] sm:$0xf]
      %v3312 = vld [vmem:[%s3295 + $0x60] sm:$0xf]
      %v3313 = vld [vmem:[%s3295 + $0x64] sm:$0xf]
      %v3314 = vld [vmem:[%s3295 + $0x6c] sm:$0xf]
      %v3315 = vld [vmem:[%s3295 + $0x70] sm:$0xf]
      %v3316 = vld [vmem:[%s3295 + $0x78] sm:$0xf]
      %v3317 = vld [vmem:[%s3295 + $0x7c] sm:$0xf]
      %v3318 = vld [vmem:[%s3295 + $0x84] sm:$0xf]
      %v3319 = vld [vmem:[%s3295 + $0x88] sm:$0xf]
      %v3320 = vld [vmem:[%s3295 + $0x90] sm:$0xf]
      %v3321 = vld [vmem:[%s3295 + $0x94] sm:$0xf]
      %v3322 = vld [vmem:[%s3295 + $0x9c] sm:$0xf]
      %v3323 = vld [vmem:[%s3295 + $0xa0] sm:$0xf]
      %v3324 = vld [vmem:[%s3295 + $0xa8] sm:$0xf]
      %v3325 = vld [vmem:[%s3295 + $0xac] sm:$0xf]
      %v3326 = vld [vmem:[%s3295 + $0xb4] sm:$0xf]
      %v3327 = vld [vmem:[%s3295 + $0xb8] sm:$0xf]
      %s3328 = scalar_lea.vmem %s251, 12
      %v3329 = vld [vmem:[%s3328] sm:$0x3]
      %v3362 = vunpack.c.l.b16 %v3296
      %v3363 = vunpack.c.l.b16 %v3297
      %v3364 = vunpack.c.l.b16 %v3298
      %v3365 = vunpack.c.l.b16 %v3299
      %v3366 = vunpack.c.l.b16 %v3300
      %v3367 = vunpack.c.l.b16 %v3301
      %v3368 = vunpack.c.l.b16 %v3302
      %v3369 = vunpack.c.l.b16 %v3303
      %v3370 = vunpack.c.l.b16 %v3304
      %v3371 = vunpack.c.l.b16 %v3305
      %v3372 = vunpack.c.l.b16 %v3306
      %v3373 = vunpack.c.l.b16 %v3307
      %v3374 = vunpack.c.l.b16 %v3308
      %v3375 = vunpack.c.l.b16 %v3309
      %v3376 = vunpack.c.l.b16 %v3310
      %v3377 = vunpack.c.l.b16 %v3311
      %v3378 = vunpack.c.l.b16 %v3312
      %v3379 = vunpack.c.l.b16 %v3313
      %v3380 = vunpack.c.l.b16 %v3314
      %v3381 = vunpack.c.l.b16 %v3315
      %v3382 = vunpack.c.l.b16 %v3316
      %v3383 = vunpack.c.l.b16 %v3317
      %v3384 = vunpack.c.l.b16 %v3318
      %v3385 = vunpack.c.l.b16 %v3319
      %v3386 = vunpack.c.l.b16 %v3320
      %v3387 = vunpack.c.l.b16 %v3321
      %v3388 = vunpack.c.l.b16 %v3322
      %v3389 = vunpack.c.l.b16 %v3323
      %v3390 = vunpack.c.l.b16 %v3324
      %v3391 = vunpack.c.l.b16 %v3325
      %v3392 = vunpack.c.l.b16 %v3326
      %v3393 = vunpack.c.l.b16 %v3327
      %v3394 = vpack.c.b16 %v3363, %v3362
      %v3395 = vpack.c.b16 %v3365, %v3364
      %v3396 = vpack.c.b16 %v3367, %v3366
      %v3397 = vpack.c.b16 %v3369, %v3368
      %v3398 = vpack.c.b16 %v3371, %v3370
      %v3399 = vpack.c.b16 %v3373, %v3372
      %v3400 = vpack.c.b16 %v3375, %v3374
      %v3401 = vpack.c.b16 %v3377, %v3376
      %v3402 = vpack.c.b16 %v3379, %v3378
      %v3403 = vpack.c.b16 %v3381, %v3380
      %v3404 = vpack.c.b16 %v3383, %v3382
      %v3405 = vpack.c.b16 %v3385, %v3384
      %v3406 = vpack.c.b16 %v3387, %v3386
      %v3407 = vpack.c.b16 %v3389, %v3388
      %v3408 = vpack.c.b16 %v3391, %v3390
      %v3409 = vpack.c.b16 %v3393, %v3392
      %v3411 = vsel %vm771, %v3394, 0
      %v3414 = vsel %vm771, %v3395, 0
      %v3417 = vsel %vm771, %v3396, 0
      %v3420 = vsel %vm771, %v3397, 0
      %v3423 = vsel %vm771, %v3398, 0
      %v3426 = vsel %vm771, %v3399, 0
      %v3429 = vsel %vm771, %v3400, 0
      %v3432 = vsel %vm771, %v3401, 0
      %v3435 = vsel %vm771, %v3402, 0
      %v3438 = vsel %vm771, %v3403, 0
      %v3441 = vsel %vm771, %v3404, 0
      %v3444 = vsel %vm771, %v3405, 0
      %v3447 = vsel %vm771, %v3406, 0
      %v3450 = vsel %vm771, %v3407, 0
      %v3453 = vsel %vm771, %v3408, 0
      %v3456 = vsel %vm771, %v3409, 0
      %v3459 = vsel %vm820, %v3329, 0
      %3461 = vmatprep.subr.bf16.mxu0 0
      %3462 = vmatpush1.bf16.msra.mxu0 %v3459
      %3463 = vmatprep.subr.bf16.mxu0 0
      %3464 = vmatpush1.bf16.msra.mxu0 0
      %3465 = vmatprep.subr.bf16.mxu0 0
      %3466 = vmatpush1.bf16.msra.mxu0 0
      %3467 = vmatprep.subr.bf16.mxu0 0
      %3468 = vmatpush1.bf16.msra.mxu0 0
      %3469 = vmatprep.subr.bf16.mxu0 0
      %3470 = vmatpush1.bf16.msra.mxu0 0
      %3471 = vmatprep.subr.bf16.mxu0 0
      %3472 = vmatpush1.bf16.msra.mxu0 0
      %3473 = vmatprep.subr.bf16.mxu0 0
      %3474 = vmatpush1.bf16.msra.mxu0 0
      %3475 = vmatprep.subr.bf16.mxu0 0
      %3476 = vmatpush1.bf16.msra.mxu0 0
      %3477 = vmatprep.subr.bf16.mxu0 0
      %3478 = vmatpush1.bf16.msra.mxu0 0
      %3479 = vmatprep.subr.bf16.mxu0 0
      %3480 = vmatpush1.bf16.msra.mxu0 0
      %3481 = vmatprep.subr.bf16.mxu0 0
      %3482 = vmatpush1.bf16.msra.mxu0 0
      %3483 = vmatprep.subr.bf16.mxu0 0
      %3484 = vmatpush1.bf16.msra.mxu0 0
      %3485 = vmatprep.subr.bf16.mxu0 0
      %3486 = vmatpush1.bf16.msra.mxu0 0
      %3487 = vmatprep.subr.bf16.mxu0 0
      %3488 = vmatpush1.bf16.msra.mxu0 0
      %3489 = vmatprep.subr.bf16.mxu0 0
      %3490 = vmatpush1.bf16.msra.mxu0 0
      %3491 = vmatprep.subr.bf16.mxu0 0
      %3492 = vmatpush1.bf16.msra.mxu0 0
      %3493 = vmatprep.mubr.bf16.mxu0 0
      %3494 = vmatmul.mubr.bf16.gmra.mrb[0].mxu0 %v3411
      %v3495 = vpop.f32.mrb[0].mxu0
      %v3496 = vadd.f32 0.0, %v3495
      %v3497 = vpop.f32.mrb[0].mxu0
      %v3498 = vpop.f32.mrb[0].mxu0
      %v3499 = vadd.f32 0.0, %v3498
      %v3500 = vpop.f32.mrb[0].mxu0
      %3501 = vmatprep.mubr.bf16.mxu0 0
      %3502 = vmatmul.mubr.bf16.gmra.mrb[0].mxu0 %v3414
      %v3503 = vpop.f32.mrb[0].mxu0
      %v3504 = vadd.f32 0.0, %v3503
      %v3505 = vpop.f32.mrb[0].mxu0
      %v3506 = vpop.f32.mrb[0].mxu0
      %v3507 = vadd.f32 0.0, %v3506
      %v3508 = vpop.f32.mrb[0].mxu0
      %3509 = vmatprep.mubr.bf16.mxu0 0
      %3510 = vmatmul.mubr.bf16.gmra.mrb[0].mxu0 %v3417
      %v3511 = vpop.f32.mrb[0].mxu0
      %v3512 = vadd.f32 0.0, %v3511
      %v3513 = vpop.f32.mrb[0].mxu0
      %v3514 = vpop.f32.mrb[0].mxu0
      %v3515 = vadd.f32 0.0, %v3514
      %v3516 = vpop.f32.mrb[0].mxu0
      %3517 = vmatprep.mubr.bf16.mxu0 0
      %3518 = vmatmul.mubr.bf16.gmra.mrb[0].mxu0 %v3420
      %v3519 = vpop.f32.mrb[0].mxu0
      %v3520 = vadd.f32 0.0, %v3519
      %v3521 = vpop.f32.mrb[0].mxu0
      %v3522 = vpop.f32.mrb[0].mxu0
      %v3523 = vadd.f32 0.0, %v3522
      %v3524 = vpop.f32.mrb[0].mxu0
      %3525 = vmatprep.mubr.bf16.mxu0 0
      %3526 = vmatmul.mubr.bf16.gmra.mrb[0].mxu0 %v3423
      %v3527 = vpop.f32.mrb[0].mxu0
      %v3528 = vadd.f32 0.0, %v3527
      %v3529 = vpop.f32.mrb[0].mxu0
      %v3530 = vpop.f32.mrb[0].mxu0
      %v3531 = vadd.f32 0.0, %v3530
      %v3532 = vpop.f32.mrb[0].mxu0
      %3533 = vmatprep.mubr.bf16.mxu0 0
      %3534 = vmatmul.mubr.bf16.gmra.mrb[0].mxu0 %v3426
      %v3535 = vpop.f32.mrb[0].mxu0
      %v3536 = vadd.f32 0.0, %v3535
      %v3537 = vpop.f32.mrb[0].mxu0
      %v3538 = vpop.f32.mrb[0].mxu0
      %v3539 = vadd.f32 0.0, %v3538
      %v3540 = vpop.f32.mrb[0].mxu0
      %3541 = vmatprep.mubr.bf16.mxu0 0
      %3542 = vmatmul.mubr.bf16.gmra.mrb[0].mxu0 %v3429
      %v3543 = vpop.f32.mrb[0].mxu0
      %v3544 = vadd.f32 0.0, %v3543
      %v3545 = vpop.f32.mrb[0].mxu0
      %v3546 = vpop.f32.mrb[0].mxu0
      %v3547 = vadd.f32 0.0, %v3546
      %v3548 = vpop.f32.mrb[0].mxu0
      %3549 = vmatprep.mubr.bf16.mxu0 0
      %3550 = vmatmul.mubr.bf16.gmra.mrb[0].mxu0 %v3432
      %v3551 = vpop.f32.mrb[0].mxu0
      %v3552 = vadd.f32 0.0, %v3551
      %v3553 = vpop.f32.mrb[0].mxu0
      %v3554 = vpop.f32.mrb[0].mxu0
      %v3555 = vadd.f32 0.0, %v3554
      %v3556 = vpop.f32.mrb[0].mxu0
      %3557 = vmatprep.mubr.bf16.mxu0 0
      %3558 = vmatmul.mubr.bf16.gmra.mrb[0].mxu0 %v3435
      %v3559 = vpop.f32.mrb[0].mxu0
      %v3560 = vadd.f32 0.0, %v3559
      %v3561 = vpop.f32.mrb[0].mxu0
      %v3562 = vpop.f32.mrb[0].mxu0
      %v3563 = vadd.f32 0.0, %v3562
      %v3564 = vpop.f32.mrb[0].mxu0
      %3565 = vmatprep.mubr.bf16.mxu0 0
      %3566 = vmatmul.mubr.bf16.gmra.mrb[0].mxu0 %v3438
      %v3567 = vpop.f32.mrb[0].mxu0
      %v3568 = vadd.f32 0.0, %v3567
      %v3569 = vpop.f32.mrb[0].mxu0
      %v3570 = vpop.f32.mrb[0].mxu0
      %v3571 = vadd.f32 0.0, %v3570
      %v3572 = vpop.f32.mrb[0].mxu0
      %3573 = vmatprep.mubr.bf16.mxu0 0
      %3574 = vmatmul.mubr.bf16.gmra.mrb[0].mxu0 %v3441
      %v3575 = vpop.f32.mrb[0].mxu0
      %v3576 = vadd.f32 0.0, %v3575
      %v3577 = vpop.f32.mrb[0].mxu0
      %v3578 = vpop.f32.mrb[0].mxu0
      %v3579 = vadd.f32 0.0, %v3578
      %v3580 = vpop.f32.mrb[0].mxu0
      %3581 = vmatprep.mubr.bf16.mxu0 0
      %3582 = vmatmul.mubr.bf16.gmra.mrb[0].mxu0 %v3444
      %v3583 = vpop.f32.mrb[0].mxu0
      %v3584 = vadd.f32 0.0, %v3583
      %v3585 = vpop.f32.mrb[0].mxu0
      %v3586 = vpop.f32.mrb[0].mxu0
      %v3587 = vadd.f32 0.0, %v3586
      %v3588 = vpop.f32.mrb[0].mxu0
      %3589 = vmatprep.mubr.bf16.mxu0 0
      %3590 = vmatmul.mubr.bf16.gmra.mrb[0].mxu0 %v3447
      %v3591 = vpop.f32.mrb[0].mxu0
      %v3592 = vadd.f32 0.0, %v3591
      %v3593 = vpop.f32.mrb[0].mxu0
      %v3594 = vpop.f32.mrb[0].mxu0
      %v3595 = vadd.f32 0.0, %v3594
      %v3596 = vpop.f32.mrb[0].mxu0
      %3597 = vmatprep.mubr.bf16.mxu0 0
      %3598 = vmatmul.mubr.bf16.gmra.mrb[0].mxu0 %v3450
      %v3599 = vpop.f32.mrb[0].mxu0
      %v3600 = vadd.f32 0.0, %v3599
      %v3601 = vpop.f32.mrb[0].mxu0
      %v3602 = vpop.f32.mrb[0].mxu0
      %v3603 = vadd.f32 0.0, %v3602
      %v3604 = vpop.f32.mrb[0].mxu0
      %3605 = vmatprep.mubr.bf16.mxu0 0
      %3606 = vmatmul.mubr.bf16.gmra.mrb[0].mxu0 %v3453
      %v3607 = vpop.f32.mrb[0].mxu0
      %v3608 = vadd.f32 0.0, %v3607
      %v3609 = vpop.f32.mrb[0].mxu0
      %v3610 = vpop.f32.mrb[0].mxu0
      %v3611 = vadd.f32 0.0, %v3610
      %v3612 = vpop.f32.mrb[0].mxu0
      %3613 = vmatprep.mubr.bf16.mxu0 0
      %3614 = vmatmul.mubr.bf16.gmra.mrb[0].mxu0 %v3456
      %v3615 = vpop.f32.mrb[0].mxu0
      %v3616 = vadd.f32 0.0, %v3615
      %v3617 = vpop.f32.mrb[0].mxu0
      %v3618 = vpop.f32.mrb[0].mxu0
      %v3619 = vadd.f32 0.0, %v3618
      %v3620 = vpop.f32.mrb[0].mxu0
      %3621 = vdwg.mxu0
      %v3622 = vadd.f32 %v3260, %v3496
      %v3623 = vadd.f32 %v3261, %v3499
      %v3624 = vadd.f32 %v3262, %v3504
      %v3625 = vadd.f32 %v3263, %v3507
      %v3626 = vadd.f32 %v3264, %v3512
      %v3627 = vadd.f32 %v3265, %v3515
      %v3628 = vadd.f32 %v3266, %v3520
      %v3629 = vadd.f32 %v3267, %v3523
      %v3630 = vadd.f32 %v3268, %v3528
      %v3631 = vadd.f32 %v3269, %v3531
      %v3632 = vadd.f32 %v3270, %v3536
      %v3633 = vadd.f32 %v3271, %v3539
      %v3634 = vadd.f32 %v3272, %v3544
      %v3635 = vadd.f32 %v3273, %v3547
      %v3636 = vadd.f32 %v3274, %v3552
      %v3637 = vadd.f32 %v3275, %v3555
      %v3638 = vadd.f32 %v3276, %v3560
      %v3639 = vadd.f32 %v3277, %v3563
      %v3640 = vadd.f32 %v3278, %v3568
      %v3641 = vadd.f32 %v3279, %v3571
      %v3642 = vadd.f32 %v3280, %v3576
      %v3643 = vadd.f32 %v3281, %v3579
      %v3644 = vadd.f32 %v3282, %v3584
      %v3645 = vadd.f32 %v3283, %v3587
      %v3646 = vadd.f32 %v3284, %v3592
      %v3647 = vadd.f32 %v3285, %v3595
      %v3648 = vadd.f32 %v3286, %v3600
      %v3649 = vadd.f32 %v3287, %v3603
      %v3650 = vadd.f32 %v3288, %v3608
      %v3651 = vadd.f32 %v3289, %v3611
      %v3652 = vadd.f32 %v3290, %v3616
      %v3653 = vadd.f32 %v3291, %v3619
      %v3654 = vld [vmem:[%s3295] sm:$0xf]
      %v3655 = vld [vmem:[%s3295 + $0x4] sm:$0xf]
      %v3656 = vld [vmem:[%s3295 + $0x8] sm:$0x1]
      %v3657 = vld [vmem:[%s3295 + $0xc] sm:$0xf]
      %v3658 = vld [vmem:[%s3295 + $0x10] sm:$0xf]
      %v3659 = vld [vmem:[%s3295 + $0x14] sm:$0x1]
      %v3660 = vld [vmem:[%s3295 + $0x18] sm:$0xf]
      %v3661 = vld [vmem:[%s3295 + $0x1c] sm:$0xf]
      %v3662 = vld [vmem:[%s3295 + $0x20] sm:$0x1]
      %v3663 = vld [vmem:[%s3295 + $0x24] sm:$0xf]
      %v3664 = vld [vmem:[%s3295 + $0x28] sm:$0xf]
      %v3665 = vld [vmem:[%s3295 + $0x2c] sm:$0x1]
      %v3666 = vld [vmem:[%s3295 + $0x30] sm:$0xf]
      %v3667 = vld [vmem:[%s3295 + $0x34] sm:$0xf]
      %v3668 = vld [vmem:[%s3295 + $0x38] sm:$0x1]
      %v3669 = vld [vmem:[%s3295 + $0x3c] sm:$0xf]
      %v3670 = vld [vmem:[%s3295 + $0x40] sm:$0xf]
      %v3671 = vld [vmem:[%s3295 + $0x44] sm:$0x1]
      %v3672 = vld [vmem:[%s3295 + $0x48] sm:$0xf]
      %v3673 = vld [vmem:[%s3295 + $0x4c] sm:$0xf]
      %v3674 = vld [vmem:[%s3295 + $0x50] sm:$0x1]
      %v3675 = vld [vmem:[%s3295 + $0x54] sm:$0xf]
      %v3676 = vld [vmem:[%s3295 + $0x58] sm:$0xf]
      %v3677 = vld [vmem:[%s3295 + $0x5c] sm:$0x1]
      %v3678 = vld [vmem:[%s3295 + $0x60] sm:$0xf]
      %v3679 = vld [vmem:[%s3295 + $0x64] sm:$0xf]
      %v3680 = vld [vmem:[%s3295 + $0x68] sm:$0x1]
      %v3681 = vld [vmem:[%s3295 + $0x6c] sm:$0xf]
      %v3682 = vld [vmem:[%s3295 + $0x70] sm:$0xf]
      %v3683 = vld [vmem:[%s3295 + $0x74] sm:$0x1]
      %v3684 = vld [vmem:[%s3295 + $0x78] sm:$0xf]
      %v3685 = vld [vmem:[%s3295 + $0x7c] sm:$0xf]
      %v3686 = vld [vmem:[%s3295 + $0x80] sm:$0x1]
      %v3687 = vld [vmem:[%s3295 + $0x84] sm:$0xf]
      %v3688 = vld [vmem:[%s3295 + $0x88] sm:$0xf]
      %v3689 = vld [vmem:[%s3295 + $0x8c] sm:$0x1]
      %v3690 = vld [vmem:[%s3295 + $0x90] sm:$0xf]
      %v3691 = vld [vmem:[%s3295 + $0x94] sm:$0xf]
      %v3692 = vld [vmem:[%s3295 + $0x98] sm:$0x1]
      %v3693 = vld [vmem:[%s3295 + $0x9c] sm:$0xf]
      %v3694 = vld [vmem:[%s3295 + $0xa0] sm:$0xf]
      %v3695 = vld [vmem:[%s3295 + $0xa4] sm:$0x1]
      %v3696 = vld [vmem:[%s3295 + $0xa8] sm:$0xf]
      %v3697 = vld [vmem:[%s3295 + $0xac] sm:$0xf]
      %v3698 = vld [vmem:[%s3295 + $0xb0] sm:$0x1]
      %v3699 = vld [vmem:[%s3295 + $0xb4] sm:$0xf]
      %v3700 = vld [vmem:[%s3295 + $0xb8] sm:$0xf]
      %v3701 = vld [vmem:[%s3295 + $0xbc] sm:$0x1]
      %v3703 = vshrl.u32 %v3654, 16
      %v3705 = vrot.slane %v3703, 4
      %v3706 = vshll.u32 %v3654, 16
      %v3708 = vrot.slane %v3706, 5
      %v3709 = vor.u32 %v3705, %v3708
      %v3710 = vrot.slane %v3709, 4
      %v3712 = vshll.u32 %v3655, 16
      %v3714 = vrot.slane %v3712, 5
      %v3715 = vsel %vm336, %v3710, %v3714
      %v3716 = vshrl.u32 %v3655, 16
      %v3718 = vrot.slane %v3716, 4
      %v3719 = vor.u32 %v3718, %v3714
      %v3720 = vrot.slane %v3719, 4
      %v3722 = vshll.u32 %v3656, 16
      %v3724 = vrot.slane %v3722, 5
      %v3725 = vsel %vm336, %v3720, %v3724
      %v3727 = vshrl.u32 %v3657, 16
      %v3729 = vrot.slane %v3727, 4
      %v3730 = vshll.u32 %v3657, 16
      %v3732 = vrot.slane %v3730, 5
      %v3733 = vor.u32 %v3729, %v3732
      %v3734 = vrot.slane %v3733, 4
      %v3736 = vshll.u32 %v3658, 16
      %v3738 = vrot.slane %v3736, 5
      %v3739 = vsel %vm336, %v3734, %v3738
      %v3740 = vshrl.u32 %v3658, 16
      %v3742 = vrot.slane %v3740, 4
      %v3743 = vor.u32 %v3742, %v3738
      %v3744 = vrot.slane %v3743, 4
      %v3746 = vshll.u32 %v3659, 16
      %v3748 = vrot.slane %v3746, 5
      %v3749 = vsel %vm336, %v3744, %v3748
      %v3751 = vshrl.u32 %v3660, 16
      %v3753 = vrot.slane %v3751, 4
      %v3754 = vshll.u32 %v3660, 16
      %v3756 = vrot.slane %v3754, 5
      %v3757 = vor.u32 %v3753, %v3756
      %v3758 = vrot.slane %v3757, 4
      %v3760 = vshll.u32 %v3661, 16
      %v3762 = vrot.slane %v3760, 5
      %v3763 = vsel %vm336, %v3758, %v3762
      %v3764 = vshrl.u32 %v3661, 16
      %v3766 = vrot.slane %v3764, 4
      %v3767 = vor.u32 %v3766, %v3762
      %v3768 = vrot.slane %v3767, 4
      %v3770 = vshll.u32 %v3662, 16
      %v3772 = vrot.slane %v3770, 5
      %v3773 = vsel %vm336, %v3768, %v3772
      %v3775 = vshrl.u32 %v3663, 16
      %v3777 = vrot.slane %v3775, 4
      %v3778 = vshll.u32 %v3663, 16
      %v3780 = vrot.slane %v3778, 5
      %v3781 = vor.u32 %v3777, %v3780
      %v3782 = vrot.slane %v3781, 4
      %v3784 = vshll.u32 %v3664, 16
      %v3786 = vrot.slane %v3784, 5
      %v3787 = vsel %vm336, %v3782, %v3786
      %v3788 = vshrl.u32 %v3664, 16
      %v3790 = vrot.slane %v3788, 4
      %v3791 = vor.u32 %v3790, %v3786
      %v3792 = vrot.slane %v3791, 4
      %v3794 = vshll.u32 %v3665, 16
      %v3796 = vrot.slane %v3794, 5
      %v3797 = vsel %vm336, %v3792, %v3796
      %v3799 = vshrl.u32 %v3666, 16
      %v3801 = vrot.slane %v3799, 4
      %v3802 = vshll.u32 %v3666, 16
      %v3804 = vrot.slane %v3802, 5
      %v3805 = vor.u32 %v3801, %v3804
      %v3806 = vrot.slane %v3805, 4
      %v3808 = vshll.u32 %v3667, 16
      %v3810 = vrot.slane %v3808, 5
      %v3811 = vsel %vm336, %v3806, %v3810
      %v3812 = vshrl.u32 %v3667, 16
      %v3814 = vrot.slane %v3812, 4
      %v3815 = vor.u32 %v3814, %v3810
      %v3816 = vrot.slane %v3815, 4
      %v3818 = vshll.u32 %v3668, 16
      %v3820 = vrot.slane %v3818, 5
      %v3821 = vsel %vm336, %v3816, %v3820
      %v3823 = vshrl.u32 %v3669, 16
      %v3825 = vrot.slane %v3823, 4
      %v3826 = vshll.u32 %v3669, 16
      %v3828 = vrot.slane %v3826, 5
      %v3829 = vor.u32 %v3825, %v3828
      %v3830 = vrot.slane %v3829, 4
      %v3832 = vshll.u32 %v3670, 16
      %v3834 = vrot.slane %v3832, 5
      %v3835 = vsel %vm336, %v3830, %v3834
      %v3836 = vshrl.u32 %v3670, 16
      %v3838 = vrot.slane %v3836, 4
      %v3839 = vor.u32 %v3838, %v3834
      %v3840 = vrot.slane %v3839, 4
      %v3842 = vshll.u32 %v3671, 16
      %v3844 = vrot.slane %v3842, 5
      %v3845 = vsel %vm336, %v3840, %v3844
      %v3847 = vshrl.u32 %v3672, 16
      %v3849 = vrot.slane %v3847, 4
      %v3850 = vshll.u32 %v3672, 16
      %v3852 = vrot.slane %v3850, 5
      %v3853 = vor.u32 %v3849, %v3852
      %v3854 = vrot.slane %v3853, 4
      %v3856 = vshll.u32 %v3673, 16
      %v3858 = vrot.slane %v3856, 5
      %v3859 = vsel %vm336, %v3854, %v3858
      %v3860 = vshrl.u32 %v3673, 16
      %v3862 = vrot.slane %v3860, 4
      %v3863 = vor.u32 %v3862, %v3858
      %v3864 = vrot.slane %v3863, 4
      %v3866 = vshll.u32 %v3674, 16
      %v3868 = vrot.slane %v3866, 5
      %v3869 = vsel %vm336, %v3864, %v3868
      %v3871 = vshrl.u32 %v3675, 16
      %v3873 = vrot.slane %v3871, 4
      %v3874 = vshll.u32 %v3675, 16
      %v3876 = vrot.slane %v3874, 5
      %v3877 = vor.u32 %v3873, %v3876
      %v3878 = vrot.slane %v3877, 4
      %v3880 = vshll.u32 %v3676, 16
      %v3882 = vrot.slane %v3880, 5
      %v3883 = vsel %vm336, %v3878, %v3882
      %v3884 = vshrl.u32 %v3676, 16
      %v3886 = vrot.slane %v3884, 4
      %v3887 = vor.u32 %v3886, %v3882
      %v3888 = vrot.slane %v3887, 4
      %v3890 = vshll.u32 %v3677, 16
      %v3892 = vrot.slane %v3890, 5
      %v3893 = vsel %vm336, %v3888, %v3892
      %v3895 = vshrl.u32 %v3678, 16
      %v3897 = vrot.slane %v3895, 4
      %v3898 = vshll.u32 %v3678, 16
      %v3900 = vrot.slane %v3898, 5
      %v3901 = vor.u32 %v3897, %v3900
      %v3902 = vrot.slane %v3901, 4
      %v3904 = vshll.u32 %v3679, 16
      %v3906 = vrot.slane %v3904, 5
      %v3907 = vsel %vm336, %v3902, %v3906
      %v3908 = vshrl.u32 %v3679, 16
      %v3910 = vrot.slane %v3908, 4
      %v3911 = vor.u32 %v3910, %v3906
      %v3912 = vrot.slane %v3911, 4
      %v3914 = vshll.u32 %v3680, 16
      %v3916 = vrot.slane %v3914, 5
      %v3917 = vsel %vm336, %v3912, %v3916
      %v3919 = vshrl.u32 %v3681, 16
      %v3921 = vrot.slane %v3919, 4
      %v3922 = vshll.u32 %v3681, 16
      %v3924 = vrot.slane %v3922, 5
      %v3925 = vor.u32 %v3921, %v3924
      %v3926 = vrot.slane %v3925, 4
      %v3928 = vshll.u32 %v3682, 16
      %v3930 = vrot.slane %v3928, 5
      %v3931 = vsel %vm336, %v3926, %v3930
      %v3932 = vshrl.u32 %v3682, 16
      %v3934 = vrot.slane %v3932, 4
      %v3935 = vor.u32 %v3934, %v3930
      %v3936 = vrot.slane %v3935, 4
      %v3938 = vshll.u32 %v3683, 16
      %v3940 = vrot.slane %v3938, 5
      %v3941 = vsel %vm336, %v3936, %v3940
      %v3943 = vshrl.u32 %v3684, 16
      %v3945 = vrot.slane %v3943, 4
      %v3946 = vshll.u32 %v3684, 16
      %v3948 = vrot.slane %v3946, 5
      %v3949 = vor.u32 %v3945, %v3948
      %v3950 = vrot.slane %v3949, 4
      %v3952 = vshll.u32 %v3685, 16
      %v3954 = vrot.slane %v3952, 5
      %v3955 = vsel %vm336, %v3950, %v3954
      %v3956 = vshrl.u32 %v3685, 16
      %v3958 = vrot.slane %v3956, 4
      %v3959 = vor.u32 %v3958, %v3954
      %v3960 = vrot.slane %v3959, 4
      %v3962 = vshll.u32 %v3686, 16
      %v3964 = vrot.slane %v3962, 5
      %v3965 = vsel %vm336, %v3960, %v3964
      %v3967 = vshrl.u32 %v3687, 16
      %v3969 = vrot.slane %v3967, 4
      %v3970 = vshll.u32 %v3687, 16
      %v3972 = vrot.slane %v3970, 5
      %v3973 = vor.u32 %v3969, %v3972
      %v3974 = vrot.slane %v3973, 4
      %v3976 = vshll.u32 %v3688, 16
      %v3978 = vrot.slane %v3976, 5
      %v3979 = vsel %vm336, %v3974, %v3978
      %v3980 = vshrl.u32 %v3688, 16
      %v3982 = vrot.slane %v3980, 4
      %v3983 = vor.u32 %v3982, %v3978
      %v3984 = vrot.slane %v3983, 4
      %v3986 = vshll.u32 %v3689, 16
      %v3988 = vrot.slane %v3986, 5
      %v3989 = vsel %vm336, %v3984, %v3988
      %v3991 = vshrl.u32 %v3690, 16
      %v3993 = vrot.slane %v3991, 4
      %v3994 = vshll.u32 %v3690, 16
      %v3996 = vrot.slane %v3994, 5
      %v3997 = vor.u32 %v3993, %v3996
      %v3998 = vrot.slane %v3997, 4
      %v4000 = vshll.u32 %v3691, 16
      %v4002 = vrot.slane %v4000, 5
      %v4003 = vsel %vm336, %v3998, %v4002
      %v4004 = vshrl.u32 %v3691, 16
      %v4006 = vrot.slane %v4004, 4
      %v4007 = vor.u32 %v4006, %v4002
      %v4008 = vrot.slane %v4007, 4
      %v4010 = vshll.u32 %v3692, 16
      %v4012 = vrot.slane %v4010, 5
      %v4013 = vsel %vm336, %v4008, %v4012
      %v4015 = vshrl.u32 %v3693, 16
      %v4017 = vrot.slane %v4015, 4
      %v4018 = vshll.u32 %v3693, 16
      %v4020 = vrot.slane %v4018, 5
      %v4021 = vor.u32 %v4017, %v4020
      %v4022 = vrot.slane %v4021, 4
      %v4024 = vshll.u32 %v3694, 16
      %v4026 = vrot.slane %v4024, 5
      %v4027 = vsel %vm336, %v4022, %v4026
      %v4028 = vshrl.u32 %v3694, 16
      %v4030 = vrot.slane %v4028, 4
      %v4031 = vor.u32 %v4030, %v4026
      %v4032 = vrot.slane %v4031, 4
      %v4034 = vshll.u32 %v3695, 16
      %v4036 = vrot.slane %v4034, 5
      %v4037 = vsel %vm336, %v4032, %v4036
      %v4039 = vshrl.u32 %v3696, 16
      %v4041 = vrot.slane %v4039, 4
      %v4042 = vshll.u32 %v3696, 16
      %v4044 = vrot.slane %v4042, 5
      %v4045 = vor.u32 %v4041, %v4044
      %v4046 = vrot.slane %v4045, 4
      %v4048 = vshll.u32 %v3697, 16
      %v4050 = vrot.slane %v4048, 5
      %v4051 = vsel %vm336, %v4046, %v4050
      %v4052 = vshrl.u32 %v3697, 16
      %v4054 = vrot.slane %v4052, 4
      %v4055 = vor.u32 %v4054, %v4050
      %v4056 = vrot.slane %v4055, 4
      %v4058 = vshll.u32 %v3698, 16
      %v4060 = vrot.slane %v4058, 5
      %v4061 = vsel %vm336, %v4056, %v4060
      %v4063 = vshrl.u32 %v3699, 16
      %v4065 = vrot.slane %v4063, 4
      %v4066 = vshll.u32 %v3699, 16
      %v4068 = vrot.slane %v4066, 5
      %v4069 = vor.u32 %v4065, %v4068
      %v4070 = vrot.slane %v4069, 4
      %v4072 = vshll.u32 %v3700, 16
      %v4074 = vrot.slane %v4072, 5
      %v4075 = vsel %vm336, %v4070, %v4074
      %v4076 = vshrl.u32 %v3700, 16
      %v4078 = vrot.slane %v4076, 4
      %v4079 = vor.u32 %v4078, %v4074
      %v4080 = vrot.slane %v4079, 4
      %v4082 = vshll.u32 %v3701, 16
      %v4084 = vrot.slane %v4082, 5
      %v4085 = vsel %vm336, %v4080, %v4084
      %s4086 = scalar_lea.vmem %s251, 14
      %v4087 = vld [vmem:[%s4086] sm:$0x3]
      %v4088 = vunpack.c.l.b16 %v3715
      %v4089 = vunpack.c.l.b16 %v3725
      %v4090 = vunpack.c.l.b16 %v3739
      %v4091 = vunpack.c.l.b16 %v3749
      %v4092 = vunpack.c.l.b16 %v3763
      %v4093 = vunpack.c.l.b16 %v3773
      %v4094 = vunpack.c.l.b16 %v3787
      %v4095 = vunpack.c.l.b16 %v3797
      %v4096 = vunpack.c.l.b16 %v3811
      %v4097 = vunpack.c.l.b16 %v3821
      %v4098 = vunpack.c.l.b16 %v3835
      %v4099 = vunpack.c.l.b16 %v3845
      %v4100 = vunpack.c.l.b16 %v3859
      %v4101 = vunpack.c.l.b16 %v3869
      %v4102 = vunpack.c.l.b16 %v3883
      %v4103 = vunpack.c.l.b16 %v3893
      %v4104 = vunpack.c.l.b16 %v3907
      %v4105 = vunpack.c.l.b16 %v3917
      %v4106 = vunpack.c.l.b16 %v3931
      %v4107 = vunpack.c.l.b16 %v3941
      %v4108 = vunpack.c.l.b16 %v3955
      %v4109 = vunpack.c.l.b16 %v3965
      %v4110 = vunpack.c.l.b16 %v3979
      %v4111 = vunpack.c.l.b16 %v3989
      %v4112 = vunpack.c.l.b16 %v4003
      %v4113 = vunpack.c.l.b16 %v4013
      %v4114 = vunpack.c.l.b16 %v4027
      %v4115 = vunpack.c.l.b16 %v4037
      %v4116 = vunpack.c.l.b16 %v4051
      %v4117 = vunpack.c.l.b16 %v4061
      %v4118 = vunpack.c.l.b16 %v4075
      %v4119 = vunpack.c.l.b16 %v4085
      %v4120 = vpack.c.b16 %v4089, %v4088
      %v4121 = vpack.c.b16 %v4091, %v4090
      %v4122 = vpack.c.b16 %v4093, %v4092
      %v4123 = vpack.c.b16 %v4095, %v4094
      %v4124 = vpack.c.b16 %v4097, %v4096
      %v4125 = vpack.c.b16 %v4099, %v4098
      %v4126 = vpack.c.b16 %v4101, %v4100
      %v4127 = vpack.c.b16 %v4103, %v4102
      %v4128 = vpack.c.b16 %v4105, %v4104
      %v4129 = vpack.c.b16 %v4107, %v4106
      %v4130 = vpack.c.b16 %v4109, %v4108
      %v4131 = vpack.c.b16 %v4111, %v4110
      %v4132 = vpack.c.b16 %v4113, %v4112
      %v4133 = vpack.c.b16 %v4115, %v4114
      %v4134 = vpack.c.b16 %v4117, %v4116
      %v4135 = vpack.c.b16 %v4119, %v4118
      %v4137 = vsel %vm771, %v4120, 0
      %v4140 = vsel %vm771, %v4121, 0
      %v4143 = vsel %vm771, %v4122, 0
      %v4146 = vsel %vm771, %v4123, 0
      %v4149 = vsel %vm771, %v4124, 0
      %v4152 = vsel %vm771, %v4125, 0
      %v4155 = vsel %vm771, %v4126, 0
      %v4158 = vsel %vm771, %v4127, 0
      %v4161 = vsel %vm771, %v4128, 0
      %v4164 = vsel %vm771, %v4129, 0
      %v4167 = vsel %vm771, %v4130, 0
      %v4170 = vsel %vm771, %v4131, 0
      %v4173 = vsel %vm771, %v4132, 0
      %v4176 = vsel %vm771, %v4133, 0
      %v4179 = vsel %vm771, %v4134, 0
      %v4182 = vsel %vm771, %v4135, 0
      %v4185 = vsel %vm820, %v4087, 0
      %4187 = vmatprep.subr.bf16.mxu0 0
      %4188 = vmatpush1.bf16.msra.mxu0 %v4185
      %4189 = vmatprep.subr.bf16.mxu0 0
      %4190 = vmatpush1.bf16.msra.mxu0 0
      %4191 = vmatprep.subr.bf16.mxu0 0
      %4192 = vmatpush1.bf16.msra.mxu0 0
      %4193 = vmatprep.subr.bf16.mxu0 0
      %4194 = vmatpush1.bf16.msra.mxu0 0
      %4195 = vmatprep.subr.bf16.mxu0 0
      %4196 = vmatpush1.bf16.msra.mxu0 0
      %4197 = vmatprep.subr.bf16.mxu0 0
      %4198 = vmatpush1.bf16.msra.mxu0 0
      %4199 = vmatprep.subr.bf16.mxu0 0
      %4200 = vmatpush1.bf16.msra.mxu0 0
      %4201 = vmatprep.subr.bf16.mxu0 0
      %4202 = vmatpush1.bf16.msra.mxu0 0
      %4203 = vmatprep.subr.bf16.mxu0 0
      %4204 = vmatpush1.bf16.msra.mxu0 0
      %4205 = vmatprep.subr.bf16.mxu0 0
      %4206 = vmatpush1.bf16.msra.mxu0 0
      %4207 = vmatprep.subr.bf16.mxu0 0
      %4208 = vmatpush1.bf16.msra.mxu0 0
      %4209 = vmatprep.subr.bf16.mxu0 0
      %4210 = vmatpush1.bf16.msra.mxu0 0
      %4211 = vmatprep.subr.bf16.mxu0 0
      %4212 = vmatpush1.bf16.msra.mxu0 0
      %4213 = vmatprep.subr.bf16.mxu0 0
      %4214 = vmatpush1.bf16.msra.mxu0 0
      %4215 = vmatprep.subr.bf16.mxu0 0
      %4216 = vmatpush1.bf16.msra.mxu0 0
      %4217 = vmatprep.subr.bf16.mxu0 0
      %4218 = vmatpush1.bf16.msra.mxu0 0
      %4219 = vmatprep.mubr.bf16.mxu0 0
      %4220 = vmatmul.mubr.bf16.gmra.mrb[0].mxu0 %v4137
      %v4221 = vpop.f32.mrb[0].mxu0
      %v4222 = vadd.f32 0.0, %v4221
      %v4223 = vpop.f32.mrb[0].mxu0
      %v4224 = vpop.f32.mrb[0].mxu0
      %v4225 = vadd.f32 0.0, %v4224
      %v4226 = vpop.f32.mrb[0].mxu0
      %4227 = vmatprep.mubr.bf16.mxu0 0
      %4228 = vmatmul.mubr.bf16.gmra.mrb[0].mxu0 %v4140
      %v4229 = vpop.f32.mrb[0].mxu0
      %v4230 = vadd.f32 0.0, %v4229
      %v4231 = vpop.f32.mrb[0].mxu0
      %v4232 = vpop.f32.mrb[0].mxu0
      %v4233 = vadd.f32 0.0, %v4232
      %v4234 = vpop.f32.mrb[0].mxu0
      %4235 = vmatprep.mubr.bf16.mxu0 0
      %4236 = vmatmul.mubr.bf16.gmra.mrb[0].mxu0 %v4143
      %v4237 = vpop.f32.mrb[0].mxu0
      %v4238 = vadd.f32 0.0, %v4237
      %v4239 = vpop.f32.mrb[0].mxu0
      %v4240 = vpop.f32.mrb[0].mxu0
      %v4241 = vadd.f32 0.0, %v4240
      %v4242 = vpop.f32.mrb[0].mxu0
      %4243 = vmatprep.mubr.bf16.mxu0 0
      %4244 = vmatmul.mubr.bf16.gmra.mrb[0].mxu0 %v4146
      %v4245 = vpop.f32.mrb[0].mxu0
      %v4246 = vadd.f32 0.0, %v4245
      %v4247 = vpop.f32.mrb[0].mxu0
      %v4248 = vpop.f32.mrb[0].mxu0
      %v4249 = vadd.f32 0.0, %v4248
      %v4250 = vpop.f32.mrb[0].mxu0
      %4251 = vmatprep.mubr.bf16.mxu0 0
      %4252 = vmatmul.mubr.bf16.gmra.mrb[0].mxu0 %v4149
      %v4253 = vpop.f32.mrb[0].mxu0
      %v4254 = vadd.f32 0.0, %v4253
      %v4255 = vpop.f32.mrb[0].mxu0
      %v4256 = vpop.f32.mrb[0].mxu0
      %v4257 = vadd.f32 0.0, %v4256
      %v4258 = vpop.f32.mrb[0].mxu0
      %4259 = vmatprep.mubr.bf16.mxu0 0
      %4260 = vmatmul.mubr.bf16.gmra.mrb[0].mxu0 %v4152
      %v4261 = vpop.f32.mrb[0].mxu0
      %v4262 = vadd.f32 0.0, %v4261
      %v4263 = vpop.f32.mrb[0].mxu0
      %v4264 = vpop.f32.mrb[0].mxu0
      %v4265 = vadd.f32 0.0, %v4264
      %v4266 = vpop.f32.mrb[0].mxu0
      %4267 = vmatprep.mubr.bf16.mxu0 0
      %4268 = vmatmul.mubr.bf16.gmra.mrb[0].mxu0 %v4155
      %v4269 = vpop.f32.mrb[0].mxu0
      %v4270 = vadd.f32 0.0, %v4269
      %v4271 = vpop.f32.mrb[0].mxu0
      %v4272 = vpop.f32.mrb[0].mxu0
      %v4273 = vadd.f32 0.0, %v4272
      %v4274 = vpop.f32.mrb[0].mxu0
      %4275 = vmatprep.mubr.bf16.mxu0 0
      %4276 = vmatmul.mubr.bf16.gmra.mrb[0].mxu0 %v4158
      %v4277 = vpop.f32.mrb[0].mxu0
      %v4278 = vadd.f32 0.0, %v4277
      %v4279 = vpop.f32.mrb[0].mxu0
      %v4280 = vpop.f32.mrb[0].mxu0
      %v4281 = vadd.f32 0.0, %v4280
      %v4282 = vpop.f32.mrb[0].mxu0
      %4283 = vmatprep.mubr.bf16.mxu0 0
      %4284 = vmatmul.mubr.bf16.gmra.mrb[0].mxu0 %v4161
      %v4285 = vpop.f32.mrb[0].mxu0
      %v4286 = vadd.f32 0.0, %v4285
      %v4287 = vpop.f32.mrb[0].mxu0
      %v4288 = vpop.f32.mrb[0].mxu0
      %v4289 = vadd.f32 0.0, %v4288
      %v4290 = vpop.f32.mrb[0].mxu0
      %4291 = vmatprep.mubr.bf16.mxu0 0
      %4292 = vmatmul.mubr.bf16.gmra.mrb[0].mxu0 %v4164
      %v4293 = vpop.f32.mrb[0].mxu0
      %v4294 = vadd.f32 0.0, %v4293
      %v4295 = vpop.f32.mrb[0].mxu0
      %v4296 = vpop.f32.mrb[0].mxu0
      %v4297 = vadd.f32 0.0, %v4296
      %v4298 = vpop.f32.mrb[0].mxu0
      %4299 = vmatprep.mubr.bf16.mxu0 0
      %4300 = vmatmul.mubr.bf16.gmra.mrb[0].mxu0 %v4167
      %v4301 = vpop.f32.mrb[0].mxu0
      %v4302 = vadd.f32 0.0, %v4301
      %v4303 = vpop.f32.mrb[0].mxu0
      %v4304 = vpop.f32.mrb[0].mxu0
      %v4305 = vadd.f32 0.0, %v4304
      %v4306 = vpop.f32.mrb[0].mxu0
      %4307 = vmatprep.mubr.bf16.mxu0 0
      %4308 = vmatmul.mubr.bf16.gmra.mrb[0].mxu0 %v4170
      %v4309 = vpop.f32.mrb[0].mxu0
      %v4310 = vadd.f32 0.0, %v4309
      %v4311 = vpop.f32.mrb[0].mxu0
      %v4312 = vpop.f32.mrb[0].mxu0
      %v4313 = vadd.f32 0.0, %v4312
      %v4314 = vpop.f32.mrb[0].mxu0
      %4315 = vmatprep.mubr.bf16.mxu0 0
      %4316 = vmatmul.mubr.bf16.gmra.mrb[0].mxu0 %v4173
      %v4317 = vpop.f32.mrb[0].mxu0
      %v4318 = vadd.f32 0.0, %v4317
      %v4319 = vpop.f32.mrb[0].mxu0
      %v4320 = vpop.f32.mrb[0].mxu0
      %v4321 = vadd.f32 0.0, %v4320
      %v4322 = vpop.f32.mrb[0].mxu0
      %4323 = vmatprep.mubr.bf16.mxu0 0
      %4324 = vmatmul.mubr.bf16.gmra.mrb[0].mxu0 %v4176
      %v4325 = vpop.f32.mrb[0].mxu0
      %v4326 = vadd.f32 0.0, %v4325
      %v4327 = vpop.f32.mrb[0].mxu0
      %v4328 = vpop.f32.mrb[0].mxu0
      %v4329 = vadd.f32 0.0, %v4328
      %v4330 = vpop.f32.mrb[0].mxu0
      %4331 = vmatprep.mubr.bf16.mxu0 0
      %4332 = vmatmul.mubr.bf16.gmra.mrb[0].mxu0 %v4179
      %v4333 = vpop.f32.mrb[0].mxu0
      %v4334 = vadd.f32 0.0, %v4333
      %v4335 = vpop.f32.mrb[0].mxu0
      %v4336 = vpop.f32.mrb[0].mxu0
      %v4337 = vadd.f32 0.0, %v4336
      %v4338 = vpop.f32.mrb[0].mxu0
      %4339 = vmatprep.mubr.bf16.mxu0 0
      %4340 = vmatmul.mubr.bf16.gmra.mrb[0].mxu0 %v4182
      %v4341 = vpop.f32.mrb[0].mxu0
      %v4342 = vadd.f32 0.0, %v4341
      %v4343 = vpop.f32.mrb[0].mxu0
      %v4344 = vpop.f32.mrb[0].mxu0
      %v4345 = vadd.f32 0.0, %v4344
      %v4346 = vpop.f32.mrb[0].mxu0
      %4347 = vdwg.mxu0
      %v4348 = vadd.f32 %v3622, %v4222
      %v4349 = vadd.f32 %v3623, %v4225
      %v4350 = vadd.f32 %v3624, %v4230
      %v4351 = vadd.f32 %v3625, %v4233
      %v4352 = vadd.f32 %v3626, %v4238
      %v4353 = vadd.f32 %v3627, %v4241
      %v4354 = vadd.f32 %v3628, %v4246
      %v4355 = vadd.f32 %v3629, %v4249
      %v4356 = vadd.f32 %v3630, %v4254
      %v4357 = vadd.f32 %v3631, %v4257
      %v4358 = vadd.f32 %v3632, %v4262
      %v4359 = vadd.f32 %v3633, %v4265
      %v4360 = vadd.f32 %v3634, %v4270
      %v4361 = vadd.f32 %v3635, %v4273
      %v4362 = vadd.f32 %v3636, %v4278
      %v4363 = vadd.f32 %v3637, %v4281
      %v4364 = vadd.f32 %v3638, %v4286
      %v4365 = vadd.f32 %v3639, %v4289
      %v4366 = vadd.f32 %v3640, %v4294
      %v4367 = vadd.f32 %v3641, %v4297
      %v4368 = vadd.f32 %v3642, %v4302
      %v4369 = vadd.f32 %v3643, %v4305
      %v4370 = vadd.f32 %v3644, %v4310
      %v4371 = vadd.f32 %v3645, %v4313
      %v4372 = vadd.f32 %v3646, %v4318
      %v4373 = vadd.f32 %v3647, %v4321
      %v4374 = vadd.f32 %v3648, %v4326
      %v4375 = vadd.f32 %v3649, %v4329
      %v4376 = vadd.f32 %v3650, %v4334
      %v4377 = vadd.f32 %v3651, %v4337
      %v4378 = vadd.f32 %v3652, %v4342
      %v4379 = vadd.f32 %v3653, %v4345
      %v4380 = vld [vmem:[%s3295] sm:$0xe]
      %v4381 = vld [vmem:[%s3295 + $0xc] sm:$0xe]
      %v4382 = vld [vmem:[%s3295 + $0x18] sm:$0xe]
      %v4383 = vld [vmem:[%s3295 + $0x24] sm:$0xe]
      %v4384 = vld [vmem:[%s3295 + $0x30] sm:$0xe]
      %v4385 = vld [vmem:[%s3295 + $0x3c] sm:$0xe]
      %v4386 = vld [vmem:[%s3295 + $0x48] sm:$0xe]
      %v4387 = vld [vmem:[%s3295 + $0x54] sm:$0xe]
      %v4388 = vld [vmem:[%s3295 + $0x60] sm:$0xe]
      %v4389 = vld [vmem:[%s3295 + $0x6c] sm:$0xe]
      %v4390 = vld [vmem:[%s3295 + $0x78] sm:$0xe]
      %v4391 = vld [vmem:[%s3295 + $0x84] sm:$0xe]
      %v4392 = vld [vmem:[%s3295 + $0x90] sm:$0xe]
      %v4393 = vld [vmem:[%s3295 + $0x9c] sm:$0xe]
      %v4394 = vld [vmem:[%s3295 + $0xa8] sm:$0xe]
      %v4395 = vld [vmem:[%s3295 + $0xb4] sm:$0xe]
      %v4444 = vrot.slane %v4380, 5
      %v4445 = vrot.slane %v4444, 4
      %v4446 = vrot.slane %v3655, 5
      %v4447 = vsel %vm1327, %v4445, %v4446
      %v4448 = vrot.slane %v4446, 4
      %v4449 = vrot.slane %v3656, 5
      %v4450 = vsel %vm1327, %v4448, %v4449
      %v4451 = vrot.slane %v4381, 5
      %v4452 = vrot.slane %v4451, 4
      %v4453 = vrot.slane %v3658, 5
      %v4454 = vsel %vm1327, %v4452, %v4453
      %v4455 = vrot.slane %v4453, 4
      %v4456 = vrot.slane %v3659, 5
      %v4457 = vsel %vm1327, %v4455, %v4456
      %v4458 = vrot.slane %v4382, 5
      %v4459 = vrot.slane %v4458, 4
      %v4460 = vrot.slane %v3661, 5
      %v4461 = vsel %vm1327, %v4459, %v4460
      %v4462 = vrot.slane %v4460, 4
      %v4463 = vrot.slane %v3662, 5
      %v4464 = vsel %vm1327, %v4462, %v4463
      %v4465 = vrot.slane %v4383, 5
      %v4466 = vrot.slane %v4465, 4
      %v4467 = vrot.slane %v3664, 5
      %v4468 = vsel %vm1327, %v4466, %v4467
      %v4469 = vrot.slane %v4467, 4
      %v4470 = vrot.slane %v3665, 5
      %v4471 = vsel %vm1327, %v4469, %v4470
      %v4472 = vrot.slane %v4384, 5
      %v4473 = vrot.slane %v4472, 4
      %v4474 = vrot.slane %v3667, 5
      %v4475 = vsel %vm1327, %v4473, %v4474
      %v4476 = vrot.slane %v4474, 4
      %v4477 = vrot.slane %v3668, 5
      %v4478 = vsel %vm1327, %v4476, %v4477
      %v4479 = vrot.slane %v4385, 5
      %v4480 = vrot.slane %v4479, 4
      %v4481 = vrot.slane %v3670, 5
      %v4482 = vsel %vm1327, %v4480, %v4481
      %v4483 = vrot.slane %v4481, 4
      %v4484 = vrot.slane %v3671, 5
      %v4485 = vsel %vm1327, %v4483, %v4484
      %v4486 = vrot.slane %v4386, 5
      %v4487 = vrot.slane %v4486, 4
      %v4488 = vrot.slane %v3673, 5
      %v4489 = vsel %vm1327, %v4487, %v4488
      %v4490 = vrot.slane %v4488, 4
      %v4491 = vrot.slane %v3674, 5
      %v4492 = vsel %vm1327, %v4490, %v4491
      %v4493 = vrot.slane %v4387, 5
      %v4494 = vrot.slane %v4493, 4
      %v4495 = vrot.slane %v3676, 5
      %v4496 = vsel %vm1327, %v4494, %v4495
      %v4497 = vrot.slane %v4495, 4
      %v4498 = vrot.slane %v3677, 5
      %v4499 = vsel %vm1327, %v4497, %v4498
      %v4500 = vrot.slane %v4388, 5
      %v4501 = vrot.slane %v4500, 4
      %v4502 = vrot.slane %v3679, 5
      %v4503 = vsel %vm1327, %v4501, %v4502
      %v4504 = vrot.slane %v4502, 4
      %v4505 = vrot.slane %v3680, 5
      %v4506 = vsel %vm1327, %v4504, %v4505
      %v4507 = vrot.slane %v4389, 5
      %v4508 = vrot.slane %v4507, 4
      %v4509 = vrot.slane %v3682, 5
      %v4510 = vsel %vm1327, %v4508, %v4509
      %v4511 = vrot.slane %v4509, 4
      %v4512 = vrot.slane %v3683, 5
      %v4513 = vsel %vm1327, %v4511, %v4512
      %v4514 = vrot.slane %v4390, 5
      %v4515 = vrot.slane %v4514, 4
      %v4516 = vrot.slane %v3685, 5
      %v4517 = vsel %vm1327, %v4515, %v4516
      %v4518 = vrot.slane %v4516, 4
      %v4519 = vrot.slane %v3686, 5
      %v4520 = vsel %vm1327, %v4518, %v4519
      %v4521 = vrot.slane %v4391, 5
      %v4522 = vrot.slane %v4521, 4
      %v4523 = vrot.slane %v3688, 5
      %v4524 = vsel %vm1327, %v4522, %v4523
      %v4525 = vrot.slane %v4523, 4
      %v4526 = vrot.slane %v3689, 5
      %v4527 = vsel %vm1327, %v4525, %v4526
      %v4528 = vrot.slane %v4392, 5
      %v4529 = vrot.slane %v4528, 4
      %v4530 = vrot.slane %v3691, 5
      %v4531 = vsel %vm1327, %v4529, %v4530
      %v4532 = vrot.slane %v4530, 4
      %v4533 = vrot.slane %v3692, 5
      %v4534 = vsel %vm1327, %v4532, %v4533
      %v4535 = vrot.slane %v4393, 5
      %v4536 = vrot.slane %v4535, 4
      %v4537 = vrot.slane %v3694, 5
      %v4538 = vsel %vm1327, %v4536, %v4537
      %v4539 = vrot.slane %v4537, 4
      %v4540 = vrot.slane %v3695, 5
      %v4541 = vsel %vm1327, %v4539, %v4540
      %v4542 = vrot.slane %v4394, 5
      %v4543 = vrot.slane %v4542, 4
      %v4544 = vrot.slane %v3697, 5
      %v4545 = vsel %vm1327, %v4543, %v4544
      %v4546 = vrot.slane %v4544, 4
      %v4547 = vrot.slane %v3698, 5
      %v4548 = vsel %vm1327, %v4546, %v4547
      %v4549 = vrot.slane %v4395, 5
      %v4550 = vrot.slane %v4549, 4
      %v4551 = vrot.slane %v3700, 5
      %v4552 = vsel %vm1327, %v4550, %v4551
      %v4553 = vrot.slane %v4551, 4
      %v4554 = vrot.slane %v3701, 5
      %v4555 = vsel %vm1327, %v4553, %v4554
      %s4556 = scalar_lea.vmem %s251, 16
      %v4557 = vld [vmem:[%s4556] sm:$0x3]
      %v4558 = vunpack.c.l.b16 %v4447
      %v4559 = vunpack.c.l.b16 %v4450
      %v4560 = vunpack.c.l.b16 %v4454
      %v4561 = vunpack.c.l.b16 %v4457
      %v4562 = vunpack.c.l.b16 %v4461
      %v4563 = vunpack.c.l.b16 %v4464
      %v4564 = vunpack.c.l.b16 %v4468
      %v4565 = vunpack.c.l.b16 %v4471
      %v4566 = vunpack.c.l.b16 %v4475
      %v4567 = vunpack.c.l.b16 %v4478
      %v4568 = vunpack.c.l.b16 %v4482
      %v4569 = vunpack.c.l.b16 %v4485
      %v4570 = vunpack.c.l.b16 %v4489
      %v4571 = vunpack.c.l.b16 %v4492
      %v4572 = vunpack.c.l.b16 %v4496
      %v4573 = vunpack.c.l.b16 %v4499
      %v4574 = vunpack.c.l.b16 %v4503
      %v4575 = vunpack.c.l.b16 %v4506
      %v4576 = vunpack.c.l.b16 %v4510
      %v4577 = vunpack.c.l.b16 %v4513
      %v4578 = vunpack.c.l.b16 %v4517
      %v4579 = vunpack.c.l.b16 %v4520
      %v4580 = vunpack.c.l.b16 %v4524
      %v4581 = vunpack.c.l.b16 %v4527
      %v4582 = vunpack.c.l.b16 %v4531
      %v4583 = vunpack.c.l.b16 %v4534
      %v4584 = vunpack.c.l.b16 %v4538
      %v4585 = vunpack.c.l.b16 %v4541
      %v4586 = vunpack.c.l.b16 %v4545
      %v4587 = vunpack.c.l.b16 %v4548
      %v4588 = vunpack.c.l.b16 %v4552
      %v4589 = vunpack.c.l.b16 %v4555
      %v4590 = vpack.c.b16 %v4559, %v4558
      %v4591 = vpack.c.b16 %v4561, %v4560
      %v4592 = vpack.c.b16 %v4563, %v4562
      %v4593 = vpack.c.b16 %v4565, %v4564
      %v4594 = vpack.c.b16 %v4567, %v4566
      %v4595 = vpack.c.b16 %v4569, %v4568
      %v4596 = vpack.c.b16 %v4571, %v4570
      %v4597 = vpack.c.b16 %v4573, %v4572
      %v4598 = vpack.c.b16 %v4575, %v4574
      %v4599 = vpack.c.b16 %v4577, %v4576
      %v4600 = vpack.c.b16 %v4579, %v4578
      %v4601 = vpack.c.b16 %v4581, %v4580
      %v4602 = vpack.c.b16 %v4583, %v4582
      %v4603 = vpack.c.b16 %v4585, %v4584
      %v4604 = vpack.c.b16 %v4587, %v4586
      %v4605 = vpack.c.b16 %v4589, %v4588
      %v4607 = vsel %vm771, %v4590, 0
      %v4610 = vsel %vm771, %v4591, 0
      %v4613 = vsel %vm771, %v4592, 0
      %v4616 = vsel %vm771, %v4593, 0
      %v4619 = vsel %vm771, %v4594, 0
      %v4622 = vsel %vm771, %v4595, 0
      %v4625 = vsel %vm771, %v4596, 0
      %v4628 = vsel %vm771, %v4597, 0
      %v4631 = vsel %vm771, %v4598, 0
      %v4634 = vsel %vm771, %v4599, 0
      %v4637 = vsel %vm771, %v4600, 0
      %v4640 = vsel %vm771, %v4601, 0
      %v4643 = vsel %vm771, %v4602, 0
      %v4646 = vsel %vm771, %v4603, 0
      %v4649 = vsel %vm771, %v4604, 0
      %v4652 = vsel %vm771, %v4605, 0
      %v4655 = vsel %vm820, %v4557, 0
      %4657 = vmatprep.subr.bf16.mxu0 0
      %4658 = vmatpush1.bf16.msra.mxu0 %v4655
      %4659 = vmatprep.subr.bf16.mxu0 0
      %4660 = vmatpush1.bf16.msra.mxu0 0
      %4661 = vmatprep.subr.bf16.mxu0 0
      %4662 = vmatpush1.bf16.msra.mxu0 0
      %4663 = vmatprep.subr.bf16.mxu0 0
      %4664 = vmatpush1.bf16.msra.mxu0 0
      %4665 = vmatprep.subr.bf16.mxu0 0
      %4666 = vmatpush1.bf16.msra.mxu0 0
      %4667 = vmatprep.subr.bf16.mxu0 0
      %4668 = vmatpush1.bf16.msra.mxu0 0
      %4669 = vmatprep.subr.bf16.mxu0 0
      %4670 = vmatpush1.bf16.msra.mxu0 0
      %4671 = vmatprep.subr.bf16.mxu0 0
      %4672 = vmatpush1.bf16.msra.mxu0 0
      %4673 = vmatprep.subr.bf16.mxu0 0
      %4674 = vmatpush1.bf16.msra.mxu0 0
      %4675 = vmatprep.subr.bf16.mxu0 0
      %4676 = vmatpush1.bf16.msra.mxu0 0
      %4677 = vmatprep.subr.bf16.mxu0 0
      %4678 = vmatpush1.bf16.msra.mxu0 0
      %4679 = vmatprep.subr.bf16.mxu0 0
      %4680 = vmatpush1.bf16.msra.mxu0 0
      %4681 = vmatprep.subr.bf16.mxu0 0
      %4682 = vmatpush1.bf16.msra.mxu0 0
      %4683 = vmatprep.subr.bf16.mxu0 0
      %4684 = vmatpush1.bf16.msra.mxu0 0
      %4685 = vmatprep.subr.bf16.mxu0 0
      %4686 = vmatpush1.bf16.msra.mxu0 0
      %4687 = vmatprep.subr.bf16.mxu0 0
      %4688 = vmatpush1.bf16.msra.mxu0 0
      %4689 = vmatprep.mubr.bf16.mxu0 0
      %4690 = vmatmul.mubr.bf16.gmra.mrb[0].mxu0 %v4607
      %v4691 = vpop.f32.mrb[0].mxu0
      %v4692 = vadd.f32 0.0, %v4691
      %v4693 = vpop.f32.mrb[0].mxu0
      %v4694 = vpop.f32.mrb[0].mxu0
      %v4695 = vadd.f32 0.0, %v4694
      %v4696 = vpop.f32.mrb[0].mxu0
      %4697 = vmatprep.mubr.bf16.mxu0 0
      %4698 = vmatmul.mubr.bf16.gmra.mrb[0].mxu0 %v4610
      %v4699 = vpop.f32.mrb[0].mxu0
      %v4700 = vadd.f32 0.0, %v4699
      %v4701 = vpop.f32.mrb[0].mxu0
      %v4702 = vpop.f32.mrb[0].mxu0
      %v4703 = vadd.f32 0.0, %v4702
      %v4704 = vpop.f32.mrb[0].mxu0
      %4705 = vmatprep.mubr.bf16.mxu0 0
      %4706 = vmatmul.mubr.bf16.gmra.mrb[0].mxu0 %v4613
      %v4707 = vpop.f32.mrb[0].mxu0
      %v4708 = vadd.f32 0.0, %v4707
      %v4709 = vpop.f32.mrb[0].mxu0
      %v4710 = vpop.f32.mrb[0].mxu0
      %v4711 = vadd.f32 0.0, %v4710
      %v4712 = vpop.f32.mrb[0].mxu0
      %4713 = vmatprep.mubr.bf16.mxu0 0
      %4714 = vmatmul.mubr.bf16.gmra.mrb[0].mxu0 %v4616
      %v4715 = vpop.f32.mrb[0].mxu0
      %v4716 = vadd.f32 0.0, %v4715
      %v4717 = vpop.f32.mrb[0].mxu0
      %v4718 = vpop.f32.mrb[0].mxu0
      %v4719 = vadd.f32 0.0, %v4718
      %v4720 = vpop.f32.mrb[0].mxu0
      %4721 = vmatprep.mubr.bf16.mxu0 0
      %4722 = vmatmul.mubr.bf16.gmra.mrb[0].mxu0 %v4619
      %v4723 = vpop.f32.mrb[0].mxu0
      %v4724 = vadd.f32 0.0, %v4723
      %v4725 = vpop.f32.mrb[0].mxu0
      %v4726 = vpop.f32.mrb[0].mxu0
      %v4727 = vadd.f32 0.0, %v4726
      %v4728 = vpop.f32.mrb[0].mxu0
      %4729 = vmatprep.mubr.bf16.mxu0 0
      %4730 = vmatmul.mubr.bf16.gmra.mrb[0].mxu0 %v4622
      %v4731 = vpop.f32.mrb[0].mxu0
      %v4732 = vadd.f32 0.0, %v4731
      %v4733 = vpop.f32.mrb[0].mxu0
      %v4734 = vpop.f32.mrb[0].mxu0
      %v4735 = vadd.f32 0.0, %v4734
      %v4736 = vpop.f32.mrb[0].mxu0
      %4737 = vmatprep.mubr.bf16.mxu0 0
      %4738 = vmatmul.mubr.bf16.gmra.mrb[0].mxu0 %v4625
      %v4739 = vpop.f32.mrb[0].mxu0
      %v4740 = vadd.f32 0.0, %v4739
      %v4741 = vpop.f32.mrb[0].mxu0
      %v4742 = vpop.f32.mrb[0].mxu0
      %v4743 = vadd.f32 0.0, %v4742
      %v4744 = vpop.f32.mrb[0].mxu0
      %4745 = vmatprep.mubr.bf16.mxu0 0
      %4746 = vmatmul.mubr.bf16.gmra.mrb[0].mxu0 %v4628
      %v4747 = vpop.f32.mrb[0].mxu0
      %v4748 = vadd.f32 0.0, %v4747
      %v4749 = vpop.f32.mrb[0].mxu0
      %v4750 = vpop.f32.mrb[0].mxu0
      %v4751 = vadd.f32 0.0, %v4750
      %v4752 = vpop.f32.mrb[0].mxu0
      %4753 = vmatprep.mubr.bf16.mxu0 0
      %4754 = vmatmul.mubr.bf16.gmra.mrb[0].mxu0 %v4631
      %v4755 = vpop.f32.mrb[0].mxu0
      %v4756 = vadd.f32 0.0, %v4755
      %v4757 = vpop.f32.mrb[0].mxu0
      %v4758 = vpop.f32.mrb[0].mxu0
      %v4759 = vadd.f32 0.0, %v4758
      %v4760 = vpop.f32.mrb[0].mxu0
      %4761 = vmatprep.mubr.bf16.mxu0 0
      %4762 = vmatmul.mubr.bf16.gmra.mrb[0].mxu0 %v4634
      %v4763 = vpop.f32.mrb[0].mxu0
      %v4764 = vadd.f32 0.0, %v4763
      %v4765 = vpop.f32.mrb[0].mxu0
      %v4766 = vpop.f32.mrb[0].mxu0
      %v4767 = vadd.f32 0.0, %v4766
      %v4768 = vpop.f32.mrb[0].mxu0
      %4769 = vmatprep.mubr.bf16.mxu0 0
      %4770 = vmatmul.mubr.bf16.gmra.mrb[0].mxu0 %v4637
      %v4771 = vpop.f32.mrb[0].mxu0
      %v4772 = vadd.f32 0.0, %v4771
      %v4773 = vpop.f32.mrb[0].mxu0
      %v4774 = vpop.f32.mrb[0].mxu0
      %v4775 = vadd.f32 0.0, %v4774
      %v4776 = vpop.f32.mrb[0].mxu0
      %4777 = vmatprep.mubr.bf16.mxu0 0
      %4778 = vmatmul.mubr.bf16.gmra.mrb[0].mxu0 %v4640
      %v4779 = vpop.f32.mrb[0].mxu0
      %v4780 = vadd.f32 0.0, %v4779
      %v4781 = vpop.f32.mrb[0].mxu0
      %v4782 = vpop.f32.mrb[0].mxu0
      %v4783 = vadd.f32 0.0, %v4782
      %v4784 = vpop.f32.mrb[0].mxu0
      %4785 = vmatprep.mubr.bf16.mxu0 0
      %4786 = vmatmul.mubr.bf16.gmra.mrb[0].mxu0 %v4643
      %v4787 = vpop.f32.mrb[0].mxu0
      %v4788 = vadd.f32 0.0, %v4787
      %v4789 = vpop.f32.mrb[0].mxu0
      %v4790 = vpop.f32.mrb[0].mxu0
      %v4791 = vadd.f32 0.0, %v4790
      %v4792 = vpop.f32.mrb[0].mxu0
      %4793 = vmatprep.mubr.bf16.mxu0 0
      %4794 = vmatmul.mubr.bf16.gmra.mrb[0].mxu0 %v4646
      %v4795 = vpop.f32.mrb[0].mxu0
      %v4796 = vadd.f32 0.0, %v4795
      %v4797 = vpop.f32.mrb[0].mxu0
      %v4798 = vpop.f32.mrb[0].mxu0
      %v4799 = vadd.f32 0.0, %v4798
      %v4800 = vpop.f32.mrb[0].mxu0
      %4801 = vmatprep.mubr.bf16.mxu0 0
      %4802 = vmatmul.mubr.bf16.gmra.mrb[0].mxu0 %v4649
      %v4803 = vpop.f32.mrb[0].mxu0
      %v4804 = vadd.f32 0.0, %v4803
      %v4805 = vpop.f32.mrb[0].mxu0
      %v4806 = vpop.f32.mrb[0].mxu0
      %v4807 = vadd.f32 0.0, %v4806
      %v4808 = vpop.f32.mrb[0].mxu0
      %4809 = vmatprep.mubr.bf16.mxu0 0
      %4810 = vmatmul.mubr.bf16.gmra.mrb[0].mxu0 %v4652
      %v4811 = vpop.f32.mrb[0].mxu0
      %v4812 = vadd.f32 0.0, %v4811
      %v4813 = vpop.f32.mrb[0].mxu0
      %v4814 = vpop.f32.mrb[0].mxu0
      %v4815 = vadd.f32 0.0, %v4814
      %v4816 = vpop.f32.mrb[0].mxu0
      %4817 = vdwg.mxu0
      %v4818 = vadd.f32 %v4348, %v4692
      %v4819 = vadd.f32 %v4349, %v4695
      %v4820 = vadd.f32 %v4350, %v4700
      %v4821 = vadd.f32 %v4351, %v4703
      %v4822 = vadd.f32 %v4352, %v4708
      %v4823 = vadd.f32 %v4353, %v4711
      %v4824 = vadd.f32 %v4354, %v4716
      %v4825 = vadd.f32 %v4355, %v4719
      %v4826 = vadd.f32 %v4356, %v4724
      %v4827 = vadd.f32 %v4357, %v4727
      %v4828 = vadd.f32 %v4358, %v4732
      %v4829 = vadd.f32 %v4359, %v4735
      %v4830 = vadd.f32 %v4360, %v4740
      %v4831 = vadd.f32 %v4361, %v4743
      %v4832 = vadd.f32 %v4362, %v4748
      %v4833 = vadd.f32 %v4363, %v4751
      %v4834 = vadd.f32 %v4364, %v4756
      %v4835 = vadd.f32 %v4365, %v4759
      %v4836 = vadd.f32 %v4366, %v4764
      %v4837 = vadd.f32 %v4367, %v4767
      %v4838 = vadd.f32 %v4368, %v4772
      %v4839 = vadd.f32 %v4369, %v4775
      %v4840 = vadd.f32 %v4370, %v4780
      %v4841 = vadd.f32 %v4371, %v4783
      %v4842 = vadd.f32 %v4372, %v4788
      %v4843 = vadd.f32 %v4373, %v4791
      %v4844 = vadd.f32 %v4374, %v4796
      %v4845 = vadd.f32 %v4375, %v4799
      %v4846 = vadd.f32 %v4376, %v4804
      %v4847 = vadd.f32 %v4377, %v4807
      %v4848 = vadd.f32 %v4378, %v4812
      %v4849 = vadd.f32 %v4379, %v4815
      %v4850 = vld [vmem:[%s268] sm:$0x1]
      %v4851 = vadd.f32 %v4818, %v4819
      %v4852 = vadd.f32 %v4851, %v4820
      %v4853 = vadd.f32 %v4852, %v4821
      %v4854 = vadd.f32 %v4853, %v4822
      %v4855 = vadd.f32 %v4854, %v4823
      %v4856 = vadd.f32 %v4855, %v4824
      %v4857 = vadd.f32 %v4856, %v4825
      %v4858 = vadd.f32 %v4857, %v4826
      %v4859 = vadd.f32 %v4858, %v4827
      %v4860 = vadd.f32 %v4859, %v4828
      %v4861 = vadd.f32 %v4860, %v4829
      %v4862 = vadd.f32 %v4861, %v4830
      %v4863 = vadd.f32 %v4862, %v4831
      %v4864 = vadd.f32 %v4863, %v4832
      %v4865 = vadd.f32 %v4864, %v4833
      %v4866 = vadd.f32 %v4865, %v4834
      %v4867 = vadd.f32 %v4866, %v4835
      %v4868 = vadd.f32 %v4867, %v4836
      %v4869 = vadd.f32 %v4868, %v4837
      %v4870 = vadd.f32 %v4869, %v4838
      %v4871 = vadd.f32 %v4870, %v4839
      %v4872 = vadd.f32 %v4871, %v4840
      %v4873 = vadd.f32 %v4872, %v4841
      %v4874 = vadd.f32 %v4873, %v4842
      %v4875 = vadd.f32 %v4874, %v4843
      %v4876 = vadd.f32 %v4875, %v4844
      %v4877 = vadd.f32 %v4876, %v4845
      %v4878 = vadd.f32 %v4877, %v4846
      %v4879 = vadd.f32 %v4878, %v4847
      %v4880 = vadd.f32 %v4879, %v4848
      %v4881 = vadd.f32 %v4880, %v4849
      %v4882 = vrot.slane %v4881, 4
      %v4883 = vadd.f32 %v4881, %v4882
      %v4884 = vrot.slane %v4883, 2
      %v4885 = vadd.f32 %v4883, %v4884
      %v4886 = vrot.slane %v4885, 1
      %v4887 = vadd.f32 %v4885, %v4886
      %v4888 = vadd.f32 %v4850, %v4887
      %4889 = vst [vmem:[%s268] sm:$0x1] %v4888
      %v4890 = vld [vmem:[%s271] sm:$0x1]
      %v4891 = vmul.f32 %v4818, %v4818
      %v4892 = vmul.f32 %v4819, %v4819
      %v4893 = vmul.f32 %v4820, %v4820
      %v4894 = vmul.f32 %v4821, %v4821
      %v4895 = vmul.f32 %v4822, %v4822
      %v4896 = vmul.f32 %v4823, %v4823
      %v4897 = vmul.f32 %v4824, %v4824
      %v4898 = vmul.f32 %v4825, %v4825
      %v4899 = vmul.f32 %v4826, %v4826
      %v4900 = vmul.f32 %v4827, %v4827
      %v4901 = vmul.f32 %v4828, %v4828
      %v4902 = vmul.f32 %v4829, %v4829
      %v4903 = vmul.f32 %v4830, %v4830
      %v4904 = vmul.f32 %v4831, %v4831
      %v4905 = vmul.f32 %v4832, %v4832
      %v4906 = vmul.f32 %v4833, %v4833
      %v4907 = vmul.f32 %v4834, %v4834
      %v4908 = vmul.f32 %v4835, %v4835
      %v4909 = vmul.f32 %v4836, %v4836
      %v4910 = vmul.f32 %v4837, %v4837
      %v4911 = vmul.f32 %v4838, %v4838
      %v4912 = vmul.f32 %v4839, %v4839
      %v4913 = vmul.f32 %v4840, %v4840
      %v4914 = vmul.f32 %v4841, %v4841
      %v4915 = vmul.f32 %v4842, %v4842
      %v4916 = vmul.f32 %v4843, %v4843
      %v4917 = vmul.f32 %v4844, %v4844
      %v4918 = vmul.f32 %v4845, %v4845
      %v4919 = vmul.f32 %v4846, %v4846
      %v4920 = vmul.f32 %v4847, %v4847
      %v4921 = vmul.f32 %v4848, %v4848
      %v4922 = vmul.f32 %v4849, %v4849
      %v4923 = vadd.f32 %v4891, %v4892
      %v4924 = vadd.f32 %v4923, %v4893
      %v4925 = vadd.f32 %v4924, %v4894
      %v4926 = vadd.f32 %v4925, %v4895
      %v4927 = vadd.f32 %v4926, %v4896
      %v4928 = vadd.f32 %v4927, %v4897
      %v4929 = vadd.f32 %v4928, %v4898
      %v4930 = vadd.f32 %v4929, %v4899
      %v4931 = vadd.f32 %v4930, %v4900
      %v4932 = vadd.f32 %v4931, %v4901
      %v4933 = vadd.f32 %v4932, %v4902
      %v4934 = vadd.f32 %v4933, %v4903
      %v4935 = vadd.f32 %v4934, %v4904
      %v4936 = vadd.f32 %v4935, %v4905
      %v4937 = vadd.f32 %v4936, %v4906
      %v4938 = vadd.f32 %v4937, %v4907
      %v4939 = vadd.f32 %v4938, %v4908
      %v4940 = vadd.f32 %v4939, %v4909
      %v4941 = vadd.f32 %v4940, %v4910
      %v4942 = vadd.f32 %v4941, %v4911
      %v4943 = vadd.f32 %v4942, %v4912
      %v4944 = vadd.f32 %v4943, %v4913
      %v4945 = vadd.f32 %v4944, %v4914
      %v4946 = vadd.f32 %v4945, %v4915
      %v4947 = vadd.f32 %v4946, %v4916
      %v4948 = vadd.f32 %v4947, %v4917
      %v4949 = vadd.f32 %v4948, %v4918
      %v4950 = vadd.f32 %v4949, %v4919
      %v4951 = vadd.f32 %v4950, %v4920
      %v4952 = vadd.f32 %v4951, %v4921
      %v4953 = vadd.f32 %v4952, %v4922
      %v4954 = vrot.slane %v4953, 4
      %v4955 = vadd.f32 %v4953, %v4954
      %v4956 = vrot.slane %v4955, 2
      %v4957 = vadd.f32 %v4955, %v4956
      %v4958 = vrot.slane %v4957, 1
      %v4959 = vadd.f32 %v4957, %v4958
      %v4960 = vadd.f32 %v4890, %v4959
      %4961 = vst [vmem:[%s271] sm:$0x1] %v4960
      %v4962 = vpack.c.bf16 %v4819, %v4818
      %v4963 = vpack.c.bf16 %v4821, %v4820
      %v4964 = vpack.c.bf16 %v4823, %v4822
      %v4965 = vpack.c.bf16 %v4825, %v4824
      %v4966 = vpack.c.bf16 %v4827, %v4826
      %v4967 = vpack.c.bf16 %v4829, %v4828
      %v4968 = vpack.c.bf16 %v4831, %v4830
      %v4969 = vpack.c.bf16 %v4833, %v4832
      %v4970 = vpack.c.bf16 %v4835, %v4834
      %v4971 = vpack.c.bf16 %v4837, %v4836
      %v4972 = vpack.c.bf16 %v4839, %v4838
      %v4973 = vpack.c.bf16 %v4841, %v4840
      %v4974 = vpack.c.bf16 %v4843, %v4842
      %v4975 = vpack.c.bf16 %v4845, %v4844
      %v4976 = vpack.c.bf16 %v4847, %v4846
      %v4977 = vpack.c.bf16 %v4849, %v4848
      %v4994 = vunpack.c.l.b16 %v4962
      %v4995 = vunpack.c.h.b16 %v4962
      %v4996 = vunpack.c.l.b16 %v4963
      %v4997 = vunpack.c.h.b16 %v4963
      %v4998 = vunpack.c.l.b16 %v4964
      %v4999 = vunpack.c.h.b16 %v4964
      %v5000 = vunpack.c.l.b16 %v4965
      %v5001 = vunpack.c.h.b16 %v4965
      %v5002 = vunpack.c.l.b16 %v4966
      %v5003 = vunpack.c.h.b16 %v4966
      %v5004 = vunpack.c.l.b16 %v4967
      %v5005 = vunpack.c.h.b16 %v4967
      %v5006 = vunpack.c.l.b16 %v4968
      %v5007 = vunpack.c.h.b16 %v4968
      %v5008 = vunpack.c.l.b16 %v4969
      %v5009 = vunpack.c.h.b16 %v4969
      %v5010 = vunpack.c.l.b16 %v4970
      %v5011 = vunpack.c.h.b16 %v4970
      %v5012 = vunpack.c.l.b16 %v4971
      %v5013 = vunpack.c.h.b16 %v4971
      %v5014 = vunpack.c.l.b16 %v4972
      %v5015 = vunpack.c.h.b16 %v4972
      %v5016 = vunpack.c.l.b16 %v4973
      %v5017 = vunpack.c.h.b16 %v4973
      %v5018 = vunpack.c.l.b16 %v4974
      %v5019 = vunpack.c.h.b16 %v4974
      %v5020 = vunpack.c.l.b16 %v4975
      %v5021 = vunpack.c.h.b16 %v4975
      %v5022 = vunpack.c.l.b16 %v4976
      %v5023 = vunpack.c.h.b16 %v4976
      %v5024 = vunpack.c.l.b16 %v4977
      %v5025 = vunpack.c.h.b16 %v4977
      %v5026 = vpack.c.b16 %v4994, %v4994
      %v5027 = vpack.c.b16 %v4995, %v4995
      %v5028 = vpack.c.b16 %v4996, %v4996
      %v5029 = vpack.c.b16 %v4997, %v4997
      %v5030 = vpack.c.b16 %v4998, %v4998
      %v5031 = vpack.c.b16 %v4999, %v4999
      %v5032 = vpack.c.b16 %v5000, %v5000
      %v5033 = vpack.c.b16 %v5001, %v5001
      %v5034 = vpack.c.b16 %v5002, %v5002
      %v5035 = vpack.c.b16 %v5003, %v5003
      %v5036 = vpack.c.b16 %v5004, %v5004
      %v5037 = vpack.c.b16 %v5005, %v5005
      %v5038 = vpack.c.b16 %v5006, %v5006
      %v5039 = vpack.c.b16 %v5007, %v5007
      %v5040 = vpack.c.b16 %v5008, %v5008
      %v5041 = vpack.c.b16 %v5009, %v5009
      %v5042 = vpack.c.b16 %v5010, %v5010
      %v5043 = vpack.c.b16 %v5011, %v5011
      %v5044 = vpack.c.b16 %v5012, %v5012
      %v5045 = vpack.c.b16 %v5013, %v5013
      %v5046 = vpack.c.b16 %v5014, %v5014
      %v5047 = vpack.c.b16 %v5015, %v5015
      %v5048 = vpack.c.b16 %v5016, %v5016
      %v5049 = vpack.c.b16 %v5017, %v5017
      %v5050 = vpack.c.b16 %v5018, %v5018
      %v5051 = vpack.c.b16 %v5019, %v5019
      %v5052 = vpack.c.b16 %v5020, %v5020
      %v5053 = vpack.c.b16 %v5021, %v5021
      %v5054 = vpack.c.b16 %v5022, %v5022
      %v5055 = vpack.c.b16 %v5023, %v5023
      %v5056 = vpack.c.b16 %v5024, %v5024
      %v5057 = vpack.c.b16 %v5025, %v5025
      %5090 = vst [vmem:[%s264] sm:$0xf] %v5026
      %5091 = vst [vmem:[%s264 + $0x4] sm:$0xf] %v5027
      %5092 = vst [vmem:[%s264 + $0x8] sm:$0xf] %v5028
      %5093 = vst [vmem:[%s264 + $0xc] sm:$0xf] %v5029
      %5094 = vst [vmem:[%s264 + $0x10] sm:$0xf] %v5030
      %5095 = vst [vmem:[%s264 + $0x14] sm:$0xf] %v5031
      %5096 = vst [vmem:[%s264 + $0x18] sm:$0xf] %v5032
      %5097 = vst [vmem:[%s264 + $0x1c] sm:$0xf] %v5033
      %5098 = vst [vmem:[%s264 + $0x20] sm:$0xf] %v5034
      %5099 = vst [vmem:[%s264 + $0x24] sm:$0xf] %v5035
      %5100 = vst [vmem:[%s264 + $0x28] sm:$0xf] %v5036
      %5101 = vst [vmem:[%s264 + $0x2c] sm:$0xf] %v5037
      %5102 = vst [vmem:[%s264 + $0x30] sm:$0xf] %v5038
      %5103 = vst [vmem:[%s264 + $0x34] sm:$0xf] %v5039
      %5104 = vst [vmem:[%s264 + $0x38] sm:$0xf] %v5040
      %5105 = vst [vmem:[%s264 + $0x3c] sm:$0xf] %v5041
      %5106 = vst [vmem:[%s264 + $0x40] sm:$0xf] %v5042
      %5107 = vst [vmem:[%s264 + $0x44] sm:$0xf] %v5043
      %5108 = vst [vmem:[%s264 + $0x48] sm:$0xf] %v5044
      %5109 = vst [vmem:[%s264 + $0x4c] sm:$0xf] %v5045
      %5110 = vst [vmem:[%s264 + $0x50] sm:$0xf] %v5046
      %5111 = vst [vmem:[%s264 + $0x54] sm:$0xf] %v5047
      %5112 = vst [vmem:[%s264 + $0x58] sm:$0xf] %v5048
      %5113 = vst [vmem:[%s264 + $0x5c] sm:$0xf] %v5049
      %5114 = vst [vmem:[%s264 + $0x60] sm:$0xf] %v5050
      %5115 = vst [vmem:[%s264 + $0x64] sm:$0xf] %v5051
      %5116 = vst [vmem:[%s264 + $0x68] sm:$0xf] %v5052
      %5117 = vst [vmem:[%s264 + $0x6c] sm:$0xf] %v5053
      %5118 = vst [vmem:[%s264 + $0x70] sm:$0xf] %v5054
      %5119 = vst [vmem:[%s264 + $0x74] sm:$0xf] %v5055
      %5120 = vst [vmem:[%s264 + $0x78] sm:$0xf] %v5056
      %5121 = vst [vmem:[%s264 + $0x7c] sm:$0xf] %v5057
      %s5122 = smul.u32 16, %s23
      %p5123 = scmp.lt.s32.totalorder %s22, 1
      %s5124 = scalar_select %p5123, %s22, 1
      %p5125 = scmp.lt.s32.totalorder %s5122, 15
      %s5126 = scalar_select %p5125, %s5122, 15
      %p5127 = scmp.lt.s32.totalorder %s21, 0
      %s5128 = scalar_select %p5127, %s21, 0
      %s5129 = smul.addr %s5126, 2
      %s5130 = sadd.s32 %s5128, %s5129
      %s5131 = smul.addr %s5124, 32
      %s5132 = sadd.s32 %s5130, %s5131
      %s5133 = smul.addr %s5132, 4
      %s5134 = scalar_lea.vmem %s2, %s5133
      %p5135 = scmp.lt.s32.totalorder %s21, 0
      %s5136 = scalar_select %p5135, %s21, 0
      %s5137 = scalar_lea.vmem %s3, %s5136
      %p5138 = scmp.lt.s32.totalorder %s21, 0
      %s5139 = scalar_select %p5138, %s21, 0
      %s5140 = scalar_lea.vmem %s4, %s5139
      // Predicated region
      $region33: #{conv_block_forward.2} parent=27 // pred_check
        %p5141 = pneg %p109
      $region34: #{conv_block_forward.2} parent=27 // pred_check_branch
        %5143 = sbr.rel (%p5141) target = $region36
      $region35: #{conv_block_forward.2} parent=27 // pred_region
        %s5144 = smul.u32 16, %s23
      $region36: #{conv_block_forward.2} parent=27 // pred_fallthru
        _
      // Predicated region
      $region37: #{conv_block_forward.2} parent=27 // pred_check
        %p5145 = pneg %p135
      $region38: #{conv_block_forward.2} parent=27 // pred_check_branch
        %5147 = sbr.rel (%p5145) target = $region40
      $region39: #{conv_block_forward.2} parent=27 // pred_region
        _
      $region40: #{conv_block_forward.2} parent=27 // pred_fallthru
        _
      // Predicated region
      $region41: #{conv_block_forward.2} parent=27 // pred_check
        %p5148 = pneg %p161
      $region42: #{conv_block_forward.2} parent=27 // pred_check_branch
        %5150 = sbr.rel (%p5148) target = $region44
      $region43: #{conv_block_forward.2} parent=27 // pred_region
        _
      $region44: #{conv_block_forward.2} parent=27 // pred_fallthru
        _
      // Predicated region
      $region45: #{conv_block_forward.2} parent=27 // pred_check
        %p5151 = pneg %p135
      $region46: #{conv_block_forward.2} parent=27 // pred_check_branch
        %5153 = sbr.rel (%p5151) target = $region48
      $region47: #{conv_block_forward.2} parent=27 // pred_region
        %p5154 = scmp.lt.s32.totalorder %s21, 0
        %s5155 = scalar_select %p5154, %s21, 0
        %s5156 = scalar_lea.vmem %s3, %s5155
      $region48: #{conv_block_forward.2} parent=27 // pred_fallthru
        _
      // Predicated region
      $region49: #{conv_block_forward.2} parent=27 // pred_check
        %p5157 = pneg %p161
      $region50: #{conv_block_forward.2} parent=27 // pred_check_branch
        %5159 = sbr.rel (%p5157) target = $region52
      $region51: #{conv_block_forward.2} parent=27 // pred_region
        %p5160 = scmp.lt.s32.totalorder %s21, 0
        %s5161 = scalar_select %p5160, %s21, 0
        %s5162 = scalar_lea.vmem %s4, %s5161
      $region52: #{conv_block_forward.2} parent=27 // pred_fallthru
        _
    $region28: #{conv_block_forward.2} parent=5 // pred_fallthru
      _
    %p5163 = scmp.le.s32.totalorder 2, %s11
    // Predicated region
    $region53: #{conv_block_forward.2} parent=5 // pred_check
      %p5164 = pneg %p5163
    $region54: #{conv_block_forward.2} parent=5 // pred_check_branch
      %5166 = sbr.rel (%p5164) target = $region56
    $region55: #{conv_block_forward.2} parent=5 // pred_region
      %s5167 = ssub.s32 %s11, 2
      // Predicated region
      $region57: #{conv_block_forward.2} parent=55 // pred_check
        %p5168 = pneg %p115
      $region58: #{conv_block_forward.2} parent=55 // pred_check_branch
        %5170 = sbr.rel (%p5168) target = $region60
      $region59: #{conv_block_forward.2} parent=55 // pred_region
        %s5171 = smul.u32 16, %s26
        %p5172 = scmp.lt.s32.totalorder %s25, 1
        %s5173 = scalar_select %p5172, %s25, 1
        %p5174 = scmp.lt.s32.totalorder %s5171, 15
        %s5175 = scalar_select %p5174, %s5171, 15
        %p5176 = scmp.lt.s32.totalorder %s24, 0
        %s5177 = scalar_select %p5176, %s24, 0
        %s5178 = smul.addr %s5175, 2
        %s5179 = sadd.s32 %s5177, %s5178
        %s5180 = smul.addr %s5173, 32
        %s5181 = sadd.s32 %s5179, %s5180
        %s5182 = smul.addr %s5181, 4
        %s5183 = scalar_lea.vmem %s2, %s5182
      $region60: #{conv_block_forward.2} parent=55 // pred_fallthru
        _
    $region56: #{conv_block_forward.2} parent=5 // pred_fallthru
      _
  $region6: #{conv_block_forward.2} parent=0 // loop_footer
    %s15 = sadd.s32 1, %s11
  $region7: #{conv_block_forward.2} parent=0 // loop_footer_branch
    %10 = sbr.rel target = $region3
  $region8: #{conv_block_forward.2} parent=0 // loop_exit
    _

</llo_original>
